<compile_context>
chip_gen: v5e
topology: v5e:2x2
jax: 0.10.0
libtpu: 0.0.40
codegen_flags: <defaults>
</compile_context>

<pallas_src>
import jax
import jax.numpy as jnp
from jax.experimental import pallas as pl
from jax.experimental.pallas import tpu as pltpu

BN_EPS = 1e-5
HIGHEST = jax.lax.Precision.HIGHEST
_WOFF = 8   # sublane-aligned interior column offset inside the W-padded scratch


# ----------------------------------------------------------------------------
# Parameters (matmul-friendly layouts; equivalent to the PyTorch module's params)
# ----------------------------------------------------------------------------
def init_params(key, channels, reduction=8):
    C = channels
    M = max(C // 2, 16)          # LightAdaptiveConvBlock mid channels
    R = max(C // reduction, 1)   # squeeze-excite bottleneck width
    ks = jax.random.split(key, 18)
    f32 = jnp.float32

    def n(k, shape, s):
        return s * jax.random.normal(k, shape, f32)

    return {
        # fc: Linear(C,R) -> ReLU -> Linear(R,C) -> Sigmoid   (weights as (in,out))
        "fc_w1": n(ks[0], (C, R), 0.1), "fc_b1": n(ks[1], (R,), 0.1),
        "fc_w2": n(ks[2], (R, C), 0.1), "fc_b2": n(ks[3], (C,), 0.1),
        # dw_conv: 3x3 depthwise + bias
        "dw_w": n(ks[4], (3, 3, C), 0.2), "dw_b": n(ks[5], (C,), 0.1),
        # pw_conv1: 1x1 conv C -> M + bias
        "pw1_w": n(ks[6], (C, M), 0.1), "pw1_b": n(ks[7], (M,), 0.1),
        # hori_conv (1,3) depthwise + vert_conv (3,1) depthwise (+ biases)
        "kh": n(ks[8], (3, M), 0.3), "kh_b": n(ks[9], (M,), 0.1),
        "kv": n(ks[10], (3, M), 0.3), "kv_b": n(ks[11], (M,), 0.1),
        # BatchNorm2d(M) running stats (inference-mode affine)
        "bn_gamma": 1.0 + 0.1 * jax.random.normal(ks[12], (M,), f32),
        "bn_beta": 0.1 * jax.random.normal(ks[13], (M,), f32),
        "bn_mean": 0.1 * jax.random.normal(ks[14], (M,), f32),
        "bn_var": 0.5 + 0.5 * jax.nn.softplus(jax.random.normal(ks[15], (M,), f32)),
        # pw_conv2: 1x1 conv M -> C + bias
        "pw2_w": n(ks[16], (M, C), 0.1), "pw2_b": n(ks[17], (C,), 0.1),
    }


# ----------------------------------------------------------------------------
# Pallas kernel: one batch element per grid step, NHWC, channels on lanes.
#   cpack : (11, C) = [dw taps (9 rows, row 3*i+j), dw bias, pw2 bias]
#   mpack : (9, M)  = [pw1 bias, bn_scale*kh (3), bn_scale*kv (3), bn_scale,
#                      bn_scale*(kh_b + kv_b) + bn_shift]
# ----------------------------------------------------------------------------
def _light_bottleneck_kernel(x_ref, cpack_ref, mpack_ref, pw1w_ref, pw2w_ref,
                             fcw1_ref, fcb1_ref, fcw2_ref, fcb2_ref,
                             out_ref, pad_in, pad_mid):
    f32 = jnp.float32
    _, H, W, C = x_ref.shape          # block: (1, H, W, C)
    M = pw1w_ref.shape[1]
    HW = H * W
    Wp = W + 2 * _WOFF

    x = x_ref[...]                    # (1, H, W, C) -- this batch element
    x2 = x.reshape(HW, C)

    # ---- channel attention (squeeze-excite): GAP -> fc1 -> ReLU -> fc2 -> sigmoid
    # Tiny matmuls that only feed a sigmoid gate: default precision is plenty.
    gap = jnp.mean(x2, axis=0, keepdims=True)                          # (1, C)
    hid = jnp.maximum(
        jnp.dot(gap, fcw1_ref[...], preferred_element_type=f32)
        + fcb1_ref[...], 0.0)                                          # (1, R)
    att = jax.nn.sigmoid(
        jnp.dot(hid, fcw2_ref[...], preferred_element_type=f32)
        + fcb2_ref[...])                                               # (1, C)
    xa = x * att.reshape(1, 1, 1, C)                                   # (1,H,W,C)

    # ---- dw_conv: 3x3 depthwise (zero pad=1) via halo-zeroed scratch ---------
    cp = cpack_ref[...]                                                # (11, C)
    # Halo-only zeroing (rows 0 / H+1 plus two aligned 8-wide column strips);
    # the interior is fully overwritten below, so no full-buffer memset.
    zrow_c = jnp.zeros((1, 1, Wp, C), f32)
    zcol_c = jnp.zeros((1, H, _WOFF, C), f32)
    pad_in[:, 0:1, :, :] = zrow_c
    pad_in[:, H + 1:H + 2, :, :] = zrow_c
    pad_in[:, 1:H + 1, 0:_WOFF, :] = zcol_c
    pad_in[:, 1:H + 1, _WOFF + W:Wp, :] = zcol_c
    pad_in[:, 1:H + 1, _WOFF:_WOFF + W, :] = xa                        # aligned store

    # Hoisted W-shifted slabs: 2 unaligned loads total (instead of 6);
    # all per-tap accesses below are cheap H row-slices of these values.
    left = pad_in[:, :, _WOFF - 1:_WOFF - 1 + W, :]                    # (1,H+2,W,C)
    cent = pad_in[:, :, _WOFF:_WOFF + W, :]                            # aligned
    right = pad_in[:, :, _WOFF + 1:_WOFF + 1 + W, :]

    # tap row index = 3*i + j  (i = vertical offset, j = horizontal offset)
    acc = xa * cp[4:5, :] + cp[9:10, :]                  # center tap + dw bias folded
    acc = (acc
           + left[:, 0:H] * cp[0:1, :]                   # (i=0, j=0)
           + left[:, 1:H + 1] * cp[3:4, :]               # (i=1, j=0)
           + left[:, 2:H + 2] * cp[6:7, :]               # (i=2, j=0)
           + cent[:, 0:H] * cp[1:2, :]                   # (i=0, j=1)
           + cent[:, 2:H + 2] * cp[7:8, :]               # (i=2, j=1)
           + right[:, 0:H] * cp[2:3, :]                  # (i=0, j=2)
           + right[:, 1:H + 1] * cp[5:6, :]              # (i=1, j=2)
           + right[:, 2:H + 2] * cp[8:9, :])             # (i=2, j=2)

    # ---- pw_conv1: 1x1 conv C -> M (+bias), ReLU -----------------------------
    mp = mpack_ref[...]                                                # (9, M)
    t2 = jnp.dot(acc.reshape(HW, C), pw1w_ref[...],
                 preferred_element_type=f32, precision=HIGHEST)        # (HW, M)
    t2 = jnp.maximum(t2 + mp[0:1, :], 0.0)
    t = t2.reshape(1, H, W, M)

    # ---- hori (1,3) + vert (3,1) depthwise + identity, BN affine folded, ReLU
    zrow_m = jnp.zeros((1, 1, Wp, M), f32)
    zcol_m = jnp.zeros((1, H, _WOFF, M), f32)
    pad_mid[:, 0:1, :, :] = zrow_m
    pad_mid[:, H + 1:H + 2, :, :] = zrow_m
    pad_mid[:, 1:H + 1, 0:_WOFF, :] = zcol_m
    pad_mid[:, 1:H + 1, _WOFF + W:Wp, :] = zcol_m
    pad_mid[:, 1:H + 1, _WOFF:_WOFF + W, :] = t                        # aligned store

    mleft = pad_mid[:, 1:H + 1, _WOFF - 1:_WOFF - 1 + W, :]            # w-1
    mright = pad_mid[:, 1:H + 1, _WOFF + 1:_WOFF + 1 + W, :]           # w+1
    mup = pad_mid[:, 0:H, _WOFF:_WOFF + W, :]                          # h-1
    mdown = pad_mid[:, 2:H + 2, _WOFF:_WOFF + W, :]                    # h+1

    center = mp[2:3, :] + mp[5:6, :] + mp[7:8, :]        # scale*(kh1 + kv1 + 1)
    s = (t * center + mp[8:9, :]
         + mleft * mp[1:2, :] + mright * mp[3:4, :]
         + mup * mp[4:5, :] + mdown * mp[6:7, :])
    s = jnp.maximum(s, 0.0)                                            # (1,H,W,M)

    # ---- pw_conv2: 1x1 conv M -> C (+bias) ------------------------------------
    y = jnp.dot(s.reshape(HW, M), pw2w_ref[...],
                preferred_element_type=f32, precision=HIGHEST)         # (HW, C)
    y = (y + cp[10:11, :]).reshape(1, H, W, C)

    if M == C:                 # static: LightAdaptiveConvBlock inner residual
        y = y + xa

    # Outer residual: re-read x from the ref (no long live range across the body).
    out_ref[...] = y + x_ref[...]


# ----------------------------------------------------------------------------
# NHWC-native entry point (no HBM relayout) + NCHW compatibility wrapper
# ----------------------------------------------------------------------------
def light_bottleneck_nhwc(x_nhwc, params):
    B, H, W, C = x_nhwc.shape
    M = params["pw1_w"].shape[1]
    R = params["fc_w1"].shape[1]
    f32 = jnp.float32

    bn_scale = params["bn_gamma"] / jnp.sqrt(params["bn_var"] + BN_EPS)
    bn_shift = params["bn_beta"] - params["bn_mean"] * bn_scale

    cpack = jnp.concatenate(
        [params["dw_w"].reshape(9, C),
         params["dw_b"].reshape(1, C),
         params["pw2_b"].reshape(1, C)], axis=0).astype(f32)            # (11, C)
    mpack = jnp.concatenate(
        [params["pw1_b"].reshape(1, M),
         params["kh"] * bn_scale[None, :],
         params["kv"] * bn_scale[None, :],
         bn_scale.reshape(1, M),
         (bn_scale * (params["kh_b"] + params["kv_b"]) + bn_shift).reshape(1, M)],
        axis=0).astype(f32)                                             # (9, M)

    full2 = lambda b: (0, 0)   # weights: same block every step (no re-DMA)

    return pl.pallas_call(
        _light_bottleneck_kernel,
        out_shape=jax.ShapeDtypeStruct((B, H, W, C), f32),
        grid_spec=pltpu.PrefetchScalarGridSpec(
            num_scalar_prefetch=0,
            grid=(B,),                                   # one sample per step
            in_specs=[
                pl.BlockSpec((1, H, W, C), lambda b: (b, 0, 0, 0)),  # x (NHWC)
                pl.BlockSpec((11, C), full2),            # cpack
                pl.BlockSpec((9, M), full2),             # mpack
                pl.BlockSpec((C, M), full2),             # pw1 weight
                pl.BlockSpec((M, C), full2),             # pw2 weight
                pl.BlockSpec((C, R), full2),             # fc w1
                pl.BlockSpec((1, R), full2),             # fc b1
                pl.BlockSpec((R, C), full2),             # fc w2
                pl.BlockSpec((1, C), full2),             # fc b2
            ],
            out_specs=pl.BlockSpec((1, H, W, C), lambda b: (b, 0, 0, 0)),
            scratch_shapes=[
                pltpu.VMEM((1, H + 2, W + 2 * _WOFF, C), f32),  # padded input
                pltpu.VMEM((1, H + 2, W + 2 * _WOFF, M), f32),  # padded mid
            ],
        ),
        compiler_params=pltpu.CompilerParams(
            dimension_semantics=("parallel",)),          # megacore on v7x
    )(x_nhwc.astype(f32), cpack, mpack, params["pw1_w"], params["pw2_w"],
      params["fc_w1"], params["fc_b1"].reshape(1, R),
      params["fc_w2"], params["fc_b2"].reshape(1, C))


def light_bottleneck(x_nchw, params):
    # PyTorch-layout (NCHW) wrapper.  In an NHWC pipeline call
    # light_bottleneck_nhwc directly and skip both HBM relayouts.
    x_nhwc = jnp.transpose(x_nchw, (0, 2, 3, 1))
    out_nhwc = light_bottleneck_nhwc(x_nhwc, params)
    return jnp.transpose(out_nhwc, (0, 3, 1, 2))


# ----------------------------------------------------------------------------
# Pure-JAX reference (independent formulation, NHWC with explicit padding)
# ----------------------------------------------------------------------------
def reference_forward(x_nchw, params):
    B, C, H, W = x_nchw.shape
    M = params["pw1_w"].shape[1]
    x = jnp.transpose(x_nchw, (0, 2, 3, 1)).astype(jnp.float32)

    gap = jnp.mean(x, axis=(1, 2))
    hid = jnp.maximum(jnp.dot(gap, params["fc_w1"], precision=HIGHEST)
                      + params["fc_b1"], 0.0)
    att = jax.nn.sigmoid(jnp.dot(hid, params["fc_w2"], precision=HIGHEST)
                         + params["fc_b2"])
    xa = x * att[:, None, None, :]

    xp = jnp.pad(xa, ((0, 0), (1, 1), (1, 1), (0, 0)))
    dw = params["dw_w"]
    acc = params["dw_b"] + sum(xp[:, i:i + H, j:j + W, :] * dw[i, j]
                               for i in range(3) for j in range(3))
    t = jnp.maximum(jnp.einsum("bhwc,cm->bhwm", acc, params["pw1_w"],
                               precision=HIGHEST) + params["pw1_b"], 0.0)

    tp = jnp.pad(t, ((0, 0), (1, 1), (1, 1), (0, 0)))
    kh, kv = params["kh"], params["kv"]
    xh = (tp[:, 1:H + 1, 0:W, :] * kh[0] + t * kh[1]
          + tp[:, 1:H + 1, 2:W + 2, :] * kh[2] + params["kh_b"])
    xv = (tp[:, 0:H, 1:W + 1, :] * kv[0] + t * kv[1]
          + tp[:, 2:H + 2, 1:W + 1, :] * kv[2] + params["kv_b"])
    u = xh + xv + t
    scale = params["bn_gamma"] / jnp.sqrt(params["bn_var"] + BN_EPS)
    shift = params["bn_beta"] - params["bn_mean"] * scale
    u = jnp.maximum(u * scale + shift, 0.0)
    y = jnp.einsum("bhwm,mc->bhwc", u, params["pw2_w"],
                   precision=HIGHEST) + params["pw2_b"]
    if M == C:
        y = y + xa
    out = y + x
    return jnp.transpose(out, (0, 3, 1, 2))


# ----------------------------------------------------------------------------
if __name__ == "__main__":
    key = jax.random.PRNGKey(0)
    # channels=128 -> C is exactly one 128-lane vreg (lane-dense compute,
    # unmasked output stores); mid=64, SE width=16.
    B, C, H, W = 2, 128, 16, 16
    kx, kp = jax.random.split(key)
    x = jax.random.normal(kx, (B, C, H, W), jnp.float32)
    params = init_params(kp, C, reduction=8)

    out = jax.block_until_ready(light_bottleneck(x, params))
    assert out.shape == (B, C, H, W)

    ref = reference_forward(x, params)
    max_err = float(jnp.max(jnp.abs(out - ref)))
    if max_err > 1e-3:
        raise SystemExit(f"Mismatch vs reference: max abs err = {max_err}")

    print("KERNEL_OK")
</pallas_src>

<mosaic_0001>
module attributes {stable_mosaic.version = 11 : i64} {
  func.func @_light_bottleneck_kernel(%arg0: i32, %arg1: memref<1x16x16x128xf32, #tpu.memory_space<vmem>>, %arg2: memref<11x128xf32, #tpu.memory_space<vmem>>, %arg3: memref<9x64xf32, #tpu.memory_space<vmem>>, %arg4: memref<128x64xf32, #tpu.memory_space<vmem>>, %arg5: memref<64x128xf32, #tpu.memory_space<vmem>>, %arg6: memref<128x16xf32, #tpu.memory_space<vmem>>, %arg7: memref<1x16xf32, #tpu.memory_space<vmem>>, %arg8: memref<16x128xf32, #tpu.memory_space<vmem>>, %arg9: memref<1x128xf32, #tpu.memory_space<vmem>>, %arg10: memref<1x16x16x128xf32, #tpu.memory_space<vmem>>, %arg11: memref<1x18x32x128xf32, #tpu.memory_space<vmem>>, %arg12: memref<1x18x32x64xf32, #tpu.memory_space<vmem>>) attributes {dimension_semantics = [#tpu.dimension_semantics<parallel>], iteration_bounds = array<i64: 2>, scalar_prefetch = 0 : i64, scratch_operands = 2 : i64, tpu.core_type = #tpu.core_type<tc>, window_params = [{transform_indices = @transform_0, window_bounds = array<i64: 1, 16, 16, 128>}, {pipeline_mode = #tpu.pipeline_mode<synchronous>, transform_indices = @transform_1, window_bounds = array<i64: 11, 128>}, {pipeline_mode = #tpu.pipeline_mode<synchronous>, transform_indices = @transform_2, window_bounds = array<i64: 9, 64>}, {pipeline_mode = #tpu.pipeline_mode<synchronous>, transform_indices = @transform_3, window_bounds = array<i64: 128, 64>}, {pipeline_mode = #tpu.pipeline_mode<synchronous>, transform_indices = @transform_4, window_bounds = array<i64: 64, 128>}, {pipeline_mode = #tpu.pipeline_mode<synchronous>, transform_indices = @transform_5, window_bounds = array<i64: 128, 16>}, {pipeline_mode = #tpu.pipeline_mode<synchronous>, transform_indices = @transform_6, window_bounds = array<i64: 1, 16>}, {pipeline_mode = #tpu.pipeline_mode<synchronous>, transform_indices = @transform_7, window_bounds = array<i64: 16, 128>}, {pipeline_mode = #tpu.pipeline_mode<synchronous>, transform_indices = @transform_8, window_bounds = array<i64: 1, 128>}, {transform_indices = @transform_9, window_bounds = array<i64: 1, 16, 16, 128>}]} {
    %c0 = arith.constant 0 : index
    %c0_0 = arith.constant 0 : index
    %c0_1 = arith.constant 0 : index
    %c0_2 = arith.constant 0 : index
    %0 = vector.load %arg1[%c0, %c0_0, %c0_1, %c0_2] : memref<1x16x16x128xf32, #tpu.memory_space<vmem>>, vector<1x16x16x128xf32>
    %1 = vector.shape_cast %0 : vector<1x16x16x128xf32> to vector<256x128xf32>
    %cst = arith.constant dense<0.000000e+00> : vector<128xf32>
    %2 = vector.multi_reduction <add>, %1, %cst [0] : vector<256x128xf32> to vector<128xf32>
    %3 = vector.shape_cast %2 : vector<128xf32> to vector<1x128xf32>
    %cst_3 = arith.constant 2.560000e+02 : f32
    %4 = vector.broadcast %cst_3 : f32 to vector<1x128xf32>
    %5 = arith.divf %3, %4 : vector<1x128xf32>
    %c0_4 = arith.constant 0 : index
    %c0_5 = arith.constant 0 : index
    %6 = vector.load %arg6[%c0_4, %c0_5] : memref<128x16xf32, #tpu.memory_space<vmem>>, vector<128x16xf32>
    %cst_6 = arith.constant dense<0.000000e+00> : vector<1x16xf32>
    %7 = tpu.matmul %5, %6, %cst_6 {dimension_numbers = #tpu.dot_dimension_numbers<[1], [0], [0], [1], [0, 0, 1, 1], [], []>} : vector<1x128xf32>, vector<128x16xf32>, vector<1x16xf32> -> vector<1x16xf32>
    %c0_7 = arith.constant 0 : index
    %c0_8 = arith.constant 0 : index
    %8 = vector.load %arg7[%c0_7, %c0_8] : memref<1x16xf32, #tpu.memory_space<vmem>>, vector<1x16xf32>
    %9 = arith.addf %7, %8 : vector<1x16xf32>
    %cst_9 = arith.constant 0.000000e+00 : f32
    %10 = vector.broadcast %cst_9 : f32 to vector<1x16xf32>
    %11 = arith.maximumf %9, %10 : vector<1x16xf32>
    %c0_10 = arith.constant 0 : index
    %c0_11 = arith.constant 0 : index
    %12 = vector.load %arg8[%c0_10, %c0_11] : memref<16x128xf32, #tpu.memory_space<vmem>>, vector<16x128xf32>
    %cst_12 = arith.constant dense<0.000000e+00> : vector<1x128xf32>
    %13 = tpu.matmul %11, %12, %cst_12 {dimension_numbers = #tpu.dot_dimension_numbers<[1], [0], [0], [1], [0, 0, 1, 1], [], []>} : vector<1x16xf32>, vector<16x128xf32>, vector<1x128xf32> -> vector<1x128xf32>
    %c0_13 = arith.constant 0 : index
    %c0_14 = arith.constant 0 : index
    %14 = vector.load %arg9[%c0_13, %c0_14] : memref<1x128xf32, #tpu.memory_space<vmem>>, vector<1x128xf32>
    %15 = arith.addf %13, %14 : vector<1x128xf32>
    %16 = arith.negf %15 : vector<1x128xf32>
    %17 = math.exp %16 : vector<1x128xf32>
    %cst_15 = arith.constant 1.000000e+00 : f32
    %18 = vector.broadcast %cst_15 : f32 to vector<1x128xf32>
    %19 = arith.addf %18, %17 : vector<1x128xf32>
    %20 = arith.divf %18, %19 : vector<1x128xf32>
    %21 = vector.shape_cast %20 : vector<1x128xf32> to vector<1x1x1x128xf32>
    %22 = vector.broadcast %21 : vector<1x1x1x128xf32> to vector<1x16x16x128xf32>
    %23 = arith.mulf %0, %22 : vector<1x16x16x128xf32>
    %c0_16 = arith.constant 0 : index
    %c0_17 = arith.constant 0 : index
    %24 = vector.load %arg2[%c0_16, %c0_17] : memref<11x128xf32, #tpu.memory_space<vmem>>, vector<11x128xf32>
    %cst_18 = arith.constant 0.000000e+00 : f32
    %25 = vector.broadcast %cst_18 : f32 to vector<1x1x32x128xf32>
    %cst_19 = arith.constant 0.000000e+00 : f32
    %26 = vector.broadcast %cst_19 : f32 to vector<1x16x8x128xf32>
    %c0_20 = arith.constant 0 : index
    %c0_21 = arith.constant 0 : index
    %c0_22 = arith.constant 0 : index
    %c0_23 = arith.constant 0 : index
    %27 = vector.load %arg11[%c0_20, %c0_21, %c0_22, %c0_23] : memref<1x18x32x128xf32, #tpu.memory_space<vmem>>, vector<1x1x32x128xf32>
    tpu.vector_store %arg11[%c0_20, %c0_21, %c0_22, %c0_23], %25 {strides = array<i32>} : memref<1x18x32x128xf32, #tpu.memory_space<vmem>>, vector<1x1x32x128xf32>,
    %c0_24 = arith.constant 0 : index
    %c17 = arith.constant 17 : index
    %c0_25 = arith.constant 0 : index
    %c0_26 = arith.constant 0 : index
    %28 = vector.load %arg11[%c0_24, %c17, %c0_25, %c0_26] : memref<1x18x32x128xf32, #tpu.memory_space<vmem>>, vector<1x1x32x128xf32>
    tpu.vector_store %arg11[%c0_24, %c17, %c0_25, %c0_26], %25 {strides = array<i32>} : memref<1x18x32x128xf32, #tpu.memory_space<vmem>>, vector<1x1x32x128xf32>,
    %c0_27 = arith.constant 0 : index
    %c1 = arith.constant 1 : index
    %c0_28 = arith.constant 0 : index
    %c0_29 = arith.constant 0 : index
    %29 = vector.load %arg11[%c0_27, %c1, %c0_28, %c0_29] : memref<1x18x32x128xf32, #tpu.memory_space<vmem>>, vector<1x16x8x128xf32>
    tpu.vector_store %arg11[%c0_27, %c1, %c0_28, %c0_29], %26 {strides = array<i32>} : memref<1x18x32x128xf32, #tpu.memory_space<vmem>>, vector<1x16x8x128xf32>,
    %c0_30 = arith.constant 0 : index
    %c1_31 = arith.constant 1 : index
    %c24 = arith.constant 24 : index
    %c0_32 = arith.constant 0 : index
    %30 = vector.load %arg11[%c0_30, %c1_31, %c24, %c0_32] : memref<1x18x32x128xf32, #tpu.memory_space<vmem>>, vector<1x16x8x128xf32>
    tpu.vector_store %arg11[%c0_30, %c1_31, %c24, %c0_32], %26 {strides = array<i32>} : memref<1x18x32x128xf32, #tpu.memory_space<vmem>>, vector<1x16x8x128xf32>,
    %c0_33 = arith.constant 0 : index
    %c1_34 = arith.constant 1 : index
    %c8 = arith.constant 8 : index
    %c0_35 = arith.constant 0 : index
    %31 = vector.load %arg11[%c0_33, %c1_34, %c8, %c0_35] : memref<1x18x32x128xf32, #tpu.memory_space<vmem>>, vector<1x16x16x128xf32>
    tpu.vector_store %arg11[%c0_33, %c1_34, %c8, %c0_35], %23 {strides = array<i32>} : memref<1x18x32x128xf32, #tpu.memory_space<vmem>>, vector<1x16x16x128xf32>,
    %c0_36 = arith.constant 0 : index
    %c0_37 = arith.constant 0 : index
    %c7 = arith.constant 7 : index
    %c0_38 = arith.constant 0 : index
    %32 = vector.load %arg11[%c0_36, %c0_37, %c7, %c0_38] : memref<1x18x32x128xf32, #tpu.memory_space<vmem>>, vector<1x18x16x128xf32>
    %c0_39 = arith.constant 0 : index
    %c0_40 = arith.constant 0 : index
    %c8_41 = arith.constant 8 : index
    %c0_42 = arith.constant 0 : index
    %33 = vector.load %arg11[%c0_39, %c0_40, %c8_41, %c0_42] : memref<1x18x32x128xf32, #tpu.memory_space<vmem>>, vector<1x18x16x128xf32>
    %c0_43 = arith.constant 0 : index
    %c0_44 = arith.constant 0 : index
    %c9 = arith.constant 9 : index
    %c0_45 = arith.constant 0 : index
    %34 = vector.load %arg11[%c0_43, %c0_44, %c9, %c0_45] : memref<1x18x32x128xf32, #tpu.memory_space<vmem>>, vector<1x18x16x128xf32>
    %35 = vector.extract_strided_slice %24 {offsets = [4, 0], sizes = [1, 128], strides = [1, 1]} : vector<11x128xf32> to vector<1x128xf32>
    %36 = vector.shape_cast %35 : vector<1x128xf32> to vector<1x1x1x128xf32>
    %37 = vector.broadcast %36 : vector<1x1x1x128xf32> to vector<1x16x16x128xf32>
    %38 = arith.mulf %23, %37 : vector<1x16x16x128xf32>
    %39 = vector.extract_strided_slice %24 {offsets = [9, 0], sizes = [1, 128], strides = [1, 1]} : vector<11x128xf32> to vector<1x128xf32>
    %40 = vector.shape_cast %39 : vector<1x128xf32> to vector<1x1x1x128xf32>
    %41 = vector.broadcast %40 : vector<1x1x1x128xf32> to vector<1x16x16x128xf32>
    %42 = arith.addf %38, %41 : vector<1x16x16x128xf32>
    %43 = vector.extract_strided_slice %32 {offsets = [0, 0, 0, 0], sizes = [1, 16, 16, 128], strides = [1, 1, 1, 1]} : vector<1x18x16x128xf32> to vector<1x16x16x128xf32>
    %44 = vector.extract_strided_slice %24 {offsets = [0, 0], sizes = [1, 128], strides = [1, 1]} : vector<11x128xf32> to vector<1x128xf32>
    %45 = vector.shape_cast %44 : vector<1x128xf32> to vector<1x1x1x128xf32>
    %46 = vector.broadcast %45 : vector<1x1x1x128xf32> to vector<1x16x16x128xf32>
    %47 = arith.mulf %43, %46 : vector<1x16x16x128xf32>
    %48 = arith.addf %42, %47 : vector<1x16x16x128xf32>
    %49 = vector.extract_strided_slice %32 {offsets = [0, 1, 0, 0], sizes = [1, 16, 16, 128], strides = [1, 1, 1, 1]} : vector<1x18x16x128xf32> to vector<1x16x16x128xf32>
    %50 = vector.extract_strided_slice %24 {offsets = [3, 0], sizes = [1, 128], strides = [1, 1]} : vector<11x128xf32> to vector<1x128xf32>
    %51 = vector.shape_cast %50 : vector<1x128xf32> to vector<1x1x1x128xf32>
    %52 = vector.broadcast %51 : vector<1x1x1x128xf32> to vector<1x16x16x128xf32>
    %53 = arith.mulf %49, %52 : vector<1x16x16x128xf32>
    %54 = arith.addf %48, %53 : vector<1x16x16x128xf32>
    %55 = vector.extract_strided_slice %32 {offsets = [0, 2, 0, 0], sizes = [1, 16, 16, 128], strides = [1, 1, 1, 1]} : vector<1x18x16x128xf32> to vector<1x16x16x128xf32>
    %56 = vector.extract_strided_slice %24 {offsets = [6, 0], sizes = [1, 128], strides = [1, 1]} : vector<11x128xf32> to vector<1x128xf32>
    %57 = vector.shape_cast %56 : vector<1x128xf32> to vector<1x1x1x128xf32>
    %58 = vector.broadcast %57 : vector<1x1x1x128xf32> to vector<1x16x16x128xf32>
    %59 = arith.mulf %55, %58 : vector<1x16x16x128xf32>
    %60 = arith.addf %54, %59 : vector<1x16x16x128xf32>
    %61 = vector.extract_strided_slice %33 {offsets = [0, 0, 0, 0], sizes = [1, 16, 16, 128], strides = [1, 1, 1, 1]} : vector<1x18x16x128xf32> to vector<1x16x16x128xf32>
    %62 = vector.extract_strided_slice %24 {offsets = [1, 0], sizes = [1, 128], strides = [1, 1]} : vector<11x128xf32> to vector<1x128xf32>
    %63 = vector.shape_cast %62 : vector<1x128xf32> to vector<1x1x1x128xf32>
    %64 = vector.broadcast %63 : vector<1x1x1x128xf32> to vector<1x16x16x128xf32>
    %65 = arith.mulf %61, %64 : vector<1x16x16x128xf32>
    %66 = arith.addf %60, %65 : vector<1x16x16x128xf32>
    %67 = vector.extract_strided_slice %33 {offsets = [0, 2, 0, 0], sizes = [1, 16, 16, 128], strides = [1, 1, 1, 1]} : vector<1x18x16x128xf32> to vector<1x16x16x128xf32>
    %68 = vector.extract_strided_slice %24 {offsets = [7, 0], sizes = [1, 128], strides = [1, 1]} : vector<11x128xf32> to vector<1x128xf32>
    %69 = vector.shape_cast %68 : vector<1x128xf32> to vector<1x1x1x128xf32>
    %70 = vector.broadcast %69 : vector<1x1x1x128xf32> to vector<1x16x16x128xf32>
    %71 = arith.mulf %67, %70 : vector<1x16x16x128xf32>
    %72 = arith.addf %66, %71 : vector<1x16x16x128xf32>
    %73 = vector.extract_strided_slice %34 {offsets = [0, 0, 0, 0], sizes = [1, 16, 16, 128], strides = [1, 1, 1, 1]} : vector<1x18x16x128xf32> to vector<1x16x16x128xf32>
    %74 = vector.extract_strided_slice %24 {offsets = [2, 0], sizes = [1, 128], strides = [1, 1]} : vector<11x128xf32> to vector<1x128xf32>
    %75 = vector.shape_cast %74 : vector<1x128xf32> to vector<1x1x1x128xf32>
    %76 = vector.broadcast %75 : vector<1x1x1x128xf32> to vector<1x16x16x128xf32>
    %77 = arith.mulf %73, %76 : vector<1x16x16x128xf32>
    %78 = arith.addf %72, %77 : vector<1x16x16x128xf32>
    %79 = vector.extract_strided_slice %34 {offsets = [0, 1, 0, 0], sizes = [1, 16, 16, 128], strides = [1, 1, 1, 1]} : vector<1x18x16x128xf32> to vector<1x16x16x128xf32>
    %80 = vector.extract_strided_slice %24 {offsets = [5, 0], sizes = [1, 128], strides = [1, 1]} : vector<11x128xf32> to vector<1x128xf32>
    %81 = vector.shape_cast %80 : vector<1x128xf32> to vector<1x1x1x128xf32>
    %82 = vector.broadcast %81 : vector<1x1x1x128xf32> to vector<1x16x16x128xf32>
    %83 = arith.mulf %79, %82 : vector<1x16x16x128xf32>
    %84 = arith.addf %78, %83 : vector<1x16x16x128xf32>
    %85 = vector.extract_strided_slice %34 {offsets = [0, 2, 0, 0], sizes = [1, 16, 16, 128], strides = [1, 1, 1, 1]} : vector<1x18x16x128xf32> to vector<1x16x16x128xf32>
    %86 = vector.extract_strided_slice %24 {offsets = [8, 0], sizes = [1, 128], strides = [1, 1]} : vector<11x128xf32> to vector<1x128xf32>
    %87 = vector.shape_cast %86 : vector<1x128xf32> to vector<1x1x1x128xf32>
    %88 = vector.broadcast %87 : vector<1x1x1x128xf32> to vector<1x16x16x128xf32>
    %89 = arith.mulf %85, %88 : vector<1x16x16x128xf32>
    %90 = arith.addf %84, %89 : vector<1x16x16x128xf32>
    %c0_46 = arith.constant 0 : index
    %c0_47 = arith.constant 0 : index
    %91 = vector.load %arg3[%c0_46, %c0_47] : memref<9x64xf32, #tpu.memory_space<vmem>>, vector<9x64xf32>
    %92 = vector.shape_cast %90 : vector<1x16x16x128xf32> to vector<256x128xf32>
    %c0_48 = arith.constant 0 : index
    %c0_49 = arith.constant 0 : index
    %93 = vector.load %arg4[%c0_48, %c0_49] : memref<128x64xf32, #tpu.memory_space<vmem>>, vector<128x64xf32>
    %cst_50 = arith.constant dense<0.000000e+00> : vector<256x64xf32>
    %94 = tpu.matmul %92, %93, %cst_50 {dimension_numbers = #tpu.dot_dimension_numbers<[1], [0], [0], [1], [0, 0, 1, 1], [], []>, precision = #tpu.contract_precision<fp32>} : vector<256x128xf32>, vector<128x64xf32>, vector<256x64xf32> -> vector<256x64xf32>
    %95 = vector.extract_strided_slice %91 {offsets = [0, 0], sizes = [1, 64], strides = [1, 1]} : vector<9x64xf32> to vector<1x64xf32>
    %96 = vector.broadcast %95 : vector<1x64xf32> to vector<256x64xf32>
    %97 = arith.addf %94, %96 : vector<256x64xf32>
    %cst_51 = arith.constant 0.000000e+00 : f32
    %98 = vector.broadcast %cst_51 : f32 to vector<256x64xf32>
    %99 = arith.maximumf %97, %98 : vector<256x64xf32>
    %100 = vector.shape_cast %99 : vector<256x64xf32> to vector<1x16x16x64xf32>
    %cst_52 = arith.constant 0.000000e+00 : f32
    %101 = vector.broadcast %cst_52 : f32 to vector<1x1x32x64xf32>
    %cst_53 = arith.constant 0.000000e+00 : f32
    %102 = vector.broadcast %cst_53 : f32 to vector<1x16x8x64xf32>
    %c0_54 = arith.constant 0 : index
    %c0_55 = arith.constant 0 : index
    %c0_56 = arith.constant 0 : index
    %c0_57 = arith.constant 0 : index
    %103 = vector.load %arg12[%c0_54, %c0_55, %c0_56, %c0_57] : memref<1x18x32x64xf32, #tpu.memory_space<vmem>>, vector<1x1x32x64xf32>
    tpu.vector_store %arg12[%c0_54, %c0_55, %c0_56, %c0_57], %101 {strides = array<i32>} : memref<1x18x32x64xf32, #tpu.memory_space<vmem>>, vector<1x1x32x64xf32>,
    %c0_58 = arith.constant 0 : index
    %c17_59 = arith.constant 17 : index
    %c0_60 = arith.constant 0 : index
    %c0_61 = arith.constant 0 : index
    %104 = vector.load %arg12[%c0_58, %c17_59, %c0_60, %c0_61] : memref<1x18x32x64xf32, #tpu.memory_space<vmem>>, vector<1x1x32x64xf32>
    tpu.vector_store %arg12[%c0_58, %c17_59, %c0_60, %c0_61], %101 {strides = array<i32>} : memref<1x18x32x64xf32, #tpu.memory_space<vmem>>, vector<1x1x32x64xf32>,
    %c0_62 = arith.constant 0 : index
    %c1_63 = arith.constant 1 : index
    %c0_64 = arith.constant 0 : index
    %c0_65 = arith.constant 0 : index
    %105 = vector.load %arg12[%c0_62, %c1_63, %c0_64, %c0_65] : memref<1x18x32x64xf32, #tpu.memory_space<vmem>>, vector<1x16x8x64xf32>
    tpu.vector_store %arg12[%c0_62, %c1_63, %c0_64, %c0_65], %102 {strides = array<i32>} : memref<1x18x32x64xf32, #tpu.memory_space<vmem>>, vector<1x16x8x64xf32>,
    %c0_66 = arith.constant 0 : index
    %c1_67 = arith.constant 1 : index
    %c24_68 = arith.constant 24 : index
    %c0_69 = arith.constant 0 : index
    %106 = vector.load %arg12[%c0_66, %c1_67, %c24_68, %c0_69] : memref<1x18x32x64xf32, #tpu.memory_space<vmem>>, vector<1x16x8x64xf32>
    tpu.vector_store %arg12[%c0_66, %c1_67, %c24_68, %c0_69], %102 {strides = array<i32>} : memref<1x18x32x64xf32, #tpu.memory_space<vmem>>, vector<1x16x8x64xf32>,
    %c0_70 = arith.constant 0 : index
    %c1_71 = arith.constant 1 : index
    %c8_72 = arith.constant 8 : index
    %c0_73 = arith.constant 0 : index
    %107 = vector.load %arg12[%c0_70, %c1_71, %c8_72, %c0_73] : memref<1x18x32x64xf32, #tpu.memory_space<vmem>>, vector<1x16x16x64xf32>
    tpu.vector_store %arg12[%c0_70, %c1_71, %c8_72, %c0_73], %100 {strides = array<i32>} : memref<1x18x32x64xf32, #tpu.memory_space<vmem>>, vector<1x16x16x64xf32>,
    %c0_74 = arith.constant 0 : index
    %c1_75 = arith.constant 1 : index
    %c7_76 = arith.constant 7 : index
    %c0_77 = arith.constant 0 : index
    %108 = vector.load %arg12[%c0_74, %c1_75, %c7_76, %c0_77] : memref<1x18x32x64xf32, #tpu.memory_space<vmem>>, vector<1x16x16x64xf32>
    %c0_78 = arith.constant 0 : index
    %c1_79 = arith.constant 1 : index
    %c9_80 = arith.constant 9 : index
    %c0_81 = arith.constant 0 : index
    %109 = vector.load %arg12[%c0_78, %c1_79, %c9_80, %c0_81] : memref<1x18x32x64xf32, #tpu.memory_space<vmem>>, vector<1x16x16x64xf32>
    %c0_82 = arith.constant 0 : index
    %c0_83 = arith.constant 0 : index
    %c8_84 = arith.constant 8 : index
    %c0_85 = arith.constant 0 : index
    %110 = vector.load %arg12[%c0_82, %c0_83, %c8_84, %c0_85] : memref<1x18x32x64xf32, #tpu.memory_space<vmem>>, vector<1x16x16x64xf32>
    %c0_86 = arith.constant 0 : index
    %c2 = arith.constant 2 : index
    %c8_87 = arith.constant 8 : index
    %c0_88 = arith.constant 0 : index
    %111 = vector.load %arg12[%c0_86, %c2, %c8_87, %c0_88] : memref<1x18x32x64xf32, #tpu.memory_space<vmem>>, vector<1x16x16x64xf32>
    %112 = vector.extract_strided_slice %91 {offsets = [2, 0], sizes = [1, 64], strides = [1, 1]} : vector<9x64xf32> to vector<1x64xf32>
    %113 = vector.extract_strided_slice %91 {offsets = [5, 0], sizes = [1, 64], strides = [1, 1]} : vector<9x64xf32> to vector<1x64xf32>
    %114 = arith.addf %112, %113 : vector<1x64xf32>
    %115 = vector.extract_strided_slice %91 {offsets = [7, 0], sizes = [1, 64], strides = [1, 1]} : vector<9x64xf32> to vector<1x64xf32>
    %116 = arith.addf %114, %115 : vector<1x64xf32>
    %117 = vector.shape_cast %116 : vector<1x64xf32> to vector<1x1x1x64xf32>
    %118 = vector.broadcast %117 : vector<1x1x1x64xf32> to vector<1x16x16x64xf32>
    %119 = arith.mulf %100, %118 : vector<1x16x16x64xf32>
    %120 = vector.extract_strided_slice %91 {offsets = [8, 0], sizes = [1, 64], strides = [1, 1]} : vector<9x64xf32> to vector<1x64xf32>
    %121 = vector.shape_cast %120 : vector<1x64xf32> to vector<1x1x1x64xf32>
    %122 = vector.broadcast %121 : vector<1x1x1x64xf32> to vector<1x16x16x64xf32>
    %123 = arith.addf %119, %122 : vector<1x16x16x64xf32>
    %124 = vector.extract_strided_slice %91 {offsets = [1, 0], sizes = [1, 64], strides = [1, 1]} : vector<9x64xf32> to vector<1x64xf32>
    %125 = vector.shape_cast %124 : vector<1x64xf32> to vector<1x1x1x64xf32>
    %126 = vector.broadcast %125 : vector<1x1x1x64xf32> to vector<1x16x16x64xf32>
    %127 = arith.mulf %108, %126 : vector<1x16x16x64xf32>
    %128 = arith.addf %123, %127 : vector<1x16x16x64xf32>
    %129 = vector.extract_strided_slice %91 {offsets = [3, 0], sizes = [1, 64], strides = [1, 1]} : vector<9x64xf32> to vector<1x64xf32>
    %130 = vector.shape_cast %129 : vector<1x64xf32> to vector<1x1x1x64xf32>
    %131 = vector.broadcast %130 : vector<1x1x1x64xf32> to vector<1x16x16x64xf32>
    %132 = arith.mulf %109, %131 : vector<1x16x16x64xf32>
    %133 = arith.addf %128, %132 : vector<1x16x16x64xf32>
    %134 = vector.extract_strided_slice %91 {offsets = [4, 0], sizes = [1, 64], strides = [1, 1]} : vector<9x64xf32> to vector<1x64xf32>
    %135 = vector.shape_cast %134 : vector<1x64xf32> to vector<1x1x1x64xf32>
    %136 = vector.broadcast %135 : vector<1x1x1x64xf32> to vector<1x16x16x64xf32>
    %137 = arith.mulf %110, %136 : vector<1x16x16x64xf32>
    %138 = arith.addf %133, %137 : vector<1x16x16x64xf32>
    %139 = vector.extract_strided_slice %91 {offsets = [6, 0], sizes = [1, 64], strides = [1, 1]} : vector<9x64xf32> to vector<1x64xf32>
    %140 = vector.shape_cast %139 : vector<1x64xf32> to vector<1x1x1x64xf32>
    %141 = vector.broadcast %140 : vector<1x1x1x64xf32> to vector<1x16x16x64xf32>
    %142 = arith.mulf %111, %141 : vector<1x16x16x64xf32>
    %143 = arith.addf %138, %142 : vector<1x16x16x64xf32>
    %cst_89 = arith.constant 0.000000e+00 : f32
    %144 = vector.broadcast %cst_89 : f32 to vector<1x16x16x64xf32>
    %145 = arith.maximumf %143, %144 : vector<1x16x16x64xf32>
    %146 = vector.shape_cast %145 : vector<1x16x16x64xf32> to vector<256x64xf32>
    %c0_90 = arith.constant 0 : index
    %c0_91 = arith.constant 0 : index
    %147 = vector.load %arg5[%c0_90, %c0_91] : memref<64x128xf32, #tpu.memory_space<vmem>>, vector<64x128xf32>
    %cst_92 = arith.constant dense<0.000000e+00> : vector<256x128xf32>
    %148 = tpu.matmul %146, %147, %cst_92 {dimension_numbers = #tpu.dot_dimension_numbers<[1], [0], [0], [1], [0, 0, 1, 1], [], []>, precision = #tpu.contract_precision<fp32>} : vector<256x64xf32>, vector<64x128xf32>, vector<256x128xf32> -> vector<256x128xf32>
    %149 = vector.extract_strided_slice %24 {offsets = [10, 0], sizes = [1, 128], strides = [1, 1]} : vector<11x128xf32> to vector<1x128xf32>
    %150 = vector.broadcast %149 : vector<1x128xf32> to vector<256x128xf32>
    %151 = arith.addf %148, %150 : vector<256x128xf32>
    %152 = vector.shape_cast %151 : vector<256x128xf32> to vector<1x16x16x128xf32>
    %c0_93 = arith.constant 0 : index
    %c0_94 = arith.constant 0 : index
    %c0_95 = arith.constant 0 : index
    %c0_96 = arith.constant 0 : index
    %153 = vector.load %arg1[%c0_93, %c0_94, %c0_95, %c0_96] : memref<1x16x16x128xf32, #tpu.memory_space<vmem>>, vector<1x16x16x128xf32>
    %154 = arith.addf %152, %153 : vector<1x16x16x128xf32>
    %c0_97 = arith.constant 0 : index
    %c0_98 = arith.constant 0 : index
    %c0_99 = arith.constant 0 : index
    %c0_100 = arith.constant 0 : index
    %155 = vector.load %arg10[%c0_97, %c0_98, %c0_99, %c0_100] : memref<1x16x16x128xf32, #tpu.memory_space<vmem>>, vector<1x16x16x128xf32>
    tpu.vector_store %arg10[%c0_97, %c0_98, %c0_99, %c0_100], %154 {strides = array<i32>} : memref<1x16x16x128xf32, #tpu.memory_space<vmem>>, vector<1x16x16x128xf32>,
    return
  }
  func.func @transform_0(%arg0: i32) -> (i32, i32, i32, i32) {
    %c0_i32 = arith.constant 0 : i32
    %c0_i32_0 = arith.constant 0 : i32
    %c0_i32_1 = arith.constant 0 : i32
    %c0_i32_2 = arith.constant 0 : i32
    return %arg0, %c0_i32, %c0_i32_0, %c0_i32_1 : i32, i32, i32, i32
  }
  func.func @transform_1(%arg0: i32) -> (i32, i32) {
    %c0_i32 = arith.constant 0 : i32
    %c0_i32_0 = arith.constant 0 : i32
    %c0_i32_1 = arith.constant 0 : i32
    return %c0_i32, %c0_i32_0 : i32, i32
  }
  func.func @transform_2(%arg0: i32) -> (i32, i32) {
    %c0_i32 = arith.constant 0 : i32
    %c0_i32_0 = arith.constant 0 : i32
    %c0_i32_1 = arith.constant 0 : i32
    return %c0_i32, %c0_i32_0 : i32, i32
  }
  func.func @transform_3(%arg0: i32) -> (i32, i32) {
    %c0_i32 = arith.constant 0 : i32
    %c0_i32_0 = arith.constant 0 : i32
    %c0_i32_1 = arith.constant 0 : i32
    return %c0_i32, %c0_i32_0 : i32, i32
  }
  func.func @transform_4(%arg0: i32) -> (i32, i32) {
    %c0_i32 = arith.constant 0 : i32
    %c0_i32_0 = arith.constant 0 : i32
    %c0_i32_1 = arith.constant 0 : i32
    return %c0_i32, %c0_i32_0 : i32, i32
  }
  func.func @transform_5(%arg0: i32) -> (i32, i32) {
    %c0_i32 = arith.constant 0 : i32
    %c0_i32_0 = arith.constant 0 : i32
    %c0_i32_1 = arith.constant 0 : i32
    return %c0_i32, %c0_i32_0 : i32, i32
  }
  func.func @transform_6(%arg0: i32) -> (i32, i32) {
    %c0_i32 = arith.constant 0 : i32
    %c0_i32_0 = arith.constant 0 : i32
    %c0_i32_1 = arith.constant 0 : i32
    return %c0_i32, %c0_i32_0 : i32, i32
  }
  func.func @transform_7(%arg0: i32) -> (i32, i32) {
    %c0_i32 = arith.constant 0 : i32
    %c0_i32_0 = arith.constant 0 : i32
    %c0_i32_1 = arith.constant 0 : i32
    return %c0_i32, %c0_i32_0 : i32, i32
  }
  func.func @transform_8(%arg0: i32) -> (i32, i32) {
    %c0_i32 = arith.constant 0 : i32
    %c0_i32_0 = arith.constant 0 : i32
    %c0_i32_1 = arith.constant 0 : i32
    return %c0_i32, %c0_i32_0 : i32, i32
  }
  func.func @transform_9(%arg0: i32) -> (i32, i32, i32, i32) {
    %c0_i32 = arith.constant 0 : i32
    %c0_i32_0 = arith.constant 0 : i32
    %c0_i32_1 = arith.constant 0 : i32
    %c0_i32_2 = arith.constant 0 : i32
    return %arg0, %c0_i32, %c0_i32_0, %c0_i32_1 : i32, i32, i32, i32
  }
}

</mosaic_0001>

<llo_original>
// kernel: tpu_custom_call.1
$region0: #{tpu_custom_call.1}
  #allocation0 [shape = 'u32[]', space=smem, size = 0x4, offset = 0x4, fixed_abs, tag = 'smem constant byte address 0x4 - core index']
  #allocation1 [shape = 'u32[72,128]{1,0:T(1,128)}', space=vmem, size = 0x9000, scoped, tag = 'internal scratch']
  #allocation2 [shape = 'f32[1,18,32,128]{3,2,1,0:T(8,128)}', space=vmem, size = 0x48000, scoped, tag = 'scratch operand']
  #allocation3 [shape = 'f32[1,18,32,64]{3,2,1,0:T(8,128)}', space=vmem, size = 0x48000, scoped, tag = 'scratch operand']
  %s0 = inlined_call_operand.hbm [shape: f32[2,16,16,128], index: 0, kind: input, shape index: {}]
  %s1 = inlined_call_operand.vmem [shape: f32[11,128], index: 1, kind: input, shape index: {}]
  %s2 = inlined_call_operand.vmem [shape: f32[9,64], index: 2, kind: input, shape index: {}]
  %s3 = inlined_call_operand.vmem [shape: f32[128,64], index: 3, kind: input, shape index: {}]
  %s4 = inlined_call_operand.vmem [shape: f32[64,128], index: 4, kind: input, shape index: {}]
  %s5 = inlined_call_operand.vmem [shape: f32[128,16], index: 5, kind: input, shape index: {}]
  %s6 = inlined_call_operand.vmem [shape: f32[1,16], index: 6, kind: input, shape index: {}]
  %s7 = inlined_call_operand.vmem [shape: f32[16,128], index: 7, kind: input, shape index: {}]
  %s8 = inlined_call_operand.vmem [shape: f32[1,128], index: 8, kind: input, shape index: {}]
  %s9 = inlined_call_operand.hbm [shape: f32[2,16,16,128], index: 9, kind: output, shape index: {}]
  %s10 = sld [smem:[#allocation0]]
  $region73: #{tpu_custom_call.1} parent=0
    _
  %s12 = ssub.s32 1, %s10
  %s13 = scalar_select 0, %s12, %s10
  $region1: #{tpu_custom_call.1} parent=0
    #allocation4 [shape = 'u8[262144]{0}', space=vmem, size = 0x40000, scoped, tag = 'input window, operand 0']
    #allocation5 [shape = 's32[2]{0}', space=sflag, size = 0x8, scoped, tag = 'scoped memory for tpu_custom_call.1']
    #allocation6 [shape = 's32[2]{0}', space=sflag, size = 0x8, scoped, tag = 'scoped memory for tpu_custom_call.1']
    #allocation7 [shape = 'u8[262144]{0}', space=vmem, size = 0x40000, scoped, tag = 'output window, operand 0']
    %14 = vsyncpa [#allocation5], 0
    %s15 = scalar_lea.sflag [#allocation5], 1
    %16 = vsyncpa %s15, 0
    %17 = vsyncpa [#allocation6], 0
    %s18 = scalar_lea.sflag [#allocation6], 1
    %19 = vsyncpa %s18, 0
    loop: start=0, step=1, limit=4
    $region2: #{tpu_custom_call.1} parent=1 // loop_pre_header
      _
    $region3: #{tpu_custom_call.1} parent=1 // loop_header
      %s21 = sphi 0, %s25
      %p22 = scmp.ge.s32.totalorder %s21, 4
      %s31 = sphi 0, %s33
      %s34 = sphi 0, %s31
      %s35 = sphi 0, %s34
      %s51 = sphi 0, %s35
      %s55 = sphi 0, %s55
      %s57 = sphi 0, %s55
      %s58 = sphi 0, %s57
      %s72 = sphi 0, %s58
      %s76 = sphi 0, %s76
      %s78 = sphi 0, %s76
      %s79 = sphi 0, %s78
      %s93 = sphi 0, %s79
      %s97 = sphi 0, %s97
      %s99 = sphi 0, %s97
      %s100 = sphi 0, %s99
      %s114 = sphi 0, %s100
      %s118 = sphi 0, %s118
      %s120 = sphi 0, %s118
      %s121 = sphi 0, %s120
      %s135 = sphi 0, %s121
      %s139 = sphi 0, %s139
      %s141 = sphi 0, %s139
      %s142 = sphi 0, %s141
      %s156 = sphi 0, %s142
      %s160 = sphi 0, %s160
      %s162 = sphi 0, %s160
      %s163 = sphi 0, %s162
      %s177 = sphi 0, %s163
      %s181 = sphi 0, %s181
      %s183 = sphi 0, %s181
      %s184 = sphi 0, %s183
      %s198 = sphi 0, %s184
      %s202 = sphi 0, %s202
      %s204 = sphi 0, %s202
      %s205 = sphi 0, %s204
      %s219 = sphi 0, %s205
      %s225 = sphi 0, %s227
      %s228 = sphi 0, %s225
      %s229 = sphi 0, %s228
      %s245 = sphi 0, %s229
    $region4: #{tpu_custom_call.1} parent=1 // loop_header_branch
      %24 = sbr.rel (%p22) target = $region8
    $region5: #{tpu_custom_call.1} parent=1 // loop_body
      %s26 = ssub.s32 %s21, 1
      %s27 = ssub.s32 %s21, 2
      %s28 = sadd.s32 %s21, 1
      %s29 = ssub.s32 %s21, %s28
      %p30 = scmp.eq.s32.totalorder %s29, 0
      %s32 = sadd.s32 %s31, 1
      %s33 = scalar_select %p30, %s31, %s32
      %p36 = pneg %p30
      %p37 = scmp.eq.s32.totalorder %s21, 1
      %p38 = por %p36, %p37
      %p39 = scmp.ne.s32.totalorder %s31, %s34
      %p40 = scmp.eq.s32.totalorder %s21, 0
      %p41 = por %p39, %p40
      %p42 = scmp.ne.s32.totalorder %s31, %s34
      %p43 = scmp.eq.s32.totalorder %s26, 1
      %p44 = por %p42, %p43
      %p45 = scmp.ne.s32.totalorder %s34, %s35
      %p46 = scmp.eq.s32.totalorder %s26, 0
      %p47 = por %p45, %p46
      %p48 = scmp.ne.s32.totalorder %s34, %s35
      %p49 = scmp.eq.s32.totalorder %s27, 1
      %p50 = por %p48, %p49
      %p52 = scmp.ne.s32.totalorder %s35, %s51
      %p53 = scmp.eq.s32.totalorder %s27, 0
      %p54 = por %p52, %p53
      %s56 = sadd.s32 %s55, 1
      %p59 = scmp.eq.s32.totalorder %s21, 1
      %p60 = scmp.ne.s32.totalorder %s55, %s57
      %p61 = scmp.eq.s32.totalorder %s21, 0
      %p62 = por %p60, %p61
      %p63 = scmp.ne.s32.totalorder %s55, %s57
      %p64 = scmp.eq.s32.totalorder %s26, 1
      %p65 = por %p63, %p64
      %p66 = scmp.ne.s32.totalorder %s57, %s58
      %p67 = scmp.eq.s32.totalorder %s26, 0
      %p68 = por %p66, %p67
      %p69 = scmp.ne.s32.totalorder %s57, %s58
      %p70 = scmp.eq.s32.totalorder %s27, 1
      %p71 = por %p69, %p70
      %p73 = scmp.ne.s32.totalorder %s58, %s72
      %p74 = scmp.eq.s32.totalorder %s27, 0
      %p75 = por %p73, %p74
      %s77 = sadd.s32 %s76, 1
      %p80 = scmp.eq.s32.totalorder %s21, 1
      %p81 = scmp.ne.s32.totalorder %s76, %s78
      %p82 = scmp.eq.s32.totalorder %s21, 0
      %p83 = por %p81, %p82
      %p84 = scmp.ne.s32.totalorder %s76, %s78
      %p85 = scmp.eq.s32.totalorder %s26, 1
      %p86 = por %p84, %p85
      %p87 = scmp.ne.s32.totalorder %s78, %s79
      %p88 = scmp.eq.s32.totalorder %s26, 0
      %p89 = por %p87, %p88
      %p90 = scmp.ne.s32.totalorder %s78, %s79
      %p91 = scmp.eq.s32.totalorder %s27, 1
      %p92 = por %p90, %p91
      %p94 = scmp.ne.s32.totalorder %s79, %s93
      %p95 = scmp.eq.s32.totalorder %s27, 0
      %p96 = por %p94, %p95
      %s98 = sadd.s32 %s97, 1
      %p101 = scmp.eq.s32.totalorder %s21, 1
      %p102 = scmp.ne.s32.totalorder %s97, %s99
      %p103 = scmp.eq.s32.totalorder %s21, 0
      %p104 = por %p102, %p103
      %p105 = scmp.ne.s32.totalorder %s97, %s99
      %p106 = scmp.eq.s32.totalorder %s26, 1
      %p107 = por %p105, %p106
      %p108 = scmp.ne.s32.totalorder %s99, %s100
      %p109 = scmp.eq.s32.totalorder %s26, 0
      %p110 = por %p108, %p109
      %p111 = scmp.ne.s32.totalorder %s99, %s100
      %p112 = scmp.eq.s32.totalorder %s27, 1
      %p113 = por %p111, %p112
      %p115 = scmp.ne.s32.totalorder %s100, %s114
      %p116 = scmp.eq.s32.totalorder %s27, 0
      %p117 = por %p115, %p116
      %s119 = sadd.s32 %s118, 1
      %p122 = scmp.eq.s32.totalorder %s21, 1
      %p123 = scmp.ne.s32.totalorder %s118, %s120
      %p124 = scmp.eq.s32.totalorder %s21, 0
      %p125 = por %p123, %p124
      %p126 = scmp.ne.s32.totalorder %s118, %s120
      %p127 = scmp.eq.s32.totalorder %s26, 1
      %p128 = por %p126, %p127
      %p129 = scmp.ne.s32.totalorder %s120, %s121
      %p130 = scmp.eq.s32.totalorder %s26, 0
      %p131 = por %p129, %p130
      %p132 = scmp.ne.s32.totalorder %s120, %s121
      %p133 = scmp.eq.s32.totalorder %s27, 1
      %p134 = por %p132, %p133
      %p136 = scmp.ne.s32.totalorder %s121, %s135
      %p137 = scmp.eq.s32.totalorder %s27, 0
      %p138 = por %p136, %p137
      %s140 = sadd.s32 %s139, 1
      %p143 = scmp.eq.s32.totalorder %s21, 1
      %p144 = scmp.ne.s32.totalorder %s139, %s141
      %p145 = scmp.eq.s32.totalorder %s21, 0
      %p146 = por %p144, %p145
      %p147 = scmp.ne.s32.totalorder %s139, %s141
      %p148 = scmp.eq.s32.totalorder %s26, 1
      %p149 = por %p147, %p148
      %p150 = scmp.ne.s32.totalorder %s141, %s142
      %p151 = scmp.eq.s32.totalorder %s26, 0
      %p152 = por %p150, %p151
      %p153 = scmp.ne.s32.totalorder %s141, %s142
      %p154 = scmp.eq.s32.totalorder %s27, 1
      %p155 = por %p153, %p154
      %p157 = scmp.ne.s32.totalorder %s142, %s156
      %p158 = scmp.eq.s32.totalorder %s27, 0
      %p159 = por %p157, %p158
      %s161 = sadd.s32 %s160, 1
      %p164 = scmp.eq.s32.totalorder %s21, 1
      %p165 = scmp.ne.s32.totalorder %s160, %s162
      %p166 = scmp.eq.s32.totalorder %s21, 0
      %p167 = por %p165, %p166
      %p168 = scmp.ne.s32.totalorder %s160, %s162
      %p169 = scmp.eq.s32.totalorder %s26, 1
      %p170 = por %p168, %p169
      %p171 = scmp.ne.s32.totalorder %s162, %s163
      %p172 = scmp.eq.s32.totalorder %s26, 0
      %p173 = por %p171, %p172
      %p174 = scmp.ne.s32.totalorder %s162, %s163
      %p175 = scmp.eq.s32.totalorder %s27, 1
      %p176 = por %p174, %p175
      %p178 = scmp.ne.s32.totalorder %s163, %s177
      %p179 = scmp.eq.s32.totalorder %s27, 0
      %p180 = por %p178, %p179
      %s182 = sadd.s32 %s181, 1
      %p185 = scmp.eq.s32.totalorder %s21, 1
      %p186 = scmp.ne.s32.totalorder %s181, %s183
      %p187 = scmp.eq.s32.totalorder %s21, 0
      %p188 = por %p186, %p187
      %p189 = scmp.ne.s32.totalorder %s181, %s183
      %p190 = scmp.eq.s32.totalorder %s26, 1
      %p191 = por %p189, %p190
      %p192 = scmp.ne.s32.totalorder %s183, %s184
      %p193 = scmp.eq.s32.totalorder %s26, 0
      %p194 = por %p192, %p193
      %p195 = scmp.ne.s32.totalorder %s183, %s184
      %p196 = scmp.eq.s32.totalorder %s27, 1
      %p197 = por %p195, %p196
      %p199 = scmp.ne.s32.totalorder %s184, %s198
      %p200 = scmp.eq.s32.totalorder %s27, 0
      %p201 = por %p199, %p200
      %s203 = sadd.s32 %s202, 1
      %p206 = scmp.eq.s32.totalorder %s21, 1
      %p207 = scmp.ne.s32.totalorder %s202, %s204
      %p208 = scmp.eq.s32.totalorder %s21, 0
      %p209 = por %p207, %p208
      %p210 = scmp.ne.s32.totalorder %s202, %s204
      %p211 = scmp.eq.s32.totalorder %s26, 1
      %p212 = por %p210, %p211
      %p213 = scmp.ne.s32.totalorder %s204, %s205
      %p214 = scmp.eq.s32.totalorder %s26, 0
      %p215 = por %p213, %p214
      %p216 = scmp.ne.s32.totalorder %s204, %s205
      %p217 = scmp.eq.s32.totalorder %s27, 1
      %p218 = por %p216, %p217
      %p220 = scmp.ne.s32.totalorder %s205, %s219
      %p221 = scmp.eq.s32.totalorder %s27, 0
      %p222 = por %p220, %p221
      %s223 = ssub.s32 %s21, %s28
      %p224 = scmp.eq.s32.totalorder %s223, 0
      %s226 = sadd.s32 %s225, 1
      %s227 = scalar_select %p224, %s225, %s226
      %p230 = pneg %p224
      %p231 = scmp.eq.s32.totalorder %s21, 1
      %p232 = por %p230, %p231
      %p233 = scmp.ne.s32.totalorder %s225, %s228
      %p234 = scmp.eq.s32.totalorder %s21, 0
      %p235 = por %p233, %p234
      %p236 = scmp.ne.s32.totalorder %s225, %s228
      %p237 = scmp.eq.s32.totalorder %s26, 1
      %p238 = por %p236, %p237
      %p239 = scmp.ne.s32.totalorder %s228, %s229
      %p240 = scmp.eq.s32.totalorder %s26, 0
      %p241 = por %p239, %p240
      %p242 = scmp.ne.s32.totalorder %s228, %s229
      %p243 = scmp.eq.s32.totalorder %s27, 1
      %p244 = por %p242, %p243
      %p246 = scmp.ne.s32.totalorder %s229, %s245
      %p247 = scmp.eq.s32.totalorder %s27, 0
      %p248 = por %p246, %p247
      %p249 = scmp.le.s32.totalorder 1, %s21
      %p250 = scmp.lt.s32.totalorder %s21, 3
      %p251 = pnand %p249, %p250
      %p252 = pneg %p251
      // Predicated region
      $region9: #{tpu_custom_call.1} parent=5 // pred_check
        _
      $region10: #{tpu_custom_call.1} parent=5 // pred_check_branch
        %254 = sbr.rel (%p251) target = $region12
      $region11: #{tpu_custom_call.1} parent=5 // pred_region
        %s255 = ssub.s32 %s21, 1
        // Predicated region
        $region13: #{tpu_custom_call.1} parent=11 // pred_check
          %p256 = pneg %p68
        $region14: #{tpu_custom_call.1} parent=11 // pred_check_branch
          %258 = sbr.rel (%p256) target = $region16
        $region15: #{tpu_custom_call.1} parent=11 // pred_region
          _
        $region16: #{tpu_custom_call.1} parent=11 // pred_fallthru
          _
        // Predicated region
        $region17: #{tpu_custom_call.1} parent=11 // pred_check
          %p259 = pneg %p89
        $region18: #{tpu_custom_call.1} parent=11 // pred_check_branch
          %261 = sbr.rel (%p259) target = $region20
        $region19: #{tpu_custom_call.1} parent=11 // pred_region
          _
        $region20: #{tpu_custom_call.1} parent=11 // pred_fallthru
          _
        // Predicated region
        $region21: #{tpu_custom_call.1} parent=11 // pred_check
          %p262 = pneg %p110
        $region22: #{tpu_custom_call.1} parent=11 // pred_check_branch
          %264 = sbr.rel (%p262) target = $region24
        $region23: #{tpu_custom_call.1} parent=11 // pred_region
          _
        $region24: #{tpu_custom_call.1} parent=11 // pred_fallthru
          _
        // Predicated region
        $region25: #{tpu_custom_call.1} parent=11 // pred_check
          %p265 = pneg %p131
        $region26: #{tpu_custom_call.1} parent=11 // pred_check_branch
          %267 = sbr.rel (%p265) target = $region28
        $region27: #{tpu_custom_call.1} parent=11 // pred_region
          _
        $region28: #{tpu_custom_call.1} parent=11 // pred_fallthru
          _
        // Predicated region
        $region29: #{tpu_custom_call.1} parent=11 // pred_check
          %p268 = pneg %p152
        $region30: #{tpu_custom_call.1} parent=11 // pred_check_branch
          %270 = sbr.rel (%p268) target = $region32
        $region31: #{tpu_custom_call.1} parent=11 // pred_region
          _
        $region32: #{tpu_custom_call.1} parent=11 // pred_fallthru
          _
        // Predicated region
        $region33: #{tpu_custom_call.1} parent=11 // pred_check
          %p271 = pneg %p173
        $region34: #{tpu_custom_call.1} parent=11 // pred_check_branch
          %273 = sbr.rel (%p271) target = $region36
        $region35: #{tpu_custom_call.1} parent=11 // pred_region
          _
        $region36: #{tpu_custom_call.1} parent=11 // pred_fallthru
          _
        // Predicated region
        $region37: #{tpu_custom_call.1} parent=11 // pred_check
          %p274 = pneg %p194
        $region38: #{tpu_custom_call.1} parent=11 // pred_check_branch
          %276 = sbr.rel (%p274) target = $region40
        $region39: #{tpu_custom_call.1} parent=11 // pred_region
          _
        $region40: #{tpu_custom_call.1} parent=11 // pred_fallthru
          _
        // Predicated region
        $region41: #{tpu_custom_call.1} parent=11 // pred_check
          %p277 = pneg %p215
        $region42: #{tpu_custom_call.1} parent=11 // pred_check_branch
          %279 = sbr.rel (%p277) target = $region44
        $region43: #{tpu_custom_call.1} parent=11 // pred_region
          _
        $region44: #{tpu_custom_call.1} parent=11 // pred_fallthru
          _
      $region12: #{tpu_custom_call.1} parent=5 // pred_fallthru
        _
      %p280 = scmp.lt.s32.totalorder %s21, 2
      // Predicated region
      $region45: #{tpu_custom_call.1} parent=5 // pred_check
        %p281 = pneg %p280
      $region46: #{tpu_custom_call.1} parent=5 // pred_check_branch
        %283 = sbr.rel (%p281) target = $region48
      $region47: #{tpu_custom_call.1} parent=5 // pred_region
        // Predicated region
        $region49: #{tpu_custom_call.1} parent=47 // pred_check
          %p284 = pneg %p41
        $region50: #{tpu_custom_call.1} parent=47 // pred_check_branch
          %286 = sbr.rel (%p284) target = $region52
        $region51: #{tpu_custom_call.1} parent=47 // pred_region
          %s287 = sand.u32 %s31, 1
          %s288 = scalar_lea.sflag [#allocation5], %s287
          %s289 = sand.u32 %s31, 1
          %s290 = smul.addr %s289, 256
          %s291 = scalar_lea.vmem [#allocation4], %s290
          %293 = vsyncadd %s288, 0
          %s294 = smul.addr %s21, 32
          %s295 = smul.addr %s294, 8
          %s296 = scalar_lea.hbm %s0, %s295
          %s297 = sshll.u32 %s296, 4
          %s298 = int_to_ptr.hbm [resolvable:$true] %s297
          %s299 = sshll.u32 %s291, 4
          %s300 = int_to_ptr.vmem [resolvable:$true] %s299
          %305 = dma.hbm_to_vmem [thread:$0]  %s298, 4096, %s300, %s288, 128, 128, 8
        $region52: #{tpu_custom_call.1} parent=47 // pred_fallthru
          _
      $region48: #{tpu_custom_call.1} parent=5 // pred_fallthru
        _
      %p306 = scmp.le.s32.totalorder 1, %s21
      %p307 = scmp.lt.s32.totalorder %s21, 3
      %p308 = pnand %p306, %p307
      %p309 = pneg %p308
      // Predicated region
      $region53: #{tpu_custom_call.1} parent=5 // pred_check
        _
      $region54: #{tpu_custom_call.1} parent=5 // pred_check_branch
        %311 = sbr.rel (%p308) target = $region56
      $region55: #{tpu_custom_call.1} parent=5 // pred_region
        %s312 = ssub.s32 %s21, 1
        %s313 = sand.u32 %s34, 1
        %s314 = scalar_lea.sflag [#allocation5], %s313
        %s315 = sand.u32 %s34, 1
        %s316 = smul.addr %s315, 256
        %s317 = scalar_lea.vmem [#allocation4], %s316
        // Predicated region
        $region57: #{tpu_custom_call.1} parent=55 // pred_check
          %p318 = pneg %p47
        $region58: #{tpu_custom_call.1} parent=55 // pred_check_branch
          %320 = sbr.rel (%p318) target = $region60
        $region59: #{tpu_custom_call.1} parent=55 // pred_region
          %322 = dma.done %s314, 4096
        $region60: #{tpu_custom_call.1} parent=55 // pred_fallthru
          _
        %s323 = sand.u32 %s34, 1
        %s324 = scalar_lea.sflag [#allocation5], %s323
        %s325 = sand.u32 %s34, 1
        %s326 = smul.addr %s325, 256
        %s327 = scalar_lea.vmem [#allocation4], %s326
        %p328 = pneg %p47
        %p329 = pneg %p44
        %p330 = pneg %p68
        %p331 = pneg %p65
        %p332 = pneg %p89
        %p333 = pneg %p86
        %p334 = pneg %p110
        %p335 = pneg %p107
        %p336 = pneg %p131
        %p337 = pneg %p128
        %p338 = pneg %p152
        %p339 = pneg %p149
        %p340 = pneg %p173
        %p341 = pneg %p170
        %p342 = pneg %p194
        %p343 = pneg %p191
        %p344 = pneg %p215
        %p345 = pneg %p212
        %p346 = pneg %p241
        %p347 = pneg %p238
        %s348 = sand.u32 %s228, 1
        %s349 = scalar_lea.sflag [#allocation6], %s348
        %s350 = sand.u32 %s228, 1
        %s351 = smul.addr %s350, 256
        %s352 = scalar_lea.vmem [#allocation7], %s351
        %v353 = vld [vmem:[%s317] sm:$0xff]
        %v354 = vld [vmem:[%s317 + $0x8] sm:$0xff]
        %v355 = vld [vmem:[%s317 + $0x10] sm:$0xff]
        %v356 = vld [vmem:[%s317 + $0x18] sm:$0xff]
        %v357 = vld [vmem:[%s317 + $0x20] sm:$0xff]
        %v358 = vld [vmem:[%s317 + $0x28] sm:$0xff]
        %v359 = vld [vmem:[%s317 + $0x30] sm:$0xff]
        %v360 = vld [vmem:[%s317 + $0x38] sm:$0xff]
        %v361 = vld [vmem:[%s317 + $0x40] sm:$0xff]
        %v362 = vld [vmem:[%s317 + $0x48] sm:$0xff]
        %v363 = vld [vmem:[%s317 + $0x50] sm:$0xff]
        %v364 = vld [vmem:[%s317 + $0x58] sm:$0xff]
        %v365 = vld [vmem:[%s317 + $0x60] sm:$0xff]
        %v366 = vld [vmem:[%s317 + $0x68] sm:$0xff]
        %v367 = vld [vmem:[%s317 + $0x70] sm:$0xff]
        %v368 = vld [vmem:[%s317 + $0x78] sm:$0xff]
        %v369 = vld [vmem:[%s317 + $0x80] sm:$0xff]
        %v370 = vld [vmem:[%s317 + $0x88] sm:$0xff]
        %v371 = vld [vmem:[%s317 + $0x90] sm:$0xff]
        %v372 = vld [vmem:[%s317 + $0x98] sm:$0xff]
        %v373 = vld [vmem:[%s317 + $0xa0] sm:$0xff]
        %v374 = vld [vmem:[%s317 + $0xa8] sm:$0xff]
        %v375 = vld [vmem:[%s317 + $0xb0] sm:$0xff]
        %v376 = vld [vmem:[%s317 + $0xb8] sm:$0xff]
        %v377 = vld [vmem:[%s317 + $0xc0] sm:$0xff]
        %v378 = vld [vmem:[%s317 + $0xc8] sm:$0xff]
        %v379 = vld [vmem:[%s317 + $0xd0] sm:$0xff]
        %v380 = vld [vmem:[%s317 + $0xd8] sm:$0xff]
        %v381 = vld [vmem:[%s317 + $0xe0] sm:$0xff]
        %v382 = vld [vmem:[%s317 + $0xe8] sm:$0xff]
        %v383 = vld [vmem:[%s317 + $0xf0] sm:$0xff]
        %v384 = vld [vmem:[%s317 + $0xf8] sm:$0xff]
        %v385 = vadd.f32 %v353, %v354
        %v386 = vadd.f32 %v385, %v355
        %v387 = vadd.f32 %v386, %v356
        %v388 = vadd.f32 %v387, %v357
        %v389 = vadd.f32 %v388, %v358
        %v390 = vadd.f32 %v389, %v359
        %v391 = vadd.f32 %v390, %v360
        %v392 = vadd.f32 %v391, %v361
        %v393 = vadd.f32 %v392, %v362
        %v394 = vadd.f32 %v393, %v363
        %v395 = vadd.f32 %v394, %v364
        %v396 = vadd.f32 %v395, %v365
        %v397 = vadd.f32 %v396, %v366
        %v398 = vadd.f32 %v397, %v367
        %v399 = vadd.f32 %v398, %v368
        %v400 = vadd.f32 %v399, %v369
        %v401 = vadd.f32 %v400, %v370
        %v402 = vadd.f32 %v401, %v371
        %v403 = vadd.f32 %v402, %v372
        %v404 = vadd.f32 %v403, %v373
        %v405 = vadd.f32 %v404, %v374
        %v406 = vadd.f32 %v405, %v375
        %v407 = vadd.f32 %v406, %v376
        %v408 = vadd.f32 %v407, %v377
        %v409 = vadd.f32 %v408, %v378
        %v410 = vadd.f32 %v409, %v379
        %v411 = vadd.f32 %v410, %v380
        %v412 = vadd.f32 %v411, %v381
        %v413 = vadd.f32 %v412, %v382
        %v414 = vadd.f32 %v413, %v383
        %v415 = vadd.f32 %v414, %v384
        %v416 = vrot.slane %v415, 4
        %v417 = vadd.f32 %v415, %v416
        %v418 = vrot.slane %v417, 2
        %v419 = vadd.f32 %v417, %v418
        %v420 = vrot.slane %v419, 1
        %v421 = vadd.f32 %v419, %v420
        %v422 = vrcp.pop 256.0
        %v423 = vmul.f32 256.0, %v422
        %v424 = vsub.f32 1.0, %v423
        %v425 = vmul.f32 %v422, %v424
        %v426 = vadd.f32 %v422, %v425
        %vm427 = vweird.f32 %v422
        %v428 = vsel %vm427, %v422, %v426
        %v429 = vmul.f32 %v421, %v428
        %v430 = vld [vmem:[%s5] sm:$0xff]
        %v431 = vld [vmem:[%s5 + $0x8] sm:$0xff]
        %v432 = vld [vmem:[%s5 + $0x10] sm:$0xff]
        %v433 = vld [vmem:[%s5 + $0x18] sm:$0xff]
        %v434 = vld [vmem:[%s5 + $0x20] sm:$0xff]
        %v435 = vld [vmem:[%s5 + $0x28] sm:$0xff]
        %v436 = vld [vmem:[%s5 + $0x30] sm:$0xff]
        %v437 = vld [vmem:[%s5 + $0x38] sm:$0xff]
        %v438 = vld [vmem:[%s5 + $0x40] sm:$0xff]
        %v439 = vld [vmem:[%s5 + $0x48] sm:$0xff]
        %v440 = vld [vmem:[%s5 + $0x50] sm:$0xff]
        %v441 = vld [vmem:[%s5 + $0x58] sm:$0xff]
        %v442 = vld [vmem:[%s5 + $0x60] sm:$0xff]
        %v443 = vld [vmem:[%s5 + $0x68] sm:$0xff]
        %v444 = vld [vmem:[%s5 + $0x70] sm:$0xff]
        %v445 = vld [vmem:[%s5 + $0x78] sm:$0xff]
        %v446 = vld [vmem:[%s6] sm:$0x1]
        %447 = vmatpush.msra.mxu0 %v445
        %448 = vmatpush.msra.mxu0 %v444
        %449 = vmatpush.msra.mxu0 %v443
        %450 = vmatpush.msra.mxu0 %v442
        %451 = vmatpush.msra.mxu0 %v441
        %452 = vmatpush.msra.mxu0 %v440
        %453 = vmatpush.msra.mxu0 %v439
        %454 = vmatpush.msra.mxu0 %v438
        %455 = vmatpush.msra.mxu0 %v437
        %456 = vmatpush.msra.mxu0 %v436
        %457 = vmatpush.msra.mxu0 %v435
        %458 = vmatpush.msra.mxu0 %v434
        %459 = vmatpush.msra.mxu0 %v433
        %460 = vmatpush.msra.mxu0 %v432
        %461 = vmatpush.msra.mxu0 %v431
        %462 = vmatpush.msra.mxu0 %v430
        %463 = vmatmul.f32.gmra.mxu0 %v429
        %v464 = vpop.f32.mrf.mxu0
        %v465 = vadd.f32 %v446, %v464
        %466 = vdwg.mxu0
        %v467 = vmax.f32 %v465, 0.0
        %v468 = vld [vmem:[%s7] sm:$0xff]
        %v469 = vld [vmem:[%s7 + $0x8] sm:$0xff]
        %v470 = vld [vmem:[%s8] sm:$0x1]
        %vm471 = vcmask 130048
        %v473 = vsel %vm471, %v467, 0
        %475 = vmatpush.msra.mxu0 0.0
        %476 = vmatpush.msra.mxu0 0.0
        %477 = vmatpush.msra.mxu0 0.0
        %478 = vmatpush.msra.mxu0 0.0
        %479 = vmatpush.msra.mxu0 0.0
        %480 = vmatpush.msra.mxu0 0.0
        %481 = vmatpush.msra.mxu0 0.0
        %482 = vmatpush.msra.mxu0 0.0
        %483 = vmatpush.msra.mxu0 0.0
        %484 = vmatpush.msra.mxu0 0.0
        %485 = vmatpush.msra.mxu0 0.0
        %486 = vmatpush.msra.mxu0 0.0
        %487 = vmatpush.msra.mxu0 0.0
        %488 = vmatpush.msra.mxu0 0.0
        %489 = vmatpush.msra.mxu0 %v469
        %490 = vmatpush.msra.mxu0 %v468
        %491 = vmatmul.f32.gmra.mxu0 %v473
        %v492 = vpop.f32.mrf.mxu0
        %v493 = vadd.f32 %v470, %v492
        %494 = vdwg.mxu0
        %v495 = vxor.u32 %v493, 2147483648
        %v496 = vmul.f32 %v495, 1.442695
        %v497 = vpow.pop %v496
        %v498 = vadd.f32 %v497, 1.0
        %v499 = vrcp.pop %v498
        %v500 = vmul.f32 %v498, %v499
        %v501 = vsub.f32 1.0, %v500
        %v502 = vmul.f32 %v499, %v501
        %v503 = vadd.f32 %v499, %v502
        %vm504 = vweird.f32 %v498
        %vm505 = vweird.f32 %v499
        %vm506 = vmor %vm504, %vm505
        %v507 = vsel %vm506, %v499, %v503
        %v508 = vand.u32 2147483647, %v498
        %vm509 = vcmp.eq.f32.partialorder %v508, 8.507059e+37
        %v510 = vand.u32 %v498, 2147483648
        %v511 = vor.u32 1.1754944e-38, %v510
        %v512 = vsel %vm509, %v511, %v507
        %v513 = vmul.f32 1.0, %v512
        %v514 = vperm.slane %v513, 0
        %v515 = vmul.f32 %v353, %v514
        %v516 = vmul.f32 %v354, %v514
        %v517 = vmul.f32 %v355, %v514
        %v518 = vmul.f32 %v356, %v514
        %v519 = vmul.f32 %v357, %v514
        %v520 = vmul.f32 %v358, %v514
        %v521 = vmul.f32 %v359, %v514
        %v522 = vmul.f32 %v360, %v514
        %v523 = vmul.f32 %v361, %v514
        %v524 = vmul.f32 %v362, %v514
        %v525 = vmul.f32 %v363, %v514
        %v526 = vmul.f32 %v364, %v514
        %v527 = vmul.f32 %v365, %v514
        %v528 = vmul.f32 %v366, %v514
        %v529 = vmul.f32 %v367, %v514
        %v530 = vmul.f32 %v368, %v514
        %v531 = vmul.f32 %v369, %v514
        %v532 = vmul.f32 %v370, %v514
        %v533 = vmul.f32 %v371, %v514
        %v534 = vmul.f32 %v372, %v514
        %v535 = vmul.f32 %v373, %v514
        %v536 = vmul.f32 %v374, %v514
        %v537 = vmul.f32 %v375, %v514
        %v538 = vmul.f32 %v376, %v514
        %v539 = vmul.f32 %v377, %v514
        %v540 = vmul.f32 %v378, %v514
        %v541 = vmul.f32 %v379, %v514
        %v542 = vmul.f32 %v380, %v514
        %v543 = vmul.f32 %v381, %v514
        %v544 = vmul.f32 %v382, %v514
        %v545 = vmul.f32 %v383, %v514
        %v546 = vmul.f32 %v384, %v514
        %v547 = vld [vmem:[%s1] sm:$0xff]
        %v548 = vld [vmem:[%s1 + $0x8] sm:$0x7]
        %549 = vst [vmem:[#allocation2] sm:$0xff] 0.0
        %550 = vst [vmem:[#allocation2 + $0x8] sm:$0xff] 0.0
        %551 = vst [vmem:[#allocation2 + $0x10] sm:$0xff] 0.0
        %552 = vst [vmem:[#allocation2 + $0x18] sm:$0xff] 0.0
        %s553 = scalar_lea.vmem [#allocation2], 544
        %554 = vst [vmem:[%s553] sm:$0xff] 0.0
        %555 = vst [vmem:[%s553 + $0x8] sm:$0xff] 0.0
        %556 = vst [vmem:[%s553 + $0x10] sm:$0xff] 0.0
        %557 = vst [vmem:[%s553 + $0x18] sm:$0xff] 0.0
        %s558 = scalar_lea.vmem [#allocation2], 32
        %559 = vst [vmem:[%s558] sm:$0xff] 0.0
        %560 = vst [vmem:[%s558 + $0x20] sm:$0xff] 0.0
        %561 = vst [vmem:[%s558 + $0x40] sm:$0xff] 0.0
        %562 = vst [vmem:[%s558 + $0x60] sm:$0xff] 0.0
        %563 = vst [vmem:[%s558 + $0x80] sm:$0xff] 0.0
        %564 = vst [vmem:[%s558 + $0xa0] sm:$0xff] 0.0
        %565 = vst [vmem:[%s558 + $0xc0] sm:$0xff] 0.0
        %566 = vst [vmem:[%s558 + $0xe0] sm:$0xff] 0.0
        %567 = vst [vmem:[%s558 + $0x100] sm:$0xff] 0.0
        %568 = vst [vmem:[%s558 + $0x120] sm:$0xff] 0.0
        %569 = vst [vmem:[%s558 + $0x140] sm:$0xff] 0.0
        %570 = vst [vmem:[%s558 + $0x160] sm:$0xff] 0.0
        %571 = vst [vmem:[%s558 + $0x180] sm:$0xff] 0.0
        %572 = vst [vmem:[%s558 + $0x1a0] sm:$0xff] 0.0
        %573 = vst [vmem:[%s558 + $0x1c0] sm:$0xff] 0.0
        %574 = vst [vmem:[%s558 + $0x1e0] sm:$0xff] 0.0
        %575 = vst [vmem:[%s558 + $0x18] sm:$0xff] 0.0
        %576 = vst [vmem:[%s558 + $0x38] sm:$0xff] 0.0
        %577 = vst [vmem:[%s558 + $0x58] sm:$0xff] 0.0
        %578 = vst [vmem:[%s558 + $0x78] sm:$0xff] 0.0
        %579 = vst [vmem:[%s558 + $0x98] sm:$0xff] 0.0
        %580 = vst [vmem:[%s558 + $0xb8] sm:$0xff] 0.0
        %581 = vst [vmem:[%s558 + $0xd8] sm:$0xff] 0.0
        %582 = vst [vmem:[%s558 + $0xf8] sm:$0xff] 0.0
        %583 = vst [vmem:[%s558 + $0x118] sm:$0xff] 0.0
        %584 = vst [vmem:[%s558 + $0x138] sm:$0xff] 0.0
        %585 = vst [vmem:[%s558 + $0x158] sm:$0xff] 0.0
        %586 = vst [vmem:[%s558 + $0x178] sm:$0xff] 0.0
        %587 = vst [vmem:[%s558 + $0x198] sm:$0xff] 0.0
        %588 = vst [vmem:[%s558 + $0x1b8] sm:$0xff] 0.0
        %589 = vst [vmem:[%s558 + $0x1d8] sm:$0xff] 0.0
        %590 = vst [vmem:[%s558 + $0x1f8] sm:$0xff] 0.0
        %591 = vst [vmem:[%s558 + $0x8] sm:$0xff] %v515
        %592 = vst [vmem:[%s558 + $0x10] sm:$0xff] %v516
        %593 = vst [vmem:[%s558 + $0x28] sm:$0xff] %v517
        %594 = vst [vmem:[%s558 + $0x30] sm:$0xff] %v518
        %595 = vst [vmem:[%s558 + $0x48] sm:$0xff] %v519
        %596 = vst [vmem:[%s558 + $0x50] sm:$0xff] %v520
        %597 = vst [vmem:[%s558 + $0x68] sm:$0xff] %v521
        %598 = vst [vmem:[%s558 + $0x70] sm:$0xff] %v522
        %599 = vst [vmem:[%s558 + $0x88] sm:$0xff] %v523
        %600 = vst [vmem:[%s558 + $0x90] sm:$0xff] %v524
        %601 = vst [vmem:[%s558 + $0xa8] sm:$0xff] %v525
        %602 = vst [vmem:[%s558 + $0xb0] sm:$0xff] %v526
        %603 = vst [vmem:[%s558 + $0xc8] sm:$0xff] %v527
        %604 = vst [vmem:[%s558 + $0xd0] sm:$0xff] %v528
        %605 = vst [vmem:[%s558 + $0xe8] sm:$0xff] %v529
        %606 = vst [vmem:[%s558 + $0xf0] sm:$0xff] %v530
        %607 = vst [vmem:[%s558 + $0x108] sm:$0xff] %v531
        %608 = vst [vmem:[%s558 + $0x110] sm:$0xff] %v532
        %609 = vst [vmem:[%s558 + $0x128] sm:$0xff] %v533
        %610 = vst [vmem:[%s558 + $0x130] sm:$0xff] %v534
        %611 = vst [vmem:[%s558 + $0x148] sm:$0xff] %v535
        %612 = vst [vmem:[%s558 + $0x150] sm:$0xff] %v536
        %613 = vst [vmem:[%s558 + $0x168] sm:$0xff] %v537
        %614 = vst [vmem:[%s558 + $0x170] sm:$0xff] %v538
        %615 = vst [vmem:[%s558 + $0x188] sm:$0xff] %v539
        %616 = vst [vmem:[%s558 + $0x190] sm:$0xff] %v540
        %617 = vst [vmem:[%s558 + $0x1a8] sm:$0xff] %v541
        %618 = vst [vmem:[%s558 + $0x1b0] sm:$0xff] %v542
        %619 = vst [vmem:[%s558 + $0x1c8] sm:$0xff] %v543
        %620 = vst [vmem:[%s558 + $0x1d0] sm:$0xff] %v544
        %621 = vst [vmem:[%s558 + $0x1e8] sm:$0xff] %v545
        %622 = vst [vmem:[%s558 + $0x1f0] sm:$0xff] %v546
        %v623 = vld [vmem:[#allocation2 + $0x7] sm:$0xff]
        %v624 = vld [vmem:[#allocation2 + $0xf] sm:$0xff]
        %v625 = vld [vmem:[#allocation2 + $0x27] sm:$0xff]
        %v626 = vld [vmem:[#allocation2 + $0x2f] sm:$0xff]
        %v627 = vld [vmem:[#allocation2 + $0x47] sm:$0xff]
        %v628 = vld [vmem:[#allocation2 + $0x4f] sm:$0xff]
        %v629 = vld [vmem:[#allocation2 + $0x67] sm:$0xff]
        %v630 = vld [vmem:[#allocation2 + $0x6f] sm:$0xff]
        %v631 = vld [vmem:[#allocation2 + $0x87] sm:$0xff]
        %v632 = vld [vmem:[#allocation2 + $0x8f] sm:$0xff]
        %v633 = vld [vmem:[#allocation2 + $0xa7] sm:$0xff]
        %v634 = vld [vmem:[#allocation2 + $0xaf] sm:$0xff]
        %v635 = vld [vmem:[#allocation2 + $0xc7] sm:$0xff]
        %v636 = vld [vmem:[#allocation2 + $0xcf] sm:$0xff]
        %v637 = vld [vmem:[#allocation2 + $0xe7] sm:$0xff]
        %v638 = vld [vmem:[#allocation2 + $0xef] sm:$0xff]
        %v639 = vld [vmem:[#allocation2 + $0x107] sm:$0xff]
        %v640 = vld [vmem:[#allocation2 + $0x10f] sm:$0xff]
        %v641 = vld [vmem:[#allocation2 + $0x127] sm:$0xff]
        %v642 = vld [vmem:[#allocation2 + $0x12f] sm:$0xff]
        %v643 = vld [vmem:[#allocation2 + $0x147] sm:$0xff]
        %v644 = vld [vmem:[#allocation2 + $0x14f] sm:$0xff]
        %v645 = vld [vmem:[#allocation2 + $0x167] sm:$0xff]
        %v646 = vld [vmem:[#allocation2 + $0x16f] sm:$0xff]
        %v647 = vld [vmem:[#allocation2 + $0x187] sm:$0xff]
        %v648 = vld [vmem:[#allocation2 + $0x18f] sm:$0xff]
        %v649 = vld [vmem:[#allocation2 + $0x1a7] sm:$0xff]
        %v650 = vld [vmem:[#allocation2 + $0x1af] sm:$0xff]
        %v651 = vld [vmem:[#allocation2 + $0x1c7] sm:$0xff]
        %v652 = vld [vmem:[#allocation2 + $0x1cf] sm:$0xff]
        %v653 = vld [vmem:[#allocation2 + $0x1e7] sm:$0xff]
        %v654 = vld [vmem:[#allocation2 + $0x1ef] sm:$0xff]
        %v655 = vld [vmem:[#allocation2 + $0x207] sm:$0xff]
        %v656 = vld [vmem:[#allocation2 + $0x20f] sm:$0xff]
        %v657 = vld [vmem:[#allocation2 + $0x227] sm:$0xff]
        %v658 = vld [vmem:[#allocation2 + $0x22f] sm:$0xff]
        %v659 = vld [vmem:[#allocation2 + $0x8] sm:$0xff]
        %v660 = vld [vmem:[#allocation2 + $0x10] sm:$0xff]
        %v661 = vld [vmem:[#allocation2 + $0x28] sm:$0xff]
        %v662 = vld [vmem:[#allocation2 + $0x30] sm:$0xff]
        %v663 = vld [vmem:[#allocation2 + $0x48] sm:$0xff]
        %v664 = vld [vmem:[#allocation2 + $0x50] sm:$0xff]
        %v665 = vld [vmem:[#allocation2 + $0x68] sm:$0xff]
        %v666 = vld [vmem:[#allocation2 + $0x70] sm:$0xff]
        %v667 = vld [vmem:[#allocation2 + $0x88] sm:$0xff]
        %v668 = vld [vmem:[#allocation2 + $0x90] sm:$0xff]
        %v669 = vld [vmem:[#allocation2 + $0xa8] sm:$0xff]
        %v670 = vld [vmem:[#allocation2 + $0xb0] sm:$0xff]
        %v671 = vld [vmem:[#allocation2 + $0xc8] sm:$0xff]
        %v672 = vld [vmem:[#allocation2 + $0xd0] sm:$0xff]
        %v673 = vld [vmem:[#allocation2 + $0xe8] sm:$0xff]
        %v674 = vld [vmem:[#allocation2 + $0xf0] sm:$0xff]
        %v675 = vld [vmem:[#allocation2 + $0x108] sm:$0xff]
        %v676 = vld [vmem:[#allocation2 + $0x110] sm:$0xff]
        %v677 = vld [vmem:[#allocation2 + $0x128] sm:$0xff]
        %v678 = vld [vmem:[#allocation2 + $0x130] sm:$0xff]
        %v679 = vld [vmem:[#allocation2 + $0x148] sm:$0xff]
        %v680 = vld [vmem:[#allocation2 + $0x150] sm:$0xff]
        %v681 = vld [vmem:[#allocation2 + $0x168] sm:$0xff]
        %v682 = vld [vmem:[#allocation2 + $0x170] sm:$0xff]
        %v683 = vld [vmem:[#allocation2 + $0x188] sm:$0xff]
        %v684 = vld [vmem:[#allocation2 + $0x190] sm:$0xff]
        %v685 = vld [vmem:[#allocation2 + $0x1a8] sm:$0xff]
        %v686 = vld [vmem:[#allocation2 + $0x1b0] sm:$0xff]
        %v687 = vld [vmem:[#allocation2 + $0x1c8] sm:$0xff]
        %v688 = vld [vmem:[#allocation2 + $0x1d0] sm:$0xff]
        %v689 = vld [vmem:[#allocation2 + $0x1e8] sm:$0xff]
        %v690 = vld [vmem:[#allocation2 + $0x1f0] sm:$0xff]
        %v691 = vld [vmem:[#allocation2 + $0x208] sm:$0xff]
        %v692 = vld [vmem:[#allocation2 + $0x210] sm:$0xff]
        %v693 = vld [vmem:[#allocation2 + $0x228] sm:$0xff]
        %v694 = vld [vmem:[#allocation2 + $0x230] sm:$0xff]
        %v695 = vld [vmem:[#allocation2 + $0x9] sm:$0xff]
        %v696 = vld [vmem:[#allocation2 + $0x11] sm:$0xff]
        %v697 = vld [vmem:[#allocation2 + $0x29] sm:$0xff]
        %v698 = vld [vmem:[#allocation2 + $0x31] sm:$0xff]
        %v699 = vld [vmem:[#allocation2 + $0x49] sm:$0xff]
        %v700 = vld [vmem:[#allocation2 + $0x51] sm:$0xff]
        %v701 = vld [vmem:[#allocation2 + $0x69] sm:$0xff]
        %v702 = vld [vmem:[#allocation2 + $0x71] sm:$0xff]
        %v703 = vld [vmem:[#allocation2 + $0x89] sm:$0xff]
        %v704 = vld [vmem:[#allocation2 + $0x91] sm:$0xff]
        %v705 = vld [vmem:[#allocation2 + $0xa9] sm:$0xff]
        %v706 = vld [vmem:[#allocation2 + $0xb1] sm:$0xff]
        %v707 = vld [vmem:[#allocation2 + $0xc9] sm:$0xff]
        %v708 = vld [vmem:[#allocation2 + $0xd1] sm:$0xff]
        %v709 = vld [vmem:[#allocation2 + $0xe9] sm:$0xff]
        %v710 = vld [vmem:[#allocation2 + $0xf1] sm:$0xff]
        %v711 = vld [vmem:[#allocation2 + $0x109] sm:$0xff]
        %v712 = vld [vmem:[#allocation2 + $0x111] sm:$0xff]
        %v713 = vld [vmem:[#allocation2 + $0x129] sm:$0xff]
        %v714 = vld [vmem:[#allocation2 + $0x131] sm:$0xff]
        %v715 = vld [vmem:[#allocation2 + $0x149] sm:$0xff]
        %v716 = vld [vmem:[#allocation2 + $0x151] sm:$0xff]
        %v717 = vld [vmem:[#allocation2 + $0x169] sm:$0xff]
        %v718 = vld [vmem:[#allocation2 + $0x171] sm:$0xff]
        %v719 = vld [vmem:[#allocation2 + $0x189] sm:$0xff]
        %v720 = vld [vmem:[#allocation2 + $0x191] sm:$0xff]
        %v721 = vld [vmem:[#allocation2 + $0x1a9] sm:$0xff]
        %v722 = vld [vmem:[#allocation2 + $0x1b1] sm:$0xff]
        %v723 = vld [vmem:[#allocation2 + $0x1c9] sm:$0xff]
        %v724 = vld [vmem:[#allocation2 + $0x1d1] sm:$0xff]
        %v725 = vld [vmem:[#allocation2 + $0x1e9] sm:$0xff]
        %v726 = vld [vmem:[#allocation2 + $0x1f1] sm:$0xff]
        %v727 = vld [vmem:[#allocation2 + $0x209] sm:$0xff]
        %v728 = vld [vmem:[#allocation2 + $0x211] sm:$0xff]
        %v729 = vld [vmem:[#allocation2 + $0x229] sm:$0xff]
        %v730 = vld [vmem:[#allocation2 + $0x231] sm:$0xff]
        %v731 = vperm.slane %v547, 4
        %v732 = vmul.f32 %v515, %v731
        %v733 = vmul.f32 %v516, %v731
        %v734 = vmul.f32 %v517, %v731
        %v735 = vmul.f32 %v518, %v731
        %v736 = vmul.f32 %v519, %v731
        %v737 = vmul.f32 %v520, %v731
        %v738 = vmul.f32 %v521, %v731
        %v739 = vmul.f32 %v522, %v731
        %v740 = vmul.f32 %v523, %v731
        %v741 = vmul.f32 %v524, %v731
        %v742 = vmul.f32 %v525, %v731
        %v743 = vmul.f32 %v526, %v731
        %v744 = vmul.f32 %v527, %v731
        %v745 = vmul.f32 %v528, %v731
        %v746 = vmul.f32 %v529, %v731
        %v747 = vmul.f32 %v530, %v731
        %v748 = vmul.f32 %v531, %v731
        %v749 = vmul.f32 %v532, %v731
        %v750 = vmul.f32 %v533, %v731
        %v751 = vmul.f32 %v534, %v731
        %v752 = vmul.f32 %v535, %v731
        %v753 = vmul.f32 %v536, %v731
        %v754 = vmul.f32 %v537, %v731
        %v755 = vmul.f32 %v538, %v731
        %v756 = vmul.f32 %v539, %v731
        %v757 = vmul.f32 %v540, %v731
        %v758 = vmul.f32 %v541, %v731
        %v759 = vmul.f32 %v542, %v731
        %v760 = vmul.f32 %v543, %v731
        %v761 = vmul.f32 %v544, %v731
        %v762 = vmul.f32 %v545, %v731
        %v763 = vmul.f32 %v546, %v731
        %v764 = vperm.slane %v548, 1
        %v765 = vadd.f32 %v732, %v764
        %v766 = vadd.f32 %v733, %v764
        %v767 = vadd.f32 %v734, %v764
        %v768 = vadd.f32 %v735, %v764
        %v769 = vadd.f32 %v736, %v764
        %v770 = vadd.f32 %v737, %v764
        %v771 = vadd.f32 %v738, %v764
        %v772 = vadd.f32 %v739, %v764
        %v773 = vadd.f32 %v740, %v764
        %v774 = vadd.f32 %v741, %v764
        %v775 = vadd.f32 %v742, %v764
        %v776 = vadd.f32 %v743, %v764
        %v777 = vadd.f32 %v744, %v764
        %v778 = vadd.f32 %v745, %v764
        %v779 = vadd.f32 %v746, %v764
        %v780 = vadd.f32 %v747, %v764
        %v781 = vadd.f32 %v748, %v764
        %v782 = vadd.f32 %v749, %v764
        %v783 = vadd.f32 %v750, %v764
        %v784 = vadd.f32 %v751, %v764
        %v785 = vadd.f32 %v752, %v764
        %v786 = vadd.f32 %v753, %v764
        %v787 = vadd.f32 %v754, %v764
        %v788 = vadd.f32 %v755, %v764
        %v789 = vadd.f32 %v756, %v764
        %v790 = vadd.f32 %v757, %v764
        %v791 = vadd.f32 %v758, %v764
        %v792 = vadd.f32 %v759, %v764
        %v793 = vadd.f32 %v760, %v764
        %v794 = vadd.f32 %v761, %v764
        %v795 = vadd.f32 %v762, %v764
        %v796 = vadd.f32 %v763, %v764
        %v797 = vperm.slane %v547, 0
        %v798 = vmul.f32 %v623, %v797
        %v799 = vmul.f32 %v624, %v797
        %v800 = vmul.f32 %v625, %v797
        %v801 = vmul.f32 %v626, %v797
        %v802 = vmul.f32 %v627, %v797
        %v803 = vmul.f32 %v628, %v797
        %v804 = vmul.f32 %v629, %v797
        %v805 = vmul.f32 %v630, %v797
        %v806 = vmul.f32 %v631, %v797
        %v807 = vmul.f32 %v632, %v797
        %v808 = vmul.f32 %v633, %v797
        %v809 = vmul.f32 %v634, %v797
        %v810 = vmul.f32 %v635, %v797
        %v811 = vmul.f32 %v636, %v797
        %v812 = vmul.f32 %v637, %v797
        %v813 = vmul.f32 %v638, %v797
        %v814 = vmul.f32 %v639, %v797
        %v815 = vmul.f32 %v640, %v797
        %v816 = vmul.f32 %v641, %v797
        %v817 = vmul.f32 %v642, %v797
        %v818 = vmul.f32 %v643, %v797
        %v819 = vmul.f32 %v644, %v797
        %v820 = vmul.f32 %v645, %v797
        %v821 = vmul.f32 %v646, %v797
        %v822 = vmul.f32 %v647, %v797
        %v823 = vmul.f32 %v648, %v797
        %v824 = vmul.f32 %v649, %v797
        %v825 = vmul.f32 %v650, %v797
        %v826 = vmul.f32 %v651, %v797
        %v827 = vmul.f32 %v652, %v797
        %v828 = vmul.f32 %v653, %v797
        %v829 = vmul.f32 %v654, %v797
        %v830 = vadd.f32 %v765, %v798
        %v831 = vadd.f32 %v766, %v799
        %v832 = vadd.f32 %v767, %v800
        %v833 = vadd.f32 %v768, %v801
        %v834 = vadd.f32 %v769, %v802
        %v835 = vadd.f32 %v770, %v803
        %v836 = vadd.f32 %v771, %v804
        %v837 = vadd.f32 %v772, %v805
        %v838 = vadd.f32 %v773, %v806
        %v839 = vadd.f32 %v774, %v807
        %v840 = vadd.f32 %v775, %v808
        %v841 = vadd.f32 %v776, %v809
        %v842 = vadd.f32 %v777, %v810
        %v843 = vadd.f32 %v778, %v811
        %v844 = vadd.f32 %v779, %v812
        %v845 = vadd.f32 %v780, %v813
        %v846 = vadd.f32 %v781, %v814
        %v847 = vadd.f32 %v782, %v815
        %v848 = vadd.f32 %v783, %v816
        %v849 = vadd.f32 %v784, %v817
        %v850 = vadd.f32 %v785, %v818
        %v851 = vadd.f32 %v786, %v819
        %v852 = vadd.f32 %v787, %v820
        %v853 = vadd.f32 %v788, %v821
        %v854 = vadd.f32 %v789, %v822
        %v855 = vadd.f32 %v790, %v823
        %v856 = vadd.f32 %v791, %v824
        %v857 = vadd.f32 %v792, %v825
        %v858 = vadd.f32 %v793, %v826
        %v859 = vadd.f32 %v794, %v827
        %v860 = vadd.f32 %v795, %v828
        %v861 = vadd.f32 %v796, %v829
        %v862 = vperm.slane %v547, 3
        %v863 = vmul.f32 %v625, %v862
        %v864 = vmul.f32 %v626, %v862
        %v865 = vmul.f32 %v627, %v862
        %v866 = vmul.f32 %v628, %v862
        %v867 = vmul.f32 %v629, %v862
        %v868 = vmul.f32 %v630, %v862
        %v869 = vmul.f32 %v631, %v862
        %v870 = vmul.f32 %v632, %v862
        %v871 = vmul.f32 %v633, %v862
        %v872 = vmul.f32 %v634, %v862
        %v873 = vmul.f32 %v635, %v862
        %v874 = vmul.f32 %v636, %v862
        %v875 = vmul.f32 %v637, %v862
        %v876 = vmul.f32 %v638, %v862
        %v877 = vmul.f32 %v639, %v862
        %v878 = vmul.f32 %v640, %v862
        %v879 = vmul.f32 %v641, %v862
        %v880 = vmul.f32 %v642, %v862
        %v881 = vmul.f32 %v643, %v862
        %v882 = vmul.f32 %v644, %v862
        %v883 = vmul.f32 %v645, %v862
        %v884 = vmul.f32 %v646, %v862
        %v885 = vmul.f32 %v647, %v862
        %v886 = vmul.f32 %v648, %v862
        %v887 = vmul.f32 %v649, %v862
        %v888 = vmul.f32 %v650, %v862
        %v889 = vmul.f32 %v651, %v862
        %v890 = vmul.f32 %v652, %v862
        %v891 = vmul.f32 %v653, %v862
        %v892 = vmul.f32 %v654, %v862
        %v893 = vmul.f32 %v655, %v862
        %v894 = vmul.f32 %v656, %v862
        %v895 = vadd.f32 %v830, %v863
        %v896 = vadd.f32 %v831, %v864
        %v897 = vadd.f32 %v832, %v865
        %v898 = vadd.f32 %v833, %v866
        %v899 = vadd.f32 %v834, %v867
        %v900 = vadd.f32 %v835, %v868
        %v901 = vadd.f32 %v836, %v869
        %v902 = vadd.f32 %v837, %v870
        %v903 = vadd.f32 %v838, %v871
        %v904 = vadd.f32 %v839, %v872
        %v905 = vadd.f32 %v840, %v873
        %v906 = vadd.f32 %v841, %v874
        %v907 = vadd.f32 %v842, %v875
        %v908 = vadd.f32 %v843, %v876
        %v909 = vadd.f32 %v844, %v877
        %v910 = vadd.f32 %v845, %v878
        %v911 = vadd.f32 %v846, %v879
        %v912 = vadd.f32 %v847, %v880
        %v913 = vadd.f32 %v848, %v881
        %v914 = vadd.f32 %v849, %v882
        %v915 = vadd.f32 %v850, %v883
        %v916 = vadd.f32 %v851, %v884
        %v917 = vadd.f32 %v852, %v885
        %v918 = vadd.f32 %v853, %v886
        %v919 = vadd.f32 %v854, %v887
        %v920 = vadd.f32 %v855, %v888
        %v921 = vadd.f32 %v856, %v889
        %v922 = vadd.f32 %v857, %v890
        %v923 = vadd.f32 %v858, %v891
        %v924 = vadd.f32 %v859, %v892
        %v925 = vadd.f32 %v860, %v893
        %v926 = vadd.f32 %v861, %v894
        %v927 = vperm.slane %v547, 6
        %v928 = vmul.f32 %v627, %v927
        %v929 = vmul.f32 %v628, %v927
        %v930 = vmul.f32 %v629, %v927
        %v931 = vmul.f32 %v630, %v927
        %v932 = vmul.f32 %v631, %v927
        %v933 = vmul.f32 %v632, %v927
        %v934 = vmul.f32 %v633, %v927
        %v935 = vmul.f32 %v634, %v927
        %v936 = vmul.f32 %v635, %v927
        %v937 = vmul.f32 %v636, %v927
        %v938 = vmul.f32 %v637, %v927
        %v939 = vmul.f32 %v638, %v927
        %v940 = vmul.f32 %v639, %v927
        %v941 = vmul.f32 %v640, %v927
        %v942 = vmul.f32 %v641, %v927
        %v943 = vmul.f32 %v642, %v927
        %v944 = vmul.f32 %v643, %v927
        %v945 = vmul.f32 %v644, %v927
        %v946 = vmul.f32 %v645, %v927
        %v947 = vmul.f32 %v646, %v927
        %v948 = vmul.f32 %v647, %v927
        %v949 = vmul.f32 %v648, %v927
        %v950 = vmul.f32 %v649, %v927
        %v951 = vmul.f32 %v650, %v927
        %v952 = vmul.f32 %v651, %v927
        %v953 = vmul.f32 %v652, %v927
        %v954 = vmul.f32 %v653, %v927
        %v955 = vmul.f32 %v654, %v927
        %v956 = vmul.f32 %v655, %v927
        %v957 = vmul.f32 %v656, %v927
        %v958 = vmul.f32 %v657, %v927
        %v959 = vmul.f32 %v658, %v927
        %v960 = vadd.f32 %v895, %v928
        %v961 = vadd.f32 %v896, %v929
        %v962 = vadd.f32 %v897, %v930
        %v963 = vadd.f32 %v898, %v931
        %v964 = vadd.f32 %v899, %v932
        %v965 = vadd.f32 %v900, %v933
        %v966 = vadd.f32 %v901, %v934
        %v967 = vadd.f32 %v902, %v935
        %v968 = vadd.f32 %v903, %v936
        %v969 = vadd.f32 %v904, %v937
        %v970 = vadd.f32 %v905, %v938
        %v971 = vadd.f32 %v906, %v939
        %v972 = vadd.f32 %v907, %v940
        %v973 = vadd.f32 %v908, %v941
        %v974 = vadd.f32 %v909, %v942
        %v975 = vadd.f32 %v910, %v943
        %v976 = vadd.f32 %v911, %v944
        %v977 = vadd.f32 %v912, %v945
        %v978 = vadd.f32 %v913, %v946
        %v979 = vadd.f32 %v914, %v947
        %v980 = vadd.f32 %v915, %v948
        %v981 = vadd.f32 %v916, %v949
        %v982 = vadd.f32 %v917, %v950
        %v983 = vadd.f32 %v918, %v951
        %v984 = vadd.f32 %v919, %v952
        %v985 = vadd.f32 %v920, %v953
        %v986 = vadd.f32 %v921, %v954
        %v987 = vadd.f32 %v922, %v955
        %v988 = vadd.f32 %v923, %v956
        %v989 = vadd.f32 %v924, %v957
        %v990 = vadd.f32 %v925, %v958
        %v991 = vadd.f32 %v926, %v959
        %v992 = vperm.slane %v547, 1
        %v993 = vmul.f32 %v659, %v992
        %v994 = vmul.f32 %v660, %v992
        %v995 = vmul.f32 %v661, %v992
        %v996 = vmul.f32 %v662, %v992
        %v997 = vmul.f32 %v663, %v992
        %v998 = vmul.f32 %v664, %v992
        %v999 = vmul.f32 %v665, %v992
        %v1000 = vmul.f32 %v666, %v992
        %v1001 = vmul.f32 %v667, %v992
        %v1002 = vmul.f32 %v668, %v992
        %v1003 = vmul.f32 %v669, %v992
        %v1004 = vmul.f32 %v670, %v992
        %v1005 = vmul.f32 %v671, %v992
        %v1006 = vmul.f32 %v672, %v992
        %v1007 = vmul.f32 %v673, %v992
        %v1008 = vmul.f32 %v674, %v992
        %v1009 = vmul.f32 %v675, %v992
        %v1010 = vmul.f32 %v676, %v992
        %v1011 = vmul.f32 %v677, %v992
        %v1012 = vmul.f32 %v678, %v992
        %v1013 = vmul.f32 %v679, %v992
        %v1014 = vmul.f32 %v680, %v992
        %v1015 = vmul.f32 %v681, %v992
        %v1016 = vmul.f32 %v682, %v992
        %v1017 = vmul.f32 %v683, %v992
        %v1018 = vmul.f32 %v684, %v992
        %v1019 = vmul.f32 %v685, %v992
        %v1020 = vmul.f32 %v686, %v992
        %v1021 = vmul.f32 %v687, %v992
        %v1022 = vmul.f32 %v688, %v992
        %v1023 = vmul.f32 %v689, %v992
        %v1024 = vmul.f32 %v690, %v992
        %v1025 = vadd.f32 %v960, %v993
        %v1026 = vadd.f32 %v961, %v994
        %v1027 = vadd.f32 %v962, %v995
        %v1028 = vadd.f32 %v963, %v996
        %v1029 = vadd.f32 %v964, %v997
        %v1030 = vadd.f32 %v965, %v998
        %v1031 = vadd.f32 %v966, %v999
        %v1032 = vadd.f32 %v967, %v1000
        %v1033 = vadd.f32 %v968, %v1001
        %v1034 = vadd.f32 %v969, %v1002
        %v1035 = vadd.f32 %v970, %v1003
        %v1036 = vadd.f32 %v971, %v1004
        %v1037 = vadd.f32 %v972, %v1005
        %v1038 = vadd.f32 %v973, %v1006
        %v1039 = vadd.f32 %v974, %v1007
        %v1040 = vadd.f32 %v975, %v1008
        %v1041 = vadd.f32 %v976, %v1009
        %v1042 = vadd.f32 %v977, %v1010
        %v1043 = vadd.f32 %v978, %v1011
        %v1044 = vadd.f32 %v979, %v1012
        %v1045 = vadd.f32 %v980, %v1013
        %v1046 = vadd.f32 %v981, %v1014
        %v1047 = vadd.f32 %v982, %v1015
        %v1048 = vadd.f32 %v983, %v1016
        %v1049 = vadd.f32 %v984, %v1017
        %v1050 = vadd.f32 %v985, %v1018
        %v1051 = vadd.f32 %v986, %v1019
        %v1052 = vadd.f32 %v987, %v1020
        %v1053 = vadd.f32 %v988, %v1021
        %v1054 = vadd.f32 %v989, %v1022
        %v1055 = vadd.f32 %v990, %v1023
        %v1056 = vadd.f32 %v991, %v1024
        %v1057 = vperm.slane %v547, 7
        %v1058 = vmul.f32 %v663, %v1057
        %v1059 = vmul.f32 %v664, %v1057
        %v1060 = vmul.f32 %v665, %v1057
        %v1061 = vmul.f32 %v666, %v1057
        %v1062 = vmul.f32 %v667, %v1057
        %v1063 = vmul.f32 %v668, %v1057
        %v1064 = vmul.f32 %v669, %v1057
        %v1065 = vmul.f32 %v670, %v1057
        %v1066 = vmul.f32 %v671, %v1057
        %v1067 = vmul.f32 %v672, %v1057
        %v1068 = vmul.f32 %v673, %v1057
        %v1069 = vmul.f32 %v674, %v1057
        %v1070 = vmul.f32 %v675, %v1057
        %v1071 = vmul.f32 %v676, %v1057
        %v1072 = vmul.f32 %v677, %v1057
        %v1073 = vmul.f32 %v678, %v1057
        %v1074 = vmul.f32 %v679, %v1057
        %v1075 = vmul.f32 %v680, %v1057
        %v1076 = vmul.f32 %v681, %v1057
        %v1077 = vmul.f32 %v682, %v1057
        %v1078 = vmul.f32 %v683, %v1057
        %v1079 = vmul.f32 %v684, %v1057
        %v1080 = vmul.f32 %v685, %v1057
        %v1081 = vmul.f32 %v686, %v1057
        %v1082 = vmul.f32 %v687, %v1057
        %v1083 = vmul.f32 %v688, %v1057
        %v1084 = vmul.f32 %v689, %v1057
        %v1085 = vmul.f32 %v690, %v1057
        %v1086 = vmul.f32 %v691, %v1057
        %v1087 = vmul.f32 %v692, %v1057
        %v1088 = vmul.f32 %v693, %v1057
        %v1089 = vmul.f32 %v694, %v1057
        %v1090 = vadd.f32 %v1025, %v1058
        %v1091 = vadd.f32 %v1026, %v1059
        %v1092 = vadd.f32 %v1027, %v1060
        %v1093 = vadd.f32 %v1028, %v1061
        %v1094 = vadd.f32 %v1029, %v1062
        %v1095 = vadd.f32 %v1030, %v1063
        %v1096 = vadd.f32 %v1031, %v1064
        %v1097 = vadd.f32 %v1032, %v1065
        %v1098 = vadd.f32 %v1033, %v1066
        %v1099 = vadd.f32 %v1034, %v1067
        %v1100 = vadd.f32 %v1035, %v1068
        %v1101 = vadd.f32 %v1036, %v1069
        %v1102 = vadd.f32 %v1037, %v1070
        %v1103 = vadd.f32 %v1038, %v1071
        %v1104 = vadd.f32 %v1039, %v1072
        %v1105 = vadd.f32 %v1040, %v1073
        %v1106 = vadd.f32 %v1041, %v1074
        %v1107 = vadd.f32 %v1042, %v1075
        %v1108 = vadd.f32 %v1043, %v1076
        %v1109 = vadd.f32 %v1044, %v1077
        %v1110 = vadd.f32 %v1045, %v1078
        %v1111 = vadd.f32 %v1046, %v1079
        %v1112 = vadd.f32 %v1047, %v1080
        %v1113 = vadd.f32 %v1048, %v1081
        %v1114 = vadd.f32 %v1049, %v1082
        %v1115 = vadd.f32 %v1050, %v1083
        %v1116 = vadd.f32 %v1051, %v1084
        %v1117 = vadd.f32 %v1052, %v1085
        %v1118 = vadd.f32 %v1053, %v1086
        %v1119 = vadd.f32 %v1054, %v1087
        %v1120 = vadd.f32 %v1055, %v1088
        %v1121 = vadd.f32 %v1056, %v1089
        %v1122 = vperm.slane %v547, 2
        %v1123 = vmul.f32 %v695, %v1122
        %v1124 = vmul.f32 %v696, %v1122
        %v1125 = vmul.f32 %v697, %v1122
        %v1126 = vmul.f32 %v698, %v1122
        %v1127 = vmul.f32 %v699, %v1122
        %v1128 = vmul.f32 %v700, %v1122
        %v1129 = vmul.f32 %v701, %v1122
        %v1130 = vmul.f32 %v702, %v1122
        %v1131 = vmul.f32 %v703, %v1122
        %v1132 = vmul.f32 %v704, %v1122
        %v1133 = vmul.f32 %v705, %v1122
        %v1134 = vmul.f32 %v706, %v1122
        %v1135 = vmul.f32 %v707, %v1122
        %v1136 = vmul.f32 %v708, %v1122
        %v1137 = vmul.f32 %v709, %v1122
        %v1138 = vmul.f32 %v710, %v1122
        %v1139 = vmul.f32 %v711, %v1122
        %v1140 = vmul.f32 %v712, %v1122
        %v1141 = vmul.f32 %v713, %v1122
        %v1142 = vmul.f32 %v714, %v1122
        %v1143 = vmul.f32 %v715, %v1122
        %v1144 = vmul.f32 %v716, %v1122
        %v1145 = vmul.f32 %v717, %v1122
        %v1146 = vmul.f32 %v718, %v1122
        %v1147 = vmul.f32 %v719, %v1122
        %v1148 = vmul.f32 %v720, %v1122
        %v1149 = vmul.f32 %v721, %v1122
        %v1150 = vmul.f32 %v722, %v1122
        %v1151 = vmul.f32 %v723, %v1122
        %v1152 = vmul.f32 %v724, %v1122
        %v1153 = vmul.f32 %v725, %v1122
        %v1154 = vmul.f32 %v726, %v1122
        %v1155 = vadd.f32 %v1090, %v1123
        %v1156 = vadd.f32 %v1091, %v1124
        %v1157 = vadd.f32 %v1092, %v1125
        %v1158 = vadd.f32 %v1093, %v1126
        %v1159 = vadd.f32 %v1094, %v1127
        %v1160 = vadd.f32 %v1095, %v1128
        %v1161 = vadd.f32 %v1096, %v1129
        %v1162 = vadd.f32 %v1097, %v1130
        %v1163 = vadd.f32 %v1098, %v1131
        %v1164 = vadd.f32 %v1099, %v1132
        %v1165 = vadd.f32 %v1100, %v1133
        %v1166 = vadd.f32 %v1101, %v1134
        %v1167 = vadd.f32 %v1102, %v1135
        %v1168 = vadd.f32 %v1103, %v1136
        %v1169 = vadd.f32 %v1104, %v1137
        %v1170 = vadd.f32 %v1105, %v1138
        %v1171 = vadd.f32 %v1106, %v1139
        %v1172 = vadd.f32 %v1107, %v1140
        %v1173 = vadd.f32 %v1108, %v1141
        %v1174 = vadd.f32 %v1109, %v1142
        %v1175 = vadd.f32 %v1110, %v1143
        %v1176 = vadd.f32 %v1111, %v1144
        %v1177 = vadd.f32 %v1112, %v1145
        %v1178 = vadd.f32 %v1113, %v1146
        %v1179 = vadd.f32 %v1114, %v1147
        %v1180 = vadd.f32 %v1115, %v1148
        %v1181 = vadd.f32 %v1116, %v1149
        %v1182 = vadd.f32 %v1117, %v1150
        %v1183 = vadd.f32 %v1118, %v1151
        %v1184 = vadd.f32 %v1119, %v1152
        %v1185 = vadd.f32 %v1120, %v1153
        %v1186 = vadd.f32 %v1121, %v1154
        %v1187 = vperm.slane %v547, 5
        %v1188 = vmul.f32 %v697, %v1187
        %v1189 = vmul.f32 %v698, %v1187
        %v1190 = vmul.f32 %v699, %v1187
        %v1191 = vmul.f32 %v700, %v1187
        %v1192 = vmul.f32 %v701, %v1187
        %v1193 = vmul.f32 %v702, %v1187
        %v1194 = vmul.f32 %v703, %v1187
        %v1195 = vmul.f32 %v704, %v1187
        %v1196 = vmul.f32 %v705, %v1187
        %v1197 = vmul.f32 %v706, %v1187
        %v1198 = vmul.f32 %v707, %v1187
        %v1199 = vmul.f32 %v708, %v1187
        %v1200 = vmul.f32 %v709, %v1187
        %v1201 = vmul.f32 %v710, %v1187
        %v1202 = vmul.f32 %v711, %v1187
        %v1203 = vmul.f32 %v712, %v1187
        %v1204 = vmul.f32 %v713, %v1187
        %v1205 = vmul.f32 %v714, %v1187
        %v1206 = vmul.f32 %v715, %v1187
        %v1207 = vmul.f32 %v716, %v1187
        %v1208 = vmul.f32 %v717, %v1187
        %v1209 = vmul.f32 %v718, %v1187
        %v1210 = vmul.f32 %v719, %v1187
        %v1211 = vmul.f32 %v720, %v1187
        %v1212 = vmul.f32 %v721, %v1187
        %v1213 = vmul.f32 %v722, %v1187
        %v1214 = vmul.f32 %v723, %v1187
        %v1215 = vmul.f32 %v724, %v1187
        %v1216 = vmul.f32 %v725, %v1187
        %v1217 = vmul.f32 %v726, %v1187
        %v1218 = vmul.f32 %v727, %v1187
        %v1219 = vmul.f32 %v728, %v1187
        %v1220 = vadd.f32 %v1155, %v1188
        %v1221 = vadd.f32 %v1156, %v1189
        %v1222 = vadd.f32 %v1157, %v1190
        %v1223 = vadd.f32 %v1158, %v1191
        %v1224 = vadd.f32 %v1159, %v1192
        %v1225 = vadd.f32 %v1160, %v1193
        %v1226 = vadd.f32 %v1161, %v1194
        %v1227 = vadd.f32 %v1162, %v1195
        %v1228 = vadd.f32 %v1163, %v1196
        %v1229 = vadd.f32 %v1164, %v1197
        %v1230 = vadd.f32 %v1165, %v1198
        %v1231 = vadd.f32 %v1166, %v1199
        %v1232 = vadd.f32 %v1167, %v1200
        %v1233 = vadd.f32 %v1168, %v1201
        %v1234 = vadd.f32 %v1169, %v1202
        %v1235 = vadd.f32 %v1170, %v1203
        %v1236 = vadd.f32 %v1171, %v1204
        %v1237 = vadd.f32 %v1172, %v1205
        %v1238 = vadd.f32 %v1173, %v1206
        %v1239 = vadd.f32 %v1174, %v1207
        %v1240 = vadd.f32 %v1175, %v1208
        %v1241 = vadd.f32 %v1176, %v1209
        %v1242 = vadd.f32 %v1177, %v1210
        %v1243 = vadd.f32 %v1178, %v1211
        %v1244 = vadd.f32 %v1179, %v1212
        %v1245 = vadd.f32 %v1180, %v1213
        %v1246 = vadd.f32 %v1181, %v1214
        %v1247 = vadd.f32 %v1182, %v1215
        %v1248 = vadd.f32 %v1183, %v1216
        %v1249 = vadd.f32 %v1184, %v1217
        %v1250 = vadd.f32 %v1185, %v1218
        %v1251 = vadd.f32 %v1186, %v1219
        %v1252 = vperm.slane %v548, 0
        %v1253 = vmul.f32 %v699, %v1252
        %v1254 = vmul.f32 %v700, %v1252
        %v1255 = vmul.f32 %v701, %v1252
        %v1256 = vmul.f32 %v702, %v1252
        %v1257 = vmul.f32 %v703, %v1252
        %v1258 = vmul.f32 %v704, %v1252
        %v1259 = vmul.f32 %v705, %v1252
        %v1260 = vmul.f32 %v706, %v1252
        %v1261 = vmul.f32 %v707, %v1252
        %v1262 = vmul.f32 %v708, %v1252
        %v1263 = vmul.f32 %v709, %v1252
        %v1264 = vmul.f32 %v710, %v1252
        %v1265 = vmul.f32 %v711, %v1252
        %v1266 = vmul.f32 %v712, %v1252
        %v1267 = vmul.f32 %v713, %v1252
        %v1268 = vmul.f32 %v714, %v1252
        %v1269 = vmul.f32 %v715, %v1252
        %v1270 = vmul.f32 %v716, %v1252
        %v1271 = vmul.f32 %v717, %v1252
        %v1272 = vmul.f32 %v718, %v1252
        %v1273 = vmul.f32 %v719, %v1252
        %v1274 = vmul.f32 %v720, %v1252
        %v1275 = vmul.f32 %v721, %v1252
        %v1276 = vmul.f32 %v722, %v1252
        %v1277 = vmul.f32 %v723, %v1252
        %v1278 = vmul.f32 %v724, %v1252
        %v1279 = vmul.f32 %v725, %v1252
        %v1280 = vmul.f32 %v726, %v1252
        %v1281 = vmul.f32 %v727, %v1252
        %v1282 = vmul.f32 %v728, %v1252
        %v1283 = vmul.f32 %v729, %v1252
        %v1284 = vmul.f32 %v730, %v1252
        %v1285 = vadd.f32 %v1220, %v1253
        %v1286 = vadd.f32 %v1221, %v1254
        %v1287 = vadd.f32 %v1222, %v1255
        %v1288 = vadd.f32 %v1223, %v1256
        %v1289 = vadd.f32 %v1224, %v1257
        %v1290 = vadd.f32 %v1225, %v1258
        %v1291 = vadd.f32 %v1226, %v1259
        %v1292 = vadd.f32 %v1227, %v1260
        %v1293 = vadd.f32 %v1228, %v1261
        %v1294 = vadd.f32 %v1229, %v1262
        %v1295 = vadd.f32 %v1230, %v1263
        %v1296 = vadd.f32 %v1231, %v1264
        %v1297 = vadd.f32 %v1232, %v1265
        %v1298 = vadd.f32 %v1233, %v1266
        %v1299 = vadd.f32 %v1234, %v1267
        %v1300 = vadd.f32 %v1235, %v1268
        %v1301 = vadd.f32 %v1236, %v1269
        %v1302 = vadd.f32 %v1237, %v1270
        %v1303 = vadd.f32 %v1238, %v1271
        %v1304 = vadd.f32 %v1239, %v1272
        %v1305 = vadd.f32 %v1240, %v1273
        %v1306 = vadd.f32 %v1241, %v1274
        %v1307 = vadd.f32 %v1242, %v1275
        %v1308 = vadd.f32 %v1243, %v1276
        %v1309 = vadd.f32 %v1244, %v1277
        %v1310 = vadd.f32 %v1245, %v1278
        %v1311 = vadd.f32 %v1246, %v1279
        %v1312 = vadd.f32 %v1247, %v1280
        %v1313 = vadd.f32 %v1248, %v1281
        %v1314 = vadd.f32 %v1249, %v1282
        %v1315 = vadd.f32 %v1250, %v1283
        %v1316 = vadd.f32 %v1251, %v1284
        %v1317 = vld [vmem:[%s2] sm:$0xff]
        %v1318 = vld [vmem:[%s2 + $0x8] sm:$0x1]
        %v1319 = vld [vmem:[%s3] sm:$0xff]
        %v1320 = vld [vmem:[%s3 + $0x8] sm:$0xff]
        %v1321 = vld [vmem:[%s3 + $0x10] sm:$0xff]
        %v1322 = vld [vmem:[%s3 + $0x18] sm:$0xff]
        %v1323 = vld [vmem:[%s3 + $0x20] sm:$0xff]
        %v1324 = vld [vmem:[%s3 + $0x28] sm:$0xff]
        %v1325 = vld [vmem:[%s3 + $0x30] sm:$0xff]
        %v1326 = vld [vmem:[%s3 + $0x38] sm:$0xff]
        %v1327 = vld [vmem:[%s3 + $0x40] sm:$0xff]
        %v1328 = vld [vmem:[%s3 + $0x48] sm:$0xff]
        %v1329 = vld [vmem:[%s3 + $0x50] sm:$0xff]
        %v1330 = vld [vmem:[%s3 + $0x58] sm:$0xff]
        %v1331 = vld [vmem:[%s3 + $0x60] sm:$0xff]
        %v1332 = vld [vmem:[%s3 + $0x68] sm:$0xff]
        %v1333 = vld [vmem:[%s3 + $0x70] sm:$0xff]
        %v1334 = vld [vmem:[%s3 + $0x78] sm:$0xff]
        %v1335 = vperm.slane %v1317, 0
        %v1336 = vand.u32 %v1334, 4294901760
        %1337 = vmatpush.msra.mxu0 %v1336
        %v1338 = vand.u32 %v1333, 4294901760
        %1339 = vmatpush.msra.mxu0 %v1338
        %v1340 = vand.u32 %v1332, 4294901760
        %1341 = vmatpush.msra.mxu0 %v1340
        %v1342 = vand.u32 %v1331, 4294901760
        %1343 = vmatpush.msra.mxu0 %v1342
        %v1344 = vand.u32 %v1330, 4294901760
        %1345 = vmatpush.msra.mxu0 %v1344
        %v1346 = vand.u32 %v1329, 4294901760
        %1347 = vmatpush.msra.mxu0 %v1346
        %v1348 = vand.u32 %v1328, 4294901760
        %1349 = vmatpush.msra.mxu0 %v1348
        %v1350 = vand.u32 %v1327, 4294901760
        %1351 = vmatpush.msra.mxu0 %v1350
        %v1352 = vand.u32 %v1326, 4294901760
        %1353 = vmatpush.msra.mxu0 %v1352
        %v1354 = vand.u32 %v1325, 4294901760
        %1355 = vmatpush.msra.mxu0 %v1354
        %v1356 = vand.u32 %v1324, 4294901760
        %1357 = vmatpush.msra.mxu0 %v1356
        %v1358 = vand.u32 %v1323, 4294901760
        %1359 = vmatpush.msra.mxu0 %v1358
        %v1360 = vand.u32 %v1322, 4294901760
        %1361 = vmatpush.msra.mxu0 %v1360
        %v1362 = vand.u32 %v1321, 4294901760
        %1363 = vmatpush.msra.mxu0 %v1362
        %v1364 = vand.u32 %v1320, 4294901760
        %1365 = vmatpush.msra.mxu0 %v1364
        %v1366 = vand.u32 %v1319, 4294901760
        %1367 = vmatpush.msra.mxu0 %v1366
        %v1368 = vand.u32 %v1285, 4294901760
        %v1369 = vsub.f32 %v1285, %v1368
        %v1370 = vand.u32 %v1369, 4294901760
        %v1371 = vsub.f32 %v1369, %v1370
        %v1372 = vand.u32 %v1371, 4294901760
        %1373 = vmatmul.f32.gmra.mxu0 %v1372
        %v1374 = vpop.f32.mrf.mxu0
        %v1375 = vadd.f32 %v1335, %v1374
        %v1376 = vand.u32 %v1286, 4294901760
        %v1377 = vsub.f32 %v1286, %v1376
        %v1378 = vand.u32 %v1377, 4294901760
        %v1379 = vsub.f32 %v1377, %v1378
        %v1380 = vand.u32 %v1379, 4294901760
        %1381 = vmatmul.f32.gmra.mxu0 %v1380
        %v1382 = vpop.f32.mrf.mxu0
        %v1383 = vadd.f32 %v1335, %v1382
        %v1384 = vand.u32 %v1287, 4294901760
        %v1385 = vsub.f32 %v1287, %v1384
        %v1386 = vand.u32 %v1385, 4294901760
        %v1387 = vsub.f32 %v1385, %v1386
        %v1388 = vand.u32 %v1387, 4294901760
        %1389 = vmatmul.f32.gmra.mxu0 %v1388
        %v1390 = vpop.f32.mrf.mxu0
        %v1391 = vadd.f32 %v1335, %v1390
        %v1392 = vand.u32 %v1288, 4294901760
        %v1393 = vsub.f32 %v1288, %v1392
        %v1394 = vand.u32 %v1393, 4294901760
        %v1395 = vsub.f32 %v1393, %v1394
        %v1396 = vand.u32 %v1395, 4294901760
        %1397 = vmatmul.f32.gmra.mxu0 %v1396
        %v1398 = vpop.f32.mrf.mxu0
        %v1399 = vadd.f32 %v1335, %v1398
        %v1400 = vand.u32 %v1289, 4294901760
        %v1401 = vsub.f32 %v1289, %v1400
        %v1402 = vand.u32 %v1401, 4294901760
        %v1403 = vsub.f32 %v1401, %v1402
        %v1404 = vand.u32 %v1403, 4294901760
        %1405 = vmatmul.f32.gmra.mxu0 %v1404
        %v1406 = vpop.f32.mrf.mxu0
        %v1407 = vadd.f32 %v1335, %v1406
        %v1408 = vand.u32 %v1290, 4294901760
        %v1409 = vsub.f32 %v1290, %v1408
        %v1410 = vand.u32 %v1409, 4294901760
        %v1411 = vsub.f32 %v1409, %v1410
        %v1412 = vand.u32 %v1411, 4294901760
        %1413 = vmatmul.f32.gmra.mxu0 %v1412
        %v1414 = vpop.f32.mrf.mxu0
        %v1415 = vadd.f32 %v1335, %v1414
        %v1416 = vand.u32 %v1291, 4294901760
        %v1417 = vsub.f32 %v1291, %v1416
        %v1418 = vand.u32 %v1417, 4294901760
        %v1419 = vsub.f32 %v1417, %v1418
        %v1420 = vand.u32 %v1419, 4294901760
        %1421 = vmatmul.f32.gmra.mxu0 %v1420
        %v1422 = vpop.f32.mrf.mxu0
        %v1423 = vadd.f32 %v1335, %v1422
        %v1424 = vand.u32 %v1292, 4294901760
        %v1425 = vsub.f32 %v1292, %v1424
        %v1426 = vand.u32 %v1425, 4294901760
        %v1427 = vsub.f32 %v1425, %v1426
        %v1428 = vand.u32 %v1427, 4294901760
        %1429 = vmatmul.f32.gmra.mxu0 %v1428
        %v1430 = vpop.f32.mrf.mxu0
        %v1431 = vadd.f32 %v1335, %v1430
        %v1432 = vand.u32 %v1293, 4294901760
        %v1433 = vsub.f32 %v1293, %v1432
        %v1434 = vand.u32 %v1433, 4294901760
        %v1435 = vsub.f32 %v1433, %v1434
        %v1436 = vand.u32 %v1435, 4294901760
        %1437 = vmatmul.f32.gmra.mxu0 %v1436
        %v1438 = vpop.f32.mrf.mxu0
        %v1439 = vadd.f32 %v1335, %v1438
        %v1440 = vand.u32 %v1294, 4294901760
        %v1441 = vsub.f32 %v1294, %v1440
        %v1442 = vand.u32 %v1441, 4294901760
        %v1443 = vsub.f32 %v1441, %v1442
        %v1444 = vand.u32 %v1443, 4294901760
        %1445 = vmatmul.f32.gmra.mxu0 %v1444
        %v1446 = vpop.f32.mrf.mxu0
        %v1447 = vadd.f32 %v1335, %v1446
        %v1448 = vand.u32 %v1295, 4294901760
        %v1449 = vsub.f32 %v1295, %v1448
        %v1450 = vand.u32 %v1449, 4294901760
        %v1451 = vsub.f32 %v1449, %v1450
        %v1452 = vand.u32 %v1451, 4294901760
        %1453 = vmatmul.f32.gmra.mxu0 %v1452
        %v1454 = vpop.f32.mrf.mxu0
        %v1455 = vadd.f32 %v1335, %v1454
        %v1456 = vand.u32 %v1296, 4294901760
        %v1457 = vsub.f32 %v1296, %v1456
        %v1458 = vand.u32 %v1457, 4294901760
        %v1459 = vsub.f32 %v1457, %v1458
        %v1460 = vand.u32 %v1459, 4294901760
        %1461 = vmatmul.f32.gmra.mxu0 %v1460
        %v1462 = vpop.f32.mrf.mxu0
        %v1463 = vadd.f32 %v1335, %v1462
        %v1464 = vand.u32 %v1297, 4294901760
        %v1465 = vsub.f32 %v1297, %v1464
        %v1466 = vand.u32 %v1465, 4294901760
        %v1467 = vsub.f32 %v1465, %v1466
        %v1468 = vand.u32 %v1467, 4294901760
        %1469 = vmatmul.f32.gmra.mxu0 %v1468
        %v1470 = vpop.f32.mrf.mxu0
        %v1471 = vadd.f32 %v1335, %v1470
        %v1472 = vand.u32 %v1298, 4294901760
        %v1473 = vsub.f32 %v1298, %v1472
        %v1474 = vand.u32 %v1473, 4294901760
        %v1475 = vsub.f32 %v1473, %v1474
        %v1476 = vand.u32 %v1475, 4294901760
        %1477 = vmatmul.f32.gmra.mxu0 %v1476
        %v1478 = vpop.f32.mrf.mxu0
        %v1479 = vadd.f32 %v1335, %v1478
        %v1480 = vand.u32 %v1299, 4294901760
        %v1481 = vsub.f32 %v1299, %v1480
        %v1482 = vand.u32 %v1481, 4294901760
        %v1483 = vsub.f32 %v1481, %v1482
        %v1484 = vand.u32 %v1483, 4294901760
        %1485 = vmatmul.f32.gmra.mxu0 %v1484
        %v1486 = vpop.f32.mrf.mxu0
        %v1487 = vadd.f32 %v1335, %v1486
        %v1488 = vand.u32 %v1300, 4294901760
        %v1489 = vsub.f32 %v1300, %v1488
        %v1490 = vand.u32 %v1489, 4294901760
        %v1491 = vsub.f32 %v1489, %v1490
        %v1492 = vand.u32 %v1491, 4294901760
        %1493 = vmatmul.f32.gmra.mxu0 %v1492
        %v1494 = vpop.f32.mrf.mxu0
        %v1495 = vadd.f32 %v1335, %v1494
        %v1496 = vand.u32 %v1301, 4294901760
        %v1497 = vsub.f32 %v1301, %v1496
        %v1498 = vand.u32 %v1497, 4294901760
        %v1499 = vsub.f32 %v1497, %v1498
        %v1500 = vand.u32 %v1499, 4294901760
        %1501 = vmatmul.f32.gmra.mxu0 %v1500
        %v1502 = vpop.f32.mrf.mxu0
        %v1503 = vadd.f32 %v1335, %v1502
        %v1504 = vand.u32 %v1302, 4294901760
        %v1505 = vsub.f32 %v1302, %v1504
        %v1506 = vand.u32 %v1505, 4294901760
        %v1507 = vsub.f32 %v1505, %v1506
        %v1508 = vand.u32 %v1507, 4294901760
        %1509 = vmatmul.f32.gmra.mxu0 %v1508
        %v1510 = vpop.f32.mrf.mxu0
        %v1511 = vadd.f32 %v1335, %v1510
        %v1512 = vand.u32 %v1303, 4294901760
        %v1513 = vsub.f32 %v1303, %v1512
        %v1514 = vand.u32 %v1513, 4294901760
        %v1515 = vsub.f32 %v1513, %v1514
        %v1516 = vand.u32 %v1515, 4294901760
        %1517 = vmatmul.f32.gmra.mxu0 %v1516
        %v1518 = vpop.f32.mrf.mxu0
        %v1519 = vadd.f32 %v1335, %v1518
        %v1520 = vand.u32 %v1304, 4294901760
        %v1521 = vsub.f32 %v1304, %v1520
        %v1522 = vand.u32 %v1521, 4294901760
        %v1523 = vsub.f32 %v1521, %v1522
        %v1524 = vand.u32 %v1523, 4294901760
        %1525 = vmatmul.f32.gmra.mxu0 %v1524
        %v1526 = vpop.f32.mrf.mxu0
        %v1527 = vadd.f32 %v1335, %v1526
        %v1528 = vand.u32 %v1305, 4294901760
        %v1529 = vsub.f32 %v1305, %v1528
        %v1530 = vand.u32 %v1529, 4294901760
        %v1531 = vsub.f32 %v1529, %v1530
        %v1532 = vand.u32 %v1531, 4294901760
        %1533 = vmatmul.f32.gmra.mxu0 %v1532
        %v1534 = vpop.f32.mrf.mxu0
        %v1535 = vadd.f32 %v1335, %v1534
        %v1536 = vand.u32 %v1306, 4294901760
        %v1537 = vsub.f32 %v1306, %v1536
        %v1538 = vand.u32 %v1537, 4294901760
        %v1539 = vsub.f32 %v1537, %v1538
        %v1540 = vand.u32 %v1539, 4294901760
        %1541 = vmatmul.f32.gmra.mxu0 %v1540
        %v1542 = vpop.f32.mrf.mxu0
        %v1543 = vadd.f32 %v1335, %v1542
        %v1544 = vand.u32 %v1307, 4294901760
        %v1545 = vsub.f32 %v1307, %v1544
        %v1546 = vand.u32 %v1545, 4294901760
        %v1547 = vsub.f32 %v1545, %v1546
        %v1548 = vand.u32 %v1547, 4294901760
        %1549 = vmatmul.f32.gmra.mxu0 %v1548
        %v1550 = vpop.f32.mrf.mxu0
        %v1551 = vadd.f32 %v1335, %v1550
        %v1552 = vand.u32 %v1308, 4294901760
        %v1553 = vsub.f32 %v1308, %v1552
        %v1554 = vand.u32 %v1553, 4294901760
        %v1555 = vsub.f32 %v1553, %v1554
        %v1556 = vand.u32 %v1555, 4294901760
        %1557 = vmatmul.f32.gmra.mxu0 %v1556
        %v1558 = vpop.f32.mrf.mxu0
        %v1559 = vadd.f32 %v1335, %v1558
        %v1560 = vand.u32 %v1309, 4294901760
        %v1561 = vsub.f32 %v1309, %v1560
        %v1562 = vand.u32 %v1561, 4294901760
        %v1563 = vsub.f32 %v1561, %v1562
        %v1564 = vand.u32 %v1563, 4294901760
        %1565 = vmatmul.f32.gmra.mxu0 %v1564
        %v1566 = vpop.f32.mrf.mxu0
        %v1567 = vadd.f32 %v1335, %v1566
        %v1568 = vand.u32 %v1310, 4294901760
        %v1569 = vsub.f32 %v1310, %v1568
        %v1570 = vand.u32 %v1569, 4294901760
        %v1571 = vsub.f32 %v1569, %v1570
        %v1572 = vand.u32 %v1571, 4294901760
        %1573 = vmatmul.f32.gmra.mxu0 %v1572
        %v1574 = vpop.f32.mrf.mxu0
        %v1575 = vadd.f32 %v1335, %v1574
        %v1576 = vand.u32 %v1311, 4294901760
        %v1577 = vsub.f32 %v1311, %v1576
        %v1578 = vand.u32 %v1577, 4294901760
        %v1579 = vsub.f32 %v1577, %v1578
        %v1580 = vand.u32 %v1579, 4294901760
        %1581 = vmatmul.f32.gmra.mxu0 %v1580
        %v1582 = vpop.f32.mrf.mxu0
        %v1583 = vadd.f32 %v1335, %v1582
        %v1584 = vand.u32 %v1312, 4294901760
        %v1585 = vsub.f32 %v1312, %v1584
        %v1586 = vand.u32 %v1585, 4294901760
        %v1587 = vsub.f32 %v1585, %v1586
        %v1588 = vand.u32 %v1587, 4294901760
        %1589 = vmatmul.f32.gmra.mxu0 %v1588
        %v1590 = vpop.f32.mrf.mxu0
        %v1591 = vadd.f32 %v1335, %v1590
        %v1592 = vand.u32 %v1313, 4294901760
        %v1593 = vsub.f32 %v1313, %v1592
        %v1594 = vand.u32 %v1593, 4294901760
        %v1595 = vsub.f32 %v1593, %v1594
        %v1596 = vand.u32 %v1595, 4294901760
        %1597 = vmatmul.f32.gmra.mxu0 %v1596
        %v1598 = vpop.f32.mrf.mxu0
        %v1599 = vadd.f32 %v1335, %v1598
        %v1600 = vand.u32 %v1314, 4294901760
        %v1601 = vsub.f32 %v1314, %v1600
        %v1602 = vand.u32 %v1601, 4294901760
        %v1603 = vsub.f32 %v1601, %v1602
        %v1604 = vand.u32 %v1603, 4294901760
        %1605 = vmatmul.f32.gmra.mxu0 %v1604
        %v1606 = vpop.f32.mrf.mxu0
        %v1607 = vadd.f32 %v1335, %v1606
        %v1608 = vand.u32 %v1315, 4294901760
        %v1609 = vsub.f32 %v1315, %v1608
        %v1610 = vand.u32 %v1609, 4294901760
        %v1611 = vsub.f32 %v1609, %v1610
        %v1612 = vand.u32 %v1611, 4294901760
        %1613 = vmatmul.f32.gmra.mxu0 %v1612
        %v1614 = vpop.f32.mrf.mxu0
        %v1615 = vadd.f32 %v1335, %v1614
        %v1616 = vand.u32 %v1316, 4294901760
        %v1617 = vsub.f32 %v1316, %v1616
        %v1618 = vand.u32 %v1617, 4294901760
        %v1619 = vsub.f32 %v1617, %v1618
        %v1620 = vand.u32 %v1619, 4294901760
        %1621 = vmatmul.f32.gmra.mxu0 %v1620
        %v1622 = vpop.f32.mrf.mxu0
        %v1623 = vadd.f32 %v1335, %v1622
        %1624 = vdwg.mxu0
        %v1625 = vand.u32 %v1334, 4294901760
        %v1626 = vsub.f32 %v1334, %v1625
        %v1627 = vand.u32 %v1626, 4294901760
        %v1628 = vsub.f32 %v1626, %v1627
        %v1629 = vand.u32 %v1628, 4294901760
        %1630 = vmatpush.msra.mxu0 %v1629
        %v1631 = vand.u32 %v1333, 4294901760
        %v1632 = vsub.f32 %v1333, %v1631
        %v1633 = vand.u32 %v1632, 4294901760
        %v1634 = vsub.f32 %v1632, %v1633
        %v1635 = vand.u32 %v1634, 4294901760
        %1636 = vmatpush.msra.mxu0 %v1635
        %v1637 = vand.u32 %v1332, 4294901760
        %v1638 = vsub.f32 %v1332, %v1637
        %v1639 = vand.u32 %v1638, 4294901760
        %v1640 = vsub.f32 %v1638, %v1639
        %v1641 = vand.u32 %v1640, 4294901760
        %1642 = vmatpush.msra.mxu0 %v1641
        %v1643 = vand.u32 %v1331, 4294901760
        %v1644 = vsub.f32 %v1331, %v1643
        %v1645 = vand.u32 %v1644, 4294901760
        %v1646 = vsub.f32 %v1644, %v1645
        %v1647 = vand.u32 %v1646, 4294901760
        %1648 = vmatpush.msra.mxu0 %v1647
        %v1649 = vand.u32 %v1330, 4294901760
        %v1650 = vsub.f32 %v1330, %v1649
        %v1651 = vand.u32 %v1650, 4294901760
        %v1652 = vsub.f32 %v1650, %v1651
        %v1653 = vand.u32 %v1652, 4294901760
        %1654 = vmatpush.msra.mxu0 %v1653
        %v1655 = vand.u32 %v1329, 4294901760
        %v1656 = vsub.f32 %v1329, %v1655
        %v1657 = vand.u32 %v1656, 4294901760
        %v1658 = vsub.f32 %v1656, %v1657
        %v1659 = vand.u32 %v1658, 4294901760
        %1660 = vmatpush.msra.mxu0 %v1659
        %v1661 = vand.u32 %v1328, 4294901760
        %v1662 = vsub.f32 %v1328, %v1661
        %v1663 = vand.u32 %v1662, 4294901760
        %v1664 = vsub.f32 %v1662, %v1663
        %v1665 = vand.u32 %v1664, 4294901760
        %1666 = vmatpush.msra.mxu0 %v1665
        %v1667 = vand.u32 %v1327, 4294901760
        %v1668 = vsub.f32 %v1327, %v1667
        %v1669 = vand.u32 %v1668, 4294901760
        %v1670 = vsub.f32 %v1668, %v1669
        %v1671 = vand.u32 %v1670, 4294901760
        %1672 = vmatpush.msra.mxu0 %v1671
        %v1673 = vand.u32 %v1326, 4294901760
        %v1674 = vsub.f32 %v1326, %v1673
        %v1675 = vand.u32 %v1674, 4294901760
        %v1676 = vsub.f32 %v1674, %v1675
        %v1677 = vand.u32 %v1676, 4294901760
        %1678 = vmatpush.msra.mxu0 %v1677
        %v1679 = vand.u32 %v1325, 4294901760
        %v1680 = vsub.f32 %v1325, %v1679
        %v1681 = vand.u32 %v1680, 4294901760
        %v1682 = vsub.f32 %v1680, %v1681
        %v1683 = vand.u32 %v1682, 4294901760
        %1684 = vmatpush.msra.mxu0 %v1683
        %v1685 = vand.u32 %v1324, 4294901760
        %v1686 = vsub.f32 %v1324, %v1685
        %v1687 = vand.u32 %v1686, 4294901760
        %v1688 = vsub.f32 %v1686, %v1687
        %v1689 = vand.u32 %v1688, 4294901760
        %1690 = vmatpush.msra.mxu0 %v1689
        %v1691 = vand.u32 %v1323, 4294901760
        %v1692 = vsub.f32 %v1323, %v1691
        %v1693 = vand.u32 %v1692, 4294901760
        %v1694 = vsub.f32 %v1692, %v1693
        %v1695 = vand.u32 %v1694, 4294901760
        %1696 = vmatpush.msra.mxu0 %v1695
        %v1697 = vand.u32 %v1322, 4294901760
        %v1698 = vsub.f32 %v1322, %v1697
        %v1699 = vand.u32 %v1698, 4294901760
        %v1700 = vsub.f32 %v1698, %v1699
        %v1701 = vand.u32 %v1700, 4294901760
        %1702 = vmatpush.msra.mxu0 %v1701
        %v1703 = vand.u32 %v1321, 4294901760
        %v1704 = vsub.f32 %v1321, %v1703
        %v1705 = vand.u32 %v1704, 4294901760
        %v1706 = vsub.f32 %v1704, %v1705
        %v1707 = vand.u32 %v1706, 4294901760
        %1708 = vmatpush.msra.mxu0 %v1707
        %v1709 = vand.u32 %v1320, 4294901760
        %v1710 = vsub.f32 %v1320, %v1709
        %v1711 = vand.u32 %v1710, 4294901760
        %v1712 = vsub.f32 %v1710, %v1711
        %v1713 = vand.u32 %v1712, 4294901760
        %1714 = vmatpush.msra.mxu0 %v1713
        %v1715 = vand.u32 %v1319, 4294901760
        %v1716 = vsub.f32 %v1319, %v1715
        %v1717 = vand.u32 %v1716, 4294901760
        %v1718 = vsub.f32 %v1716, %v1717
        %v1719 = vand.u32 %v1718, 4294901760
        %1720 = vmatpush.msra.mxu0 %v1719
        %v1721 = vand.u32 %v1285, 4294901760
        %1722 = vmatmul.f32.gmra.mxu0 %v1721
        %v1723 = vpop.f32.mrf.mxu0
        %v1724 = vadd.f32 %v1375, %v1723
        %v1725 = vand.u32 %v1286, 4294901760
        %1726 = vmatmul.f32.gmra.mxu0 %v1725
        %v1727 = vpop.f32.mrf.mxu0
        %v1728 = vadd.f32 %v1383, %v1727
        %v1729 = vand.u32 %v1287, 4294901760
        %1730 = vmatmul.f32.gmra.mxu0 %v1729
        %v1731 = vpop.f32.mrf.mxu0
        %v1732 = vadd.f32 %v1391, %v1731
        %v1733 = vand.u32 %v1288, 4294901760
        %1734 = vmatmul.f32.gmra.mxu0 %v1733
        %v1735 = vpop.f32.mrf.mxu0
        %v1736 = vadd.f32 %v1399, %v1735
        %v1737 = vand.u32 %v1289, 4294901760
        %1738 = vmatmul.f32.gmra.mxu0 %v1737
        %v1739 = vpop.f32.mrf.mxu0
        %v1740 = vadd.f32 %v1407, %v1739
        %v1741 = vand.u32 %v1290, 4294901760
        %1742 = vmatmul.f32.gmra.mxu0 %v1741
        %v1743 = vpop.f32.mrf.mxu0
        %v1744 = vadd.f32 %v1415, %v1743
        %v1745 = vand.u32 %v1291, 4294901760
        %1746 = vmatmul.f32.gmra.mxu0 %v1745
        %v1747 = vpop.f32.mrf.mxu0
        %v1748 = vadd.f32 %v1423, %v1747
        %v1749 = vand.u32 %v1292, 4294901760
        %1750 = vmatmul.f32.gmra.mxu0 %v1749
        %v1751 = vpop.f32.mrf.mxu0
        %v1752 = vadd.f32 %v1431, %v1751
        %v1753 = vand.u32 %v1293, 4294901760
        %1754 = vmatmul.f32.gmra.mxu0 %v1753
        %v1755 = vpop.f32.mrf.mxu0
        %v1756 = vadd.f32 %v1439, %v1755
        %v1757 = vand.u32 %v1294, 4294901760
        %1758 = vmatmul.f32.gmra.mxu0 %v1757
        %v1759 = vpop.f32.mrf.mxu0
        %v1760 = vadd.f32 %v1447, %v1759
        %v1761 = vand.u32 %v1295, 4294901760
        %1762 = vmatmul.f32.gmra.mxu0 %v1761
        %v1763 = vpop.f32.mrf.mxu0
        %v1764 = vadd.f32 %v1455, %v1763
        %v1765 = vand.u32 %v1296, 4294901760
        %1766 = vmatmul.f32.gmra.mxu0 %v1765
        %v1767 = vpop.f32.mrf.mxu0
        %v1768 = vadd.f32 %v1463, %v1767
        %v1769 = vand.u32 %v1297, 4294901760
        %1770 = vmatmul.f32.gmra.mxu0 %v1769
        %v1771 = vpop.f32.mrf.mxu0
        %v1772 = vadd.f32 %v1471, %v1771
        %v1773 = vand.u32 %v1298, 4294901760
        %1774 = vmatmul.f32.gmra.mxu0 %v1773
        %v1775 = vpop.f32.mrf.mxu0
        %v1776 = vadd.f32 %v1479, %v1775
        %v1777 = vand.u32 %v1299, 4294901760
        %1778 = vmatmul.f32.gmra.mxu0 %v1777
        %v1779 = vpop.f32.mrf.mxu0
        %v1780 = vadd.f32 %v1487, %v1779
        %v1781 = vand.u32 %v1300, 4294901760
        %1782 = vmatmul.f32.gmra.mxu0 %v1781
        %v1783 = vpop.f32.mrf.mxu0
        %v1784 = vadd.f32 %v1495, %v1783
        %v1785 = vand.u32 %v1301, 4294901760
        %1786 = vmatmul.f32.gmra.mxu0 %v1785
        %v1787 = vpop.f32.mrf.mxu0
        %v1788 = vadd.f32 %v1503, %v1787
        %v1789 = vand.u32 %v1302, 4294901760
        %1790 = vmatmul.f32.gmra.mxu0 %v1789
        %v1791 = vpop.f32.mrf.mxu0
        %v1792 = vadd.f32 %v1511, %v1791
        %v1793 = vand.u32 %v1303, 4294901760
        %1794 = vmatmul.f32.gmra.mxu0 %v1793
        %v1795 = vpop.f32.mrf.mxu0
        %v1796 = vadd.f32 %v1519, %v1795
        %v1797 = vand.u32 %v1304, 4294901760
        %1798 = vmatmul.f32.gmra.mxu0 %v1797
        %v1799 = vpop.f32.mrf.mxu0
        %v1800 = vadd.f32 %v1527, %v1799
        %v1801 = vand.u32 %v1305, 4294901760
        %1802 = vmatmul.f32.gmra.mxu0 %v1801
        %v1803 = vpop.f32.mrf.mxu0
        %v1804 = vadd.f32 %v1535, %v1803
        %v1805 = vand.u32 %v1306, 4294901760
        %1806 = vmatmul.f32.gmra.mxu0 %v1805
        %v1807 = vpop.f32.mrf.mxu0
        %v1808 = vadd.f32 %v1543, %v1807
        %v1809 = vand.u32 %v1307, 4294901760
        %1810 = vmatmul.f32.gmra.mxu0 %v1809
        %v1811 = vpop.f32.mrf.mxu0
        %v1812 = vadd.f32 %v1551, %v1811
        %v1813 = vand.u32 %v1308, 4294901760
        %1814 = vmatmul.f32.gmra.mxu0 %v1813
        %v1815 = vpop.f32.mrf.mxu0
        %v1816 = vadd.f32 %v1559, %v1815
        %v1817 = vand.u32 %v1309, 4294901760
        %1818 = vmatmul.f32.gmra.mxu0 %v1817
        %v1819 = vpop.f32.mrf.mxu0
        %v1820 = vadd.f32 %v1567, %v1819
        %v1821 = vand.u32 %v1310, 4294901760
        %1822 = vmatmul.f32.gmra.mxu0 %v1821
        %v1823 = vpop.f32.mrf.mxu0
        %v1824 = vadd.f32 %v1575, %v1823
        %v1825 = vand.u32 %v1311, 4294901760
        %1826 = vmatmul.f32.gmra.mxu0 %v1825
        %v1827 = vpop.f32.mrf.mxu0
        %v1828 = vadd.f32 %v1583, %v1827
        %v1829 = vand.u32 %v1312, 4294901760
        %1830 = vmatmul.f32.gmra.mxu0 %v1829
        %v1831 = vpop.f32.mrf.mxu0
        %v1832 = vadd.f32 %v1591, %v1831
        %v1833 = vand.u32 %v1313, 4294901760
        %1834 = vmatmul.f32.gmra.mxu0 %v1833
        %v1835 = vpop.f32.mrf.mxu0
        %v1836 = vadd.f32 %v1599, %v1835
        %v1837 = vand.u32 %v1314, 4294901760
        %1838 = vmatmul.f32.gmra.mxu0 %v1837
        %v1839 = vpop.f32.mrf.mxu0
        %v1840 = vadd.f32 %v1607, %v1839
        %v1841 = vand.u32 %v1315, 4294901760
        %1842 = vmatmul.f32.gmra.mxu0 %v1841
        %v1843 = vpop.f32.mrf.mxu0
        %v1844 = vadd.f32 %v1615, %v1843
        %v1845 = vand.u32 %v1316, 4294901760
        %1846 = vmatmul.f32.gmra.mxu0 %v1845
        %v1847 = vpop.f32.mrf.mxu0
        %v1848 = vadd.f32 %v1623, %v1847
        %1849 = vdwg.mxu0
        %v1850 = vand.u32 %v1334, 4294901760
        %v1851 = vsub.f32 %v1334, %v1850
        %1852 = vmatpush.msra.mxu0 %v1851
        %v1853 = vand.u32 %v1333, 4294901760
        %v1854 = vsub.f32 %v1333, %v1853
        %1855 = vmatpush.msra.mxu0 %v1854
        %v1856 = vand.u32 %v1332, 4294901760
        %v1857 = vsub.f32 %v1332, %v1856
        %1858 = vmatpush.msra.mxu0 %v1857
        %v1859 = vand.u32 %v1331, 4294901760
        %v1860 = vsub.f32 %v1331, %v1859
        %1861 = vmatpush.msra.mxu0 %v1860
        %v1862 = vand.u32 %v1330, 4294901760
        %v1863 = vsub.f32 %v1330, %v1862
        %1864 = vmatpush.msra.mxu0 %v1863
        %v1865 = vand.u32 %v1329, 4294901760
        %v1866 = vsub.f32 %v1329, %v1865
        %1867 = vmatpush.msra.mxu0 %v1866
        %v1868 = vand.u32 %v1328, 4294901760
        %v1869 = vsub.f32 %v1328, %v1868
        %1870 = vmatpush.msra.mxu0 %v1869
        %v1871 = vand.u32 %v1327, 4294901760
        %v1872 = vsub.f32 %v1327, %v1871
        %1873 = vmatpush.msra.mxu0 %v1872
        %v1874 = vand.u32 %v1326, 4294901760
        %v1875 = vsub.f32 %v1326, %v1874
        %1876 = vmatpush.msra.mxu0 %v1875
        %v1877 = vand.u32 %v1325, 4294901760
        %v1878 = vsub.f32 %v1325, %v1877
        %1879 = vmatpush.msra.mxu0 %v1878
        %v1880 = vand.u32 %v1324, 4294901760
        %v1881 = vsub.f32 %v1324, %v1880
        %1882 = vmatpush.msra.mxu0 %v1881
        %v1883 = vand.u32 %v1323, 4294901760
        %v1884 = vsub.f32 %v1323, %v1883
        %1885 = vmatpush.msra.mxu0 %v1884
        %v1886 = vand.u32 %v1322, 4294901760
        %v1887 = vsub.f32 %v1322, %v1886
        %1888 = vmatpush.msra.mxu0 %v1887
        %v1889 = vand.u32 %v1321, 4294901760
        %v1890 = vsub.f32 %v1321, %v1889
        %1891 = vmatpush.msra.mxu0 %v1890
        %v1892 = vand.u32 %v1320, 4294901760
        %v1893 = vsub.f32 %v1320, %v1892
        %1894 = vmatpush.msra.mxu0 %v1893
        %v1895 = vand.u32 %v1319, 4294901760
        %v1896 = vsub.f32 %v1319, %v1895
        %1897 = vmatpush.msra.mxu0 %v1896
        %v1898 = vand.u32 %v1285, 4294901760
        %v1899 = vsub.f32 %v1285, %v1898
        %1900 = vmatmul.f32.gmra.mxu0 %v1899
        %v1901 = vpop.f32.mrf.mxu0
        %v1902 = vadd.f32 %v1724, %v1901
        %v1903 = vand.u32 %v1286, 4294901760
        %v1904 = vsub.f32 %v1286, %v1903
        %1905 = vmatmul.f32.gmra.mxu0 %v1904
        %v1906 = vpop.f32.mrf.mxu0
        %v1907 = vadd.f32 %v1728, %v1906
        %v1908 = vand.u32 %v1287, 4294901760
        %v1909 = vsub.f32 %v1287, %v1908
        %1910 = vmatmul.f32.gmra.mxu0 %v1909
        %v1911 = vpop.f32.mrf.mxu0
        %v1912 = vadd.f32 %v1732, %v1911
        %v1913 = vand.u32 %v1288, 4294901760
        %v1914 = vsub.f32 %v1288, %v1913
        %1915 = vmatmul.f32.gmra.mxu0 %v1914
        %v1916 = vpop.f32.mrf.mxu0
        %v1917 = vadd.f32 %v1736, %v1916
        %v1918 = vand.u32 %v1289, 4294901760
        %v1919 = vsub.f32 %v1289, %v1918
        %1920 = vmatmul.f32.gmra.mxu0 %v1919
        %v1921 = vpop.f32.mrf.mxu0
        %v1922 = vadd.f32 %v1740, %v1921
        %v1923 = vand.u32 %v1290, 4294901760
        %v1924 = vsub.f32 %v1290, %v1923
        %1925 = vmatmul.f32.gmra.mxu0 %v1924
        %v1926 = vpop.f32.mrf.mxu0
        %v1927 = vadd.f32 %v1744, %v1926
        %v1928 = vand.u32 %v1291, 4294901760
        %v1929 = vsub.f32 %v1291, %v1928
        %1930 = vmatmul.f32.gmra.mxu0 %v1929
        %v1931 = vpop.f32.mrf.mxu0
        %v1932 = vadd.f32 %v1748, %v1931
        %v1933 = vand.u32 %v1292, 4294901760
        %v1934 = vsub.f32 %v1292, %v1933
        %1935 = vmatmul.f32.gmra.mxu0 %v1934
        %v1936 = vpop.f32.mrf.mxu0
        %v1937 = vadd.f32 %v1752, %v1936
        %v1938 = vand.u32 %v1293, 4294901760
        %v1939 = vsub.f32 %v1293, %v1938
        %1940 = vmatmul.f32.gmra.mxu0 %v1939
        %v1941 = vpop.f32.mrf.mxu0
        %v1942 = vadd.f32 %v1756, %v1941
        %v1943 = vand.u32 %v1294, 4294901760
        %v1944 = vsub.f32 %v1294, %v1943
        %1945 = vmatmul.f32.gmra.mxu0 %v1944
        %v1946 = vpop.f32.mrf.mxu0
        %v1947 = vadd.f32 %v1760, %v1946
        %v1948 = vand.u32 %v1295, 4294901760
        %v1949 = vsub.f32 %v1295, %v1948
        %1950 = vmatmul.f32.gmra.mxu0 %v1949
        %v1951 = vpop.f32.mrf.mxu0
        %v1952 = vadd.f32 %v1764, %v1951
        %v1953 = vand.u32 %v1296, 4294901760
        %v1954 = vsub.f32 %v1296, %v1953
        %1955 = vmatmul.f32.gmra.mxu0 %v1954
        %v1956 = vpop.f32.mrf.mxu0
        %v1957 = vadd.f32 %v1768, %v1956
        %v1958 = vand.u32 %v1297, 4294901760
        %v1959 = vsub.f32 %v1297, %v1958
        %1960 = vmatmul.f32.gmra.mxu0 %v1959
        %v1961 = vpop.f32.mrf.mxu0
        %v1962 = vadd.f32 %v1772, %v1961
        %v1963 = vand.u32 %v1298, 4294901760
        %v1964 = vsub.f32 %v1298, %v1963
        %1965 = vmatmul.f32.gmra.mxu0 %v1964
        %v1966 = vpop.f32.mrf.mxu0
        %v1967 = vadd.f32 %v1776, %v1966
        %v1968 = vand.u32 %v1299, 4294901760
        %v1969 = vsub.f32 %v1299, %v1968
        %1970 = vmatmul.f32.gmra.mxu0 %v1969
        %v1971 = vpop.f32.mrf.mxu0
        %v1972 = vadd.f32 %v1780, %v1971
        %v1973 = vand.u32 %v1300, 4294901760
        %v1974 = vsub.f32 %v1300, %v1973
        %1975 = vmatmul.f32.gmra.mxu0 %v1974
        %v1976 = vpop.f32.mrf.mxu0
        %v1977 = vadd.f32 %v1784, %v1976
        %v1978 = vand.u32 %v1301, 4294901760
        %v1979 = vsub.f32 %v1301, %v1978
        %1980 = vmatmul.f32.gmra.mxu0 %v1979
        %v1981 = vpop.f32.mrf.mxu0
        %v1982 = vadd.f32 %v1788, %v1981
        %v1983 = vand.u32 %v1302, 4294901760
        %v1984 = vsub.f32 %v1302, %v1983
        %1985 = vmatmul.f32.gmra.mxu0 %v1984
        %v1986 = vpop.f32.mrf.mxu0
        %v1987 = vadd.f32 %v1792, %v1986
        %v1988 = vand.u32 %v1303, 4294901760
        %v1989 = vsub.f32 %v1303, %v1988
        %1990 = vmatmul.f32.gmra.mxu0 %v1989
        %v1991 = vpop.f32.mrf.mxu0
        %v1992 = vadd.f32 %v1796, %v1991
        %v1993 = vand.u32 %v1304, 4294901760
        %v1994 = vsub.f32 %v1304, %v1993
        %1995 = vmatmul.f32.gmra.mxu0 %v1994
        %v1996 = vpop.f32.mrf.mxu0
        %v1997 = vadd.f32 %v1800, %v1996
        %v1998 = vand.u32 %v1305, 4294901760
        %v1999 = vsub.f32 %v1305, %v1998
        %2000 = vmatmul.f32.gmra.mxu0 %v1999
        %v2001 = vpop.f32.mrf.mxu0
        %v2002 = vadd.f32 %v1804, %v2001
        %v2003 = vand.u32 %v1306, 4294901760
        %v2004 = vsub.f32 %v1306, %v2003
        %2005 = vmatmul.f32.gmra.mxu0 %v2004
        %v2006 = vpop.f32.mrf.mxu0
        %v2007 = vadd.f32 %v1808, %v2006
        %v2008 = vand.u32 %v1307, 4294901760
        %v2009 = vsub.f32 %v1307, %v2008
        %2010 = vmatmul.f32.gmra.mxu0 %v2009
        %v2011 = vpop.f32.mrf.mxu0
        %v2012 = vadd.f32 %v1812, %v2011
        %v2013 = vand.u32 %v1308, 4294901760
        %v2014 = vsub.f32 %v1308, %v2013
        %2015 = vmatmul.f32.gmra.mxu0 %v2014
        %v2016 = vpop.f32.mrf.mxu0
        %v2017 = vadd.f32 %v1816, %v2016
        %v2018 = vand.u32 %v1309, 4294901760
        %v2019 = vsub.f32 %v1309, %v2018
        %2020 = vmatmul.f32.gmra.mxu0 %v2019
        %v2021 = vpop.f32.mrf.mxu0
        %v2022 = vadd.f32 %v1820, %v2021
        %v2023 = vand.u32 %v1310, 4294901760
        %v2024 = vsub.f32 %v1310, %v2023
        %2025 = vmatmul.f32.gmra.mxu0 %v2024
        %v2026 = vpop.f32.mrf.mxu0
        %v2027 = vadd.f32 %v1824, %v2026
        %v2028 = vand.u32 %v1311, 4294901760
        %v2029 = vsub.f32 %v1311, %v2028
        %2030 = vmatmul.f32.gmra.mxu0 %v2029
        %v2031 = vpop.f32.mrf.mxu0
        %v2032 = vadd.f32 %v1828, %v2031
        %v2033 = vand.u32 %v1312, 4294901760
        %v2034 = vsub.f32 %v1312, %v2033
        %2035 = vmatmul.f32.gmra.mxu0 %v2034
        %v2036 = vpop.f32.mrf.mxu0
        %v2037 = vadd.f32 %v1832, %v2036
        %v2038 = vand.u32 %v1313, 4294901760
        %v2039 = vsub.f32 %v1313, %v2038
        %2040 = vmatmul.f32.gmra.mxu0 %v2039
        %v2041 = vpop.f32.mrf.mxu0
        %v2042 = vadd.f32 %v1836, %v2041
        %v2043 = vand.u32 %v1314, 4294901760
        %v2044 = vsub.f32 %v1314, %v2043
        %2045 = vmatmul.f32.gmra.mxu0 %v2044
        %v2046 = vpop.f32.mrf.mxu0
        %v2047 = vadd.f32 %v1840, %v2046
        %v2048 = vand.u32 %v1315, 4294901760
        %v2049 = vsub.f32 %v1315, %v2048
        %2050 = vmatmul.f32.gmra.mxu0 %v2049
        %v2051 = vpop.f32.mrf.mxu0
        %v2052 = vadd.f32 %v1844, %v2051
        %v2053 = vand.u32 %v1316, 4294901760
        %v2054 = vsub.f32 %v1316, %v2053
        %2055 = vmatmul.f32.gmra.mxu0 %v2054
        %v2056 = vpop.f32.mrf.mxu0
        %v2057 = vadd.f32 %v1848, %v2056
        %2058 = vdwg.mxu0
        %v2059 = vand.u32 %v1334, 4294901760
        %2060 = vmatpush.msra.mxu0 %v2059
        %v2061 = vand.u32 %v1333, 4294901760
        %2062 = vmatpush.msra.mxu0 %v2061
        %v2063 = vand.u32 %v1332, 4294901760
        %2064 = vmatpush.msra.mxu0 %v2063
        %v2065 = vand.u32 %v1331, 4294901760
        %2066 = vmatpush.msra.mxu0 %v2065
        %v2067 = vand.u32 %v1330, 4294901760
        %2068 = vmatpush.msra.mxu0 %v2067
        %v2069 = vand.u32 %v1329, 4294901760
        %2070 = vmatpush.msra.mxu0 %v2069
        %v2071 = vand.u32 %v1328, 4294901760
        %2072 = vmatpush.msra.mxu0 %v2071
        %v2073 = vand.u32 %v1327, 4294901760
        %2074 = vmatpush.msra.mxu0 %v2073
        %v2075 = vand.u32 %v1326, 4294901760
        %2076 = vmatpush.msra.mxu0 %v2075
        %v2077 = vand.u32 %v1325, 4294901760
        %2078 = vmatpush.msra.mxu0 %v2077
        %v2079 = vand.u32 %v1324, 4294901760
        %2080 = vmatpush.msra.mxu0 %v2079
        %v2081 = vand.u32 %v1323, 4294901760
        %2082 = vmatpush.msra.mxu0 %v2081
        %v2083 = vand.u32 %v1322, 4294901760
        %2084 = vmatpush.msra.mxu0 %v2083
        %v2085 = vand.u32 %v1321, 4294901760
        %2086 = vmatpush.msra.mxu0 %v2085
        %v2087 = vand.u32 %v1320, 4294901760
        %2088 = vmatpush.msra.mxu0 %v2087
        %v2089 = vand.u32 %v1319, 4294901760
        %2090 = vmatpush.msra.mxu0 %v2089
        %v2091 = vand.u32 %v1285, 4294901760
        %v2092 = vsub.f32 %v1285, %v2091
        %v2093 = vand.u32 %v2092, 4294901760
        %2094 = vmatmul.f32.gmra.mxu0 %v2093
        %v2095 = vpop.f32.mrf.mxu0
        %v2096 = vadd.f32 %v1902, %v2095
        %v2097 = vand.u32 %v1286, 4294901760
        %v2098 = vsub.f32 %v1286, %v2097
        %v2099 = vand.u32 %v2098, 4294901760
        %2100 = vmatmul.f32.gmra.mxu0 %v2099
        %v2101 = vpop.f32.mrf.mxu0
        %v2102 = vadd.f32 %v1907, %v2101
        %v2103 = vand.u32 %v1287, 4294901760
        %v2104 = vsub.f32 %v1287, %v2103
        %v2105 = vand.u32 %v2104, 4294901760
        %2106 = vmatmul.f32.gmra.mxu0 %v2105
        %v2107 = vpop.f32.mrf.mxu0
        %v2108 = vadd.f32 %v1912, %v2107
        %v2109 = vand.u32 %v1288, 4294901760
        %v2110 = vsub.f32 %v1288, %v2109
        %v2111 = vand.u32 %v2110, 4294901760
        %2112 = vmatmul.f32.gmra.mxu0 %v2111
        %v2113 = vpop.f32.mrf.mxu0
        %v2114 = vadd.f32 %v1917, %v2113
        %v2115 = vand.u32 %v1289, 4294901760
        %v2116 = vsub.f32 %v1289, %v2115
        %v2117 = vand.u32 %v2116, 4294901760
        %2118 = vmatmul.f32.gmra.mxu0 %v2117
        %v2119 = vpop.f32.mrf.mxu0
        %v2120 = vadd.f32 %v1922, %v2119
        %v2121 = vand.u32 %v1290, 4294901760
        %v2122 = vsub.f32 %v1290, %v2121
        %v2123 = vand.u32 %v2122, 4294901760
        %2124 = vmatmul.f32.gmra.mxu0 %v2123
        %v2125 = vpop.f32.mrf.mxu0
        %v2126 = vadd.f32 %v1927, %v2125
        %v2127 = vand.u32 %v1291, 4294901760
        %v2128 = vsub.f32 %v1291, %v2127
        %v2129 = vand.u32 %v2128, 4294901760
        %2130 = vmatmul.f32.gmra.mxu0 %v2129
        %v2131 = vpop.f32.mrf.mxu0
        %v2132 = vadd.f32 %v1932, %v2131
        %v2133 = vand.u32 %v1292, 4294901760
        %v2134 = vsub.f32 %v1292, %v2133
        %v2135 = vand.u32 %v2134, 4294901760
        %2136 = vmatmul.f32.gmra.mxu0 %v2135
        %v2137 = vpop.f32.mrf.mxu0
        %v2138 = vadd.f32 %v1937, %v2137
        %v2139 = vand.u32 %v1293, 4294901760
        %v2140 = vsub.f32 %v1293, %v2139
        %v2141 = vand.u32 %v2140, 4294901760
        %2142 = vmatmul.f32.gmra.mxu0 %v2141
        %v2143 = vpop.f32.mrf.mxu0
        %v2144 = vadd.f32 %v1942, %v2143
        %v2145 = vand.u32 %v1294, 4294901760
        %v2146 = vsub.f32 %v1294, %v2145
        %v2147 = vand.u32 %v2146, 4294901760
        %2148 = vmatmul.f32.gmra.mxu0 %v2147
        %v2149 = vpop.f32.mrf.mxu0
        %v2150 = vadd.f32 %v1947, %v2149
        %v2151 = vand.u32 %v1295, 4294901760
        %v2152 = vsub.f32 %v1295, %v2151
        %v2153 = vand.u32 %v2152, 4294901760
        %2154 = vmatmul.f32.gmra.mxu0 %v2153
        %v2155 = vpop.f32.mrf.mxu0
        %v2156 = vadd.f32 %v1952, %v2155
        %v2157 = vand.u32 %v1296, 4294901760
        %v2158 = vsub.f32 %v1296, %v2157
        %v2159 = vand.u32 %v2158, 4294901760
        %2160 = vmatmul.f32.gmra.mxu0 %v2159
        %v2161 = vpop.f32.mrf.mxu0
        %v2162 = vadd.f32 %v1957, %v2161
        %v2163 = vand.u32 %v1297, 4294901760
        %v2164 = vsub.f32 %v1297, %v2163
        %v2165 = vand.u32 %v2164, 4294901760
        %2166 = vmatmul.f32.gmra.mxu0 %v2165
        %v2167 = vpop.f32.mrf.mxu0
        %v2168 = vadd.f32 %v1962, %v2167
        %v2169 = vand.u32 %v1298, 4294901760
        %v2170 = vsub.f32 %v1298, %v2169
        %v2171 = vand.u32 %v2170, 4294901760
        %2172 = vmatmul.f32.gmra.mxu0 %v2171
        %v2173 = vpop.f32.mrf.mxu0
        %v2174 = vadd.f32 %v1967, %v2173
        %v2175 = vand.u32 %v1299, 4294901760
        %v2176 = vsub.f32 %v1299, %v2175
        %v2177 = vand.u32 %v2176, 4294901760
        %2178 = vmatmul.f32.gmra.mxu0 %v2177
        %v2179 = vpop.f32.mrf.mxu0
        %v2180 = vadd.f32 %v1972, %v2179
        %v2181 = vand.u32 %v1300, 4294901760
        %v2182 = vsub.f32 %v1300, %v2181
        %v2183 = vand.u32 %v2182, 4294901760
        %2184 = vmatmul.f32.gmra.mxu0 %v2183
        %v2185 = vpop.f32.mrf.mxu0
        %v2186 = vadd.f32 %v1977, %v2185
        %v2187 = vand.u32 %v1301, 4294901760
        %v2188 = vsub.f32 %v1301, %v2187
        %v2189 = vand.u32 %v2188, 4294901760
        %2190 = vmatmul.f32.gmra.mxu0 %v2189
        %v2191 = vpop.f32.mrf.mxu0
        %v2192 = vadd.f32 %v1982, %v2191
        %v2193 = vand.u32 %v1302, 4294901760
        %v2194 = vsub.f32 %v1302, %v2193
        %v2195 = vand.u32 %v2194, 4294901760
        %2196 = vmatmul.f32.gmra.mxu0 %v2195
        %v2197 = vpop.f32.mrf.mxu0
        %v2198 = vadd.f32 %v1987, %v2197
        %v2199 = vand.u32 %v1303, 4294901760
        %v2200 = vsub.f32 %v1303, %v2199
        %v2201 = vand.u32 %v2200, 4294901760
        %2202 = vmatmul.f32.gmra.mxu0 %v2201
        %v2203 = vpop.f32.mrf.mxu0
        %v2204 = vadd.f32 %v1992, %v2203
        %v2205 = vand.u32 %v1304, 4294901760
        %v2206 = vsub.f32 %v1304, %v2205
        %v2207 = vand.u32 %v2206, 4294901760
        %2208 = vmatmul.f32.gmra.mxu0 %v2207
        %v2209 = vpop.f32.mrf.mxu0
        %v2210 = vadd.f32 %v1997, %v2209
        %v2211 = vand.u32 %v1305, 4294901760
        %v2212 = vsub.f32 %v1305, %v2211
        %v2213 = vand.u32 %v2212, 4294901760
        %2214 = vmatmul.f32.gmra.mxu0 %v2213
        %v2215 = vpop.f32.mrf.mxu0
        %v2216 = vadd.f32 %v2002, %v2215
        %v2217 = vand.u32 %v1306, 4294901760
        %v2218 = vsub.f32 %v1306, %v2217
        %v2219 = vand.u32 %v2218, 4294901760
        %2220 = vmatmul.f32.gmra.mxu0 %v2219
        %v2221 = vpop.f32.mrf.mxu0
        %v2222 = vadd.f32 %v2007, %v2221
        %v2223 = vand.u32 %v1307, 4294901760
        %v2224 = vsub.f32 %v1307, %v2223
        %v2225 = vand.u32 %v2224, 4294901760
        %2226 = vmatmul.f32.gmra.mxu0 %v2225
        %v2227 = vpop.f32.mrf.mxu0
        %v2228 = vadd.f32 %v2012, %v2227
        %v2229 = vand.u32 %v1308, 4294901760
        %v2230 = vsub.f32 %v1308, %v2229
        %v2231 = vand.u32 %v2230, 4294901760
        %2232 = vmatmul.f32.gmra.mxu0 %v2231
        %v2233 = vpop.f32.mrf.mxu0
        %v2234 = vadd.f32 %v2017, %v2233
        %v2235 = vand.u32 %v1309, 4294901760
        %v2236 = vsub.f32 %v1309, %v2235
        %v2237 = vand.u32 %v2236, 4294901760
        %2238 = vmatmul.f32.gmra.mxu0 %v2237
        %v2239 = vpop.f32.mrf.mxu0
        %v2240 = vadd.f32 %v2022, %v2239
        %v2241 = vand.u32 %v1310, 4294901760
        %v2242 = vsub.f32 %v1310, %v2241
        %v2243 = vand.u32 %v2242, 4294901760
        %2244 = vmatmul.f32.gmra.mxu0 %v2243
        %v2245 = vpop.f32.mrf.mxu0
        %v2246 = vadd.f32 %v2027, %v2245
        %v2247 = vand.u32 %v1311, 4294901760
        %v2248 = vsub.f32 %v1311, %v2247
        %v2249 = vand.u32 %v2248, 4294901760
        %2250 = vmatmul.f32.gmra.mxu0 %v2249
        %v2251 = vpop.f32.mrf.mxu0
        %v2252 = vadd.f32 %v2032, %v2251
        %v2253 = vand.u32 %v1312, 4294901760
        %v2254 = vsub.f32 %v1312, %v2253
        %v2255 = vand.u32 %v2254, 4294901760
        %2256 = vmatmul.f32.gmra.mxu0 %v2255
        %v2257 = vpop.f32.mrf.mxu0
        %v2258 = vadd.f32 %v2037, %v2257
        %v2259 = vand.u32 %v1313, 4294901760
        %v2260 = vsub.f32 %v1313, %v2259
        %v2261 = vand.u32 %v2260, 4294901760
        %2262 = vmatmul.f32.gmra.mxu0 %v2261
        %v2263 = vpop.f32.mrf.mxu0
        %v2264 = vadd.f32 %v2042, %v2263
        %v2265 = vand.u32 %v1314, 4294901760
        %v2266 = vsub.f32 %v1314, %v2265
        %v2267 = vand.u32 %v2266, 4294901760
        %2268 = vmatmul.f32.gmra.mxu0 %v2267
        %v2269 = vpop.f32.mrf.mxu0
        %v2270 = vadd.f32 %v2047, %v2269
        %v2271 = vand.u32 %v1315, 4294901760
        %v2272 = vsub.f32 %v1315, %v2271
        %v2273 = vand.u32 %v2272, 4294901760
        %2274 = vmatmul.f32.gmra.mxu0 %v2273
        %v2275 = vpop.f32.mrf.mxu0
        %v2276 = vadd.f32 %v2052, %v2275
        %v2277 = vand.u32 %v1316, 4294901760
        %v2278 = vsub.f32 %v1316, %v2277
        %v2279 = vand.u32 %v2278, 4294901760
        %2280 = vmatmul.f32.gmra.mxu0 %v2279
        %v2281 = vpop.f32.mrf.mxu0
        %v2282 = vadd.f32 %v2057, %v2281
        %2283 = vdwg.mxu0
        %v2284 = vand.u32 %v1334, 4294901760
        %v2285 = vsub.f32 %v1334, %v2284
        %v2286 = vand.u32 %v2285, 4294901760
        %2287 = vmatpush.msra.mxu0 %v2286
        %v2288 = vand.u32 %v1333, 4294901760
        %v2289 = vsub.f32 %v1333, %v2288
        %v2290 = vand.u32 %v2289, 4294901760
        %2291 = vmatpush.msra.mxu0 %v2290
        %v2292 = vand.u32 %v1332, 4294901760
        %v2293 = vsub.f32 %v1332, %v2292
        %v2294 = vand.u32 %v2293, 4294901760
        %2295 = vmatpush.msra.mxu0 %v2294
        %v2296 = vand.u32 %v1331, 4294901760
        %v2297 = vsub.f32 %v1331, %v2296
        %v2298 = vand.u32 %v2297, 4294901760
        %2299 = vmatpush.msra.mxu0 %v2298
        %v2300 = vand.u32 %v1330, 4294901760
        %v2301 = vsub.f32 %v1330, %v2300
        %v2302 = vand.u32 %v2301, 4294901760
        %2303 = vmatpush.msra.mxu0 %v2302
        %v2304 = vand.u32 %v1329, 4294901760
        %v2305 = vsub.f32 %v1329, %v2304
        %v2306 = vand.u32 %v2305, 4294901760
        %2307 = vmatpush.msra.mxu0 %v2306
        %v2308 = vand.u32 %v1328, 4294901760
        %v2309 = vsub.f32 %v1328, %v2308
        %v2310 = vand.u32 %v2309, 4294901760
        %2311 = vmatpush.msra.mxu0 %v2310
        %v2312 = vand.u32 %v1327, 4294901760
        %v2313 = vsub.f32 %v1327, %v2312
        %v2314 = vand.u32 %v2313, 4294901760
        %2315 = vmatpush.msra.mxu0 %v2314
        %v2316 = vand.u32 %v1326, 4294901760
        %v2317 = vsub.f32 %v1326, %v2316
        %v2318 = vand.u32 %v2317, 4294901760
        %2319 = vmatpush.msra.mxu0 %v2318
        %v2320 = vand.u32 %v1325, 4294901760
        %v2321 = vsub.f32 %v1325, %v2320
        %v2322 = vand.u32 %v2321, 4294901760
        %2323 = vmatpush.msra.mxu0 %v2322
        %v2324 = vand.u32 %v1324, 4294901760
        %v2325 = vsub.f32 %v1324, %v2324
        %v2326 = vand.u32 %v2325, 4294901760
        %2327 = vmatpush.msra.mxu0 %v2326
        %v2328 = vand.u32 %v1323, 4294901760
        %v2329 = vsub.f32 %v1323, %v2328
        %v2330 = vand.u32 %v2329, 4294901760
        %2331 = vmatpush.msra.mxu0 %v2330
        %v2332 = vand.u32 %v1322, 4294901760
        %v2333 = vsub.f32 %v1322, %v2332
        %v2334 = vand.u32 %v2333, 4294901760
        %2335 = vmatpush.msra.mxu0 %v2334
        %v2336 = vand.u32 %v1321, 4294901760
        %v2337 = vsub.f32 %v1321, %v2336
        %v2338 = vand.u32 %v2337, 4294901760
        %2339 = vmatpush.msra.mxu0 %v2338
        %v2340 = vand.u32 %v1320, 4294901760
        %v2341 = vsub.f32 %v1320, %v2340
        %v2342 = vand.u32 %v2341, 4294901760
        %2343 = vmatpush.msra.mxu0 %v2342
        %v2344 = vand.u32 %v1319, 4294901760
        %v2345 = vsub.f32 %v1319, %v2344
        %v2346 = vand.u32 %v2345, 4294901760
        %2347 = vmatpush.msra.mxu0 %v2346
        %v2348 = vand.u32 %v1285, 4294901760
        %2349 = vmatmul.f32.gmra.mxu0 %v2348
        %v2350 = vpop.f32.mrf.mxu0
        %v2351 = vadd.f32 %v2096, %v2350
        %v2352 = vand.u32 %v1286, 4294901760
        %2353 = vmatmul.f32.gmra.mxu0 %v2352
        %v2354 = vpop.f32.mrf.mxu0
        %v2355 = vadd.f32 %v2102, %v2354
        %v2356 = vand.u32 %v1287, 4294901760
        %2357 = vmatmul.f32.gmra.mxu0 %v2356
        %v2358 = vpop.f32.mrf.mxu0
        %v2359 = vadd.f32 %v2108, %v2358
        %v2360 = vand.u32 %v1288, 4294901760
        %2361 = vmatmul.f32.gmra.mxu0 %v2360
        %v2362 = vpop.f32.mrf.mxu0
        %v2363 = vadd.f32 %v2114, %v2362
        %v2364 = vand.u32 %v1289, 4294901760
        %2365 = vmatmul.f32.gmra.mxu0 %v2364
        %v2366 = vpop.f32.mrf.mxu0
        %v2367 = vadd.f32 %v2120, %v2366
        %v2368 = vand.u32 %v1290, 4294901760
        %2369 = vmatmul.f32.gmra.mxu0 %v2368
        %v2370 = vpop.f32.mrf.mxu0
        %v2371 = vadd.f32 %v2126, %v2370
        %v2372 = vand.u32 %v1291, 4294901760
        %2373 = vmatmul.f32.gmra.mxu0 %v2372
        %v2374 = vpop.f32.mrf.mxu0
        %v2375 = vadd.f32 %v2132, %v2374
        %v2376 = vand.u32 %v1292, 4294901760
        %2377 = vmatmul.f32.gmra.mxu0 %v2376
        %v2378 = vpop.f32.mrf.mxu0
        %v2379 = vadd.f32 %v2138, %v2378
        %v2380 = vand.u32 %v1293, 4294901760
        %2381 = vmatmul.f32.gmra.mxu0 %v2380
        %v2382 = vpop.f32.mrf.mxu0
        %v2383 = vadd.f32 %v2144, %v2382
        %v2384 = vand.u32 %v1294, 4294901760
        %2385 = vmatmul.f32.gmra.mxu0 %v2384
        %v2386 = vpop.f32.mrf.mxu0
        %v2387 = vadd.f32 %v2150, %v2386
        %v2388 = vand.u32 %v1295, 4294901760
        %2389 = vmatmul.f32.gmra.mxu0 %v2388
        %v2390 = vpop.f32.mrf.mxu0
        %v2391 = vadd.f32 %v2156, %v2390
        %v2392 = vand.u32 %v1296, 4294901760
        %2393 = vmatmul.f32.gmra.mxu0 %v2392
        %v2394 = vpop.f32.mrf.mxu0
        %v2395 = vadd.f32 %v2162, %v2394
        %v2396 = vand.u32 %v1297, 4294901760
        %2397 = vmatmul.f32.gmra.mxu0 %v2396
        %v2398 = vpop.f32.mrf.mxu0
        %v2399 = vadd.f32 %v2168, %v2398
        %v2400 = vand.u32 %v1298, 4294901760
        %2401 = vmatmul.f32.gmra.mxu0 %v2400
        %v2402 = vpop.f32.mrf.mxu0
        %v2403 = vadd.f32 %v2174, %v2402
        %v2404 = vand.u32 %v1299, 4294901760
        %2405 = vmatmul.f32.gmra.mxu0 %v2404
        %v2406 = vpop.f32.mrf.mxu0
        %v2407 = vadd.f32 %v2180, %v2406
        %v2408 = vand.u32 %v1300, 4294901760
        %2409 = vmatmul.f32.gmra.mxu0 %v2408
        %v2410 = vpop.f32.mrf.mxu0
        %v2411 = vadd.f32 %v2186, %v2410
        %v2412 = vand.u32 %v1301, 4294901760
        %2413 = vmatmul.f32.gmra.mxu0 %v2412
        %v2414 = vpop.f32.mrf.mxu0
        %v2415 = vadd.f32 %v2192, %v2414
        %v2416 = vand.u32 %v1302, 4294901760
        %2417 = vmatmul.f32.gmra.mxu0 %v2416
        %v2418 = vpop.f32.mrf.mxu0
        %v2419 = vadd.f32 %v2198, %v2418
        %v2420 = vand.u32 %v1303, 4294901760
        %2421 = vmatmul.f32.gmra.mxu0 %v2420
        %v2422 = vpop.f32.mrf.mxu0
        %v2423 = vadd.f32 %v2204, %v2422
        %v2424 = vand.u32 %v1304, 4294901760
        %2425 = vmatmul.f32.gmra.mxu0 %v2424
        %v2426 = vpop.f32.mrf.mxu0
        %v2427 = vadd.f32 %v2210, %v2426
        %v2428 = vand.u32 %v1305, 4294901760
        %2429 = vmatmul.f32.gmra.mxu0 %v2428
        %v2430 = vpop.f32.mrf.mxu0
        %v2431 = vadd.f32 %v2216, %v2430
        %v2432 = vand.u32 %v1306, 4294901760
        %2433 = vmatmul.f32.gmra.mxu0 %v2432
        %v2434 = vpop.f32.mrf.mxu0
        %v2435 = vadd.f32 %v2222, %v2434
        %v2436 = vand.u32 %v1307, 4294901760
        %2437 = vmatmul.f32.gmra.mxu0 %v2436
        %v2438 = vpop.f32.mrf.mxu0
        %v2439 = vadd.f32 %v2228, %v2438
        %v2440 = vand.u32 %v1308, 4294901760
        %2441 = vmatmul.f32.gmra.mxu0 %v2440
        %v2442 = vpop.f32.mrf.mxu0
        %v2443 = vadd.f32 %v2234, %v2442
        %v2444 = vand.u32 %v1309, 4294901760
        %2445 = vmatmul.f32.gmra.mxu0 %v2444
        %v2446 = vpop.f32.mrf.mxu0
        %v2447 = vadd.f32 %v2240, %v2446
        %v2448 = vand.u32 %v1310, 4294901760
        %2449 = vmatmul.f32.gmra.mxu0 %v2448
        %v2450 = vpop.f32.mrf.mxu0
        %v2451 = vadd.f32 %v2246, %v2450
        %v2452 = vand.u32 %v1311, 4294901760
        %2453 = vmatmul.f32.gmra.mxu0 %v2452
        %v2454 = vpop.f32.mrf.mxu0
        %v2455 = vadd.f32 %v2252, %v2454
        %v2456 = vand.u32 %v1312, 4294901760
        %2457 = vmatmul.f32.gmra.mxu0 %v2456
        %v2458 = vpop.f32.mrf.mxu0
        %v2459 = vadd.f32 %v2258, %v2458
        %v2460 = vand.u32 %v1313, 4294901760
        %2461 = vmatmul.f32.gmra.mxu0 %v2460
        %v2462 = vpop.f32.mrf.mxu0
        %v2463 = vadd.f32 %v2264, %v2462
        %v2464 = vand.u32 %v1314, 4294901760
        %2465 = vmatmul.f32.gmra.mxu0 %v2464
        %v2466 = vpop.f32.mrf.mxu0
        %v2467 = vadd.f32 %v2270, %v2466
        %v2468 = vand.u32 %v1315, 4294901760
        %2469 = vmatmul.f32.gmra.mxu0 %v2468
        %v2470 = vpop.f32.mrf.mxu0
        %v2471 = vadd.f32 %v2276, %v2470
        %v2472 = vand.u32 %v1316, 4294901760
        %2473 = vmatmul.f32.gmra.mxu0 %v2472
        %v2474 = vpop.f32.mrf.mxu0
        %v2475 = vadd.f32 %v2282, %v2474
        %2476 = vdwg.mxu0
        %v2477 = vand.u32 %v1334, 4294901760
        %2478 = vmatpush.msra.mxu0 %v2477
        %v2479 = vand.u32 %v1333, 4294901760
        %2480 = vmatpush.msra.mxu0 %v2479
        %v2481 = vand.u32 %v1332, 4294901760
        %2482 = vmatpush.msra.mxu0 %v2481
        %v2483 = vand.u32 %v1331, 4294901760
        %2484 = vmatpush.msra.mxu0 %v2483
        %v2485 = vand.u32 %v1330, 4294901760
        %2486 = vmatpush.msra.mxu0 %v2485
        %v2487 = vand.u32 %v1329, 4294901760
        %2488 = vmatpush.msra.mxu0 %v2487
        %v2489 = vand.u32 %v1328, 4294901760
        %2490 = vmatpush.msra.mxu0 %v2489
        %v2491 = vand.u32 %v1327, 4294901760
        %2492 = vmatpush.msra.mxu0 %v2491
        %v2493 = vand.u32 %v1326, 4294901760
        %2494 = vmatpush.msra.mxu0 %v2493
        %v2495 = vand.u32 %v1325, 4294901760
        %2496 = vmatpush.msra.mxu0 %v2495
        %v2497 = vand.u32 %v1324, 4294901760
        %2498 = vmatpush.msra.mxu0 %v2497
        %v2499 = vand.u32 %v1323, 4294901760
        %2500 = vmatpush.msra.mxu0 %v2499
        %v2501 = vand.u32 %v1322, 4294901760
        %2502 = vmatpush.msra.mxu0 %v2501
        %v2503 = vand.u32 %v1321, 4294901760
        %2504 = vmatpush.msra.mxu0 %v2503
        %v2505 = vand.u32 %v1320, 4294901760
        %2506 = vmatpush.msra.mxu0 %v2505
        %v2507 = vand.u32 %v1319, 4294901760
        %2508 = vmatpush.msra.mxu0 %v2507
        %v2509 = vand.u32 %v1285, 4294901760
        %2510 = vmatmul.f32.gmra.mxu0 %v2509
        %v2511 = vpop.f32.mrf.mxu0
        %v2512 = vadd.f32 %v2351, %v2511
        %v2513 = vand.u32 %v1286, 4294901760
        %2514 = vmatmul.f32.gmra.mxu0 %v2513
        %v2515 = vpop.f32.mrf.mxu0
        %v2516 = vadd.f32 %v2355, %v2515
        %v2517 = vand.u32 %v1287, 4294901760
        %2518 = vmatmul.f32.gmra.mxu0 %v2517
        %v2519 = vpop.f32.mrf.mxu0
        %v2520 = vadd.f32 %v2359, %v2519
        %v2521 = vand.u32 %v1288, 4294901760
        %2522 = vmatmul.f32.gmra.mxu0 %v2521
        %v2523 = vpop.f32.mrf.mxu0
        %v2524 = vadd.f32 %v2363, %v2523
        %v2525 = vand.u32 %v1289, 4294901760
        %2526 = vmatmul.f32.gmra.mxu0 %v2525
        %v2527 = vpop.f32.mrf.mxu0
        %v2528 = vadd.f32 %v2367, %v2527
        %v2529 = vand.u32 %v1290, 4294901760
        %2530 = vmatmul.f32.gmra.mxu0 %v2529
        %v2531 = vpop.f32.mrf.mxu0
        %v2532 = vadd.f32 %v2371, %v2531
        %v2533 = vand.u32 %v1291, 4294901760
        %2534 = vmatmul.f32.gmra.mxu0 %v2533
        %v2535 = vpop.f32.mrf.mxu0
        %v2536 = vadd.f32 %v2375, %v2535
        %v2537 = vand.u32 %v1292, 4294901760
        %2538 = vmatmul.f32.gmra.mxu0 %v2537
        %v2539 = vpop.f32.mrf.mxu0
        %v2540 = vadd.f32 %v2379, %v2539
        %v2541 = vand.u32 %v1293, 4294901760
        %2542 = vmatmul.f32.gmra.mxu0 %v2541
        %v2543 = vpop.f32.mrf.mxu0
        %v2544 = vadd.f32 %v2383, %v2543
        %v2545 = vand.u32 %v1294, 4294901760
        %2546 = vmatmul.f32.gmra.mxu0 %v2545
        %v2547 = vpop.f32.mrf.mxu0
        %v2548 = vadd.f32 %v2387, %v2547
        %v2549 = vand.u32 %v1295, 4294901760
        %2550 = vmatmul.f32.gmra.mxu0 %v2549
        %v2551 = vpop.f32.mrf.mxu0
        %v2552 = vadd.f32 %v2391, %v2551
        %v2553 = vand.u32 %v1296, 4294901760
        %2554 = vmatmul.f32.gmra.mxu0 %v2553
        %v2555 = vpop.f32.mrf.mxu0
        %v2556 = vadd.f32 %v2395, %v2555
        %v2557 = vand.u32 %v1297, 4294901760
        %2558 = vmatmul.f32.gmra.mxu0 %v2557
        %v2559 = vpop.f32.mrf.mxu0
        %v2560 = vadd.f32 %v2399, %v2559
        %v2561 = vand.u32 %v1298, 4294901760
        %2562 = vmatmul.f32.gmra.mxu0 %v2561
        %v2563 = vpop.f32.mrf.mxu0
        %v2564 = vadd.f32 %v2403, %v2563
        %v2565 = vand.u32 %v1299, 4294901760
        %2566 = vmatmul.f32.gmra.mxu0 %v2565
        %v2567 = vpop.f32.mrf.mxu0
        %v2568 = vadd.f32 %v2407, %v2567
        %v2569 = vand.u32 %v1300, 4294901760
        %2570 = vmatmul.f32.gmra.mxu0 %v2569
        %v2571 = vpop.f32.mrf.mxu0
        %v2572 = vadd.f32 %v2411, %v2571
        %v2573 = vand.u32 %v1301, 4294901760
        %2574 = vmatmul.f32.gmra.mxu0 %v2573
        %v2575 = vpop.f32.mrf.mxu0
        %v2576 = vadd.f32 %v2415, %v2575
        %v2577 = vand.u32 %v1302, 4294901760
        %2578 = vmatmul.f32.gmra.mxu0 %v2577
        %v2579 = vpop.f32.mrf.mxu0
        %v2580 = vadd.f32 %v2419, %v2579
        %v2581 = vand.u32 %v1303, 4294901760
        %2582 = vmatmul.f32.gmra.mxu0 %v2581
        %v2583 = vpop.f32.mrf.mxu0
        %v2584 = vadd.f32 %v2423, %v2583
        %v2585 = vand.u32 %v1304, 4294901760
        %2586 = vmatmul.f32.gmra.mxu0 %v2585
        %v2587 = vpop.f32.mrf.mxu0
        %v2588 = vadd.f32 %v2427, %v2587
        %v2589 = vand.u32 %v1305, 4294901760
        %2590 = vmatmul.f32.gmra.mxu0 %v2589
        %v2591 = vpop.f32.mrf.mxu0
        %v2592 = vadd.f32 %v2431, %v2591
        %v2593 = vand.u32 %v1306, 4294901760
        %2594 = vmatmul.f32.gmra.mxu0 %v2593
        %v2595 = vpop.f32.mrf.mxu0
        %v2596 = vadd.f32 %v2435, %v2595
        %v2597 = vand.u32 %v1307, 4294901760
        %2598 = vmatmul.f32.gmra.mxu0 %v2597
        %v2599 = vpop.f32.mrf.mxu0
        %v2600 = vadd.f32 %v2439, %v2599
        %v2601 = vand.u32 %v1308, 4294901760
        %2602 = vmatmul.f32.gmra.mxu0 %v2601
        %v2603 = vpop.f32.mrf.mxu0
        %v2604 = vadd.f32 %v2443, %v2603
        %v2605 = vand.u32 %v1309, 4294901760
        %2606 = vmatmul.f32.gmra.mxu0 %v2605
        %v2607 = vpop.f32.mrf.mxu0
        %v2608 = vadd.f32 %v2447, %v2607
        %v2609 = vand.u32 %v1310, 4294901760
        %2610 = vmatmul.f32.gmra.mxu0 %v2609
        %v2611 = vpop.f32.mrf.mxu0
        %v2612 = vadd.f32 %v2451, %v2611
        %v2613 = vand.u32 %v1311, 4294901760
        %2614 = vmatmul.f32.gmra.mxu0 %v2613
        %v2615 = vpop.f32.mrf.mxu0
        %v2616 = vadd.f32 %v2455, %v2615
        %v2617 = vand.u32 %v1312, 4294901760
        %2618 = vmatmul.f32.gmra.mxu0 %v2617
        %v2619 = vpop.f32.mrf.mxu0
        %v2620 = vadd.f32 %v2459, %v2619
        %v2621 = vand.u32 %v1313, 4294901760
        %2622 = vmatmul.f32.gmra.mxu0 %v2621
        %v2623 = vpop.f32.mrf.mxu0
        %v2624 = vadd.f32 %v2463, %v2623
        %v2625 = vand.u32 %v1314, 4294901760
        %2626 = vmatmul.f32.gmra.mxu0 %v2625
        %v2627 = vpop.f32.mrf.mxu0
        %v2628 = vadd.f32 %v2467, %v2627
        %v2629 = vand.u32 %v1315, 4294901760
        %2630 = vmatmul.f32.gmra.mxu0 %v2629
        %v2631 = vpop.f32.mrf.mxu0
        %v2632 = vadd.f32 %v2471, %v2631
        %v2633 = vand.u32 %v1316, 4294901760
        %2634 = vmatmul.f32.gmra.mxu0 %v2633
        %v2635 = vpop.f32.mrf.mxu0
        %v2636 = vadd.f32 %v2475, %v2635
        %2637 = vdwg.mxu0
        %v2638 = vmax.f32 %v2512, 0.0
        %v2639 = vmax.f32 %v2516, 0.0
        %v2640 = vmax.f32 %v2520, 0.0
        %v2641 = vmax.f32 %v2524, 0.0
        %v2642 = vmax.f32 %v2528, 0.0
        %v2643 = vmax.f32 %v2532, 0.0
        %v2644 = vmax.f32 %v2536, 0.0
        %v2645 = vmax.f32 %v2540, 0.0
        %v2646 = vmax.f32 %v2544, 0.0
        %v2647 = vmax.f32 %v2548, 0.0
        %v2648 = vmax.f32 %v2552, 0.0
        %v2649 = vmax.f32 %v2556, 0.0
        %v2650 = vmax.f32 %v2560, 0.0
        %v2651 = vmax.f32 %v2564, 0.0
        %v2652 = vmax.f32 %v2568, 0.0
        %v2653 = vmax.f32 %v2572, 0.0
        %v2654 = vmax.f32 %v2576, 0.0
        %v2655 = vmax.f32 %v2580, 0.0
        %v2656 = vmax.f32 %v2584, 0.0
        %v2657 = vmax.f32 %v2588, 0.0
        %v2658 = vmax.f32 %v2592, 0.0
        %v2659 = vmax.f32 %v2596, 0.0
        %v2660 = vmax.f32 %v2600, 0.0
        %v2661 = vmax.f32 %v2604, 0.0
        %v2662 = vmax.f32 %v2608, 0.0
        %v2663 = vmax.f32 %v2612, 0.0
        %v2664 = vmax.f32 %v2616, 0.0
        %v2665 = vmax.f32 %v2620, 0.0
        %v2666 = vmax.f32 %v2624, 0.0
        %v2667 = vmax.f32 %v2628, 0.0
        %v2668 = vmax.f32 %v2632, 0.0
        %v2669 = vmax.f32 %v2636, 0.0
        %vm2670 = vcmask 523264
        %2671 = vst.msk [vmem:[#allocation3] sm:$0xff] %vm2670, 0.0
        %2672 = vst.msk [vmem:[#allocation3 + $0x8] sm:$0xff] %vm2670, 0.0
        %2673 = vst.msk [vmem:[#allocation3 + $0x10] sm:$0xff] %vm2670, 0.0
        %2674 = vst.msk [vmem:[#allocation3 + $0x18] sm:$0xff] %vm2670, 0.0
        %s2675 = scalar_lea.vmem [#allocation3], 544
        %2676 = vst.msk [vmem:[%s2675] sm:$0xff] %vm2670, 0.0
        %2677 = vst.msk [vmem:[%s2675 + $0x8] sm:$0xff] %vm2670, 0.0
        %2678 = vst.msk [vmem:[%s2675 + $0x10] sm:$0xff] %vm2670, 0.0
        %2679 = vst.msk [vmem:[%s2675 + $0x18] sm:$0xff] %vm2670, 0.0
        %s2680 = scalar_lea.vmem [#allocation3], 32
        %2681 = vst.msk [vmem:[%s2680] sm:$0xff] %vm2670, 0.0
        %2682 = vst.msk [vmem:[%s2680 + $0x20] sm:$0xff] %vm2670, 0.0
        %2683 = vst.msk [vmem:[%s2680 + $0x40] sm:$0xff] %vm2670, 0.0
        %2684 = vst.msk [vmem:[%s2680 + $0x60] sm:$0xff] %vm2670, 0.0
        %2685 = vst.msk [vmem:[%s2680 + $0x80] sm:$0xff] %vm2670, 0.0
        %2686 = vst.msk [vmem:[%s2680 + $0xa0] sm:$0xff] %vm2670, 0.0
        %2687 = vst.msk [vmem:[%s2680 + $0xc0] sm:$0xff] %vm2670, 0.0
        %2688 = vst.msk [vmem:[%s2680 + $0xe0] sm:$0xff] %vm2670, 0.0
        %2689 = vst.msk [vmem:[%s2680 + $0x100] sm:$0xff] %vm2670, 0.0
        %2690 = vst.msk [vmem:[%s2680 + $0x120] sm:$0xff] %vm2670, 0.0
        %2691 = vst.msk [vmem:[%s2680 + $0x140] sm:$0xff] %vm2670, 0.0
        %2692 = vst.msk [vmem:[%s2680 + $0x160] sm:$0xff] %vm2670, 0.0
        %2693 = vst.msk [vmem:[%s2680 + $0x180] sm:$0xff] %vm2670, 0.0
        %2694 = vst.msk [vmem:[%s2680 + $0x1a0] sm:$0xff] %vm2670, 0.0
        %2695 = vst.msk [vmem:[%s2680 + $0x1c0] sm:$0xff] %vm2670, 0.0
        %2696 = vst.msk [vmem:[%s2680 + $0x1e0] sm:$0xff] %vm2670, 0.0
        %2697 = vst.msk [vmem:[%s2680 + $0x18] sm:$0xff] %vm2670, 0.0
        %2698 = vst.msk [vmem:[%s2680 + $0x38] sm:$0xff] %vm2670, 0.0
        %2699 = vst.msk [vmem:[%s2680 + $0x58] sm:$0xff] %vm2670, 0.0
        %2700 = vst.msk [vmem:[%s2680 + $0x78] sm:$0xff] %vm2670, 0.0
        %2701 = vst.msk [vmem:[%s2680 + $0x98] sm:$0xff] %vm2670, 0.0
        %2702 = vst.msk [vmem:[%s2680 + $0xb8] sm:$0xff] %vm2670, 0.0
        %2703 = vst.msk [vmem:[%s2680 + $0xd8] sm:$0xff] %vm2670, 0.0
        %2704 = vst.msk [vmem:[%s2680 + $0xf8] sm:$0xff] %vm2670, 0.0
        %2705 = vst.msk [vmem:[%s2680 + $0x118] sm:$0xff] %vm2670, 0.0
        %2706 = vst.msk [vmem:[%s2680 + $0x138] sm:$0xff] %vm2670, 0.0
        %2707 = vst.msk [vmem:[%s2680 + $0x158] sm:$0xff] %vm2670, 0.0
        %2708 = vst.msk [vmem:[%s2680 + $0x178] sm:$0xff] %vm2670, 0.0
        %2709 = vst.msk [vmem:[%s2680 + $0x198] sm:$0xff] %vm2670, 0.0
        %2710 = vst.msk [vmem:[%s2680 + $0x1b8] sm:$0xff] %vm2670, 0.0
        %2711 = vst.msk [vmem:[%s2680 + $0x1d8] sm:$0xff] %vm2670, 0.0
        %2712 = vst.msk [vmem:[%s2680 + $0x1f8] sm:$0xff] %vm2670, 0.0
        %2713 = vst.msk [vmem:[%s2680 + $0x8] sm:$0xff] %vm2670, %v2638
        %2714 = vst.msk [vmem:[%s2680 + $0x10] sm:$0xff] %vm2670, %v2639
        %2715 = vst.msk [vmem:[%s2680 + $0x28] sm:$0xff] %vm2670, %v2640
        %2716 = vst.msk [vmem:[%s2680 + $0x30] sm:$0xff] %vm2670, %v2641
        %2717 = vst.msk [vmem:[%s2680 + $0x48] sm:$0xff] %vm2670, %v2642
        %2718 = vst.msk [vmem:[%s2680 + $0x50] sm:$0xff] %vm2670, %v2643
        %2719 = vst.msk [vmem:[%s2680 + $0x68] sm:$0xff] %vm2670, %v2644
        %2720 = vst.msk [vmem:[%s2680 + $0x70] sm:$0xff] %vm2670, %v2645
        %2721 = vst.msk [vmem:[%s2680 + $0x88] sm:$0xff] %vm2670, %v2646
        %2722 = vst.msk [vmem:[%s2680 + $0x90] sm:$0xff] %vm2670, %v2647
        %2723 = vst.msk [vmem:[%s2680 + $0xa8] sm:$0xff] %vm2670, %v2648
        %2724 = vst.msk [vmem:[%s2680 + $0xb0] sm:$0xff] %vm2670, %v2649
        %2725 = vst.msk [vmem:[%s2680 + $0xc8] sm:$0xff] %vm2670, %v2650
        %2726 = vst.msk [vmem:[%s2680 + $0xd0] sm:$0xff] %vm2670, %v2651
        %2727 = vst.msk [vmem:[%s2680 + $0xe8] sm:$0xff] %vm2670, %v2652
        %2728 = vst.msk [vmem:[%s2680 + $0xf0] sm:$0xff] %vm2670, %v2653
        %2729 = vst.msk [vmem:[%s2680 + $0x108] sm:$0xff] %vm2670, %v2654
        %2730 = vst.msk [vmem:[%s2680 + $0x110] sm:$0xff] %vm2670, %v2655
        %2731 = vst.msk [vmem:[%s2680 + $0x128] sm:$0xff] %vm2670, %v2656
        %2732 = vst.msk [vmem:[%s2680 + $0x130] sm:$0xff] %vm2670, %v2657
        %2733 = vst.msk [vmem:[%s2680 + $0x148] sm:$0xff] %vm2670, %v2658
        %2734 = vst.msk [vmem:[%s2680 + $0x150] sm:$0xff] %vm2670, %v2659
        %2735 = vst.msk [vmem:[%s2680 + $0x168] sm:$0xff] %vm2670, %v2660
        %2736 = vst.msk [vmem:[%s2680 + $0x170] sm:$0xff] %vm2670, %v2661
        %2737 = vst.msk [vmem:[%s2680 + $0x188] sm:$0xff] %vm2670, %v2662
        %2738 = vst.msk [vmem:[%s2680 + $0x190] sm:$0xff] %vm2670, %v2663
        %2739 = vst.msk [vmem:[%s2680 + $0x1a8] sm:$0xff] %vm2670, %v2664
        %2740 = vst.msk [vmem:[%s2680 + $0x1b0] sm:$0xff] %vm2670, %v2665
        %2741 = vst.msk [vmem:[%s2680 + $0x1c8] sm:$0xff] %vm2670, %v2666
        %2742 = vst.msk [vmem:[%s2680 + $0x1d0] sm:$0xff] %vm2670, %v2667
        %2743 = vst.msk [vmem:[%s2680 + $0x1e8] sm:$0xff] %vm2670, %v2668
        %2744 = vst.msk [vmem:[%s2680 + $0x1f0] sm:$0xff] %vm2670, %v2669
        %v2745 = vld [vmem:[%s2680 + $0x7] sm:$0xff]
        %v2746 = vld [vmem:[%s2680 + $0xf] sm:$0xff]
        %v2747 = vld [vmem:[%s2680 + $0x27] sm:$0xff]
        %v2748 = vld [vmem:[%s2680 + $0x2f] sm:$0xff]
        %v2749 = vld [vmem:[%s2680 + $0x47] sm:$0xff]
        %v2750 = vld [vmem:[%s2680 + $0x4f] sm:$0xff]
        %v2751 = vld [vmem:[%s2680 + $0x67] sm:$0xff]
        %v2752 = vld [vmem:[%s2680 + $0x6f] sm:$0xff]
        %v2753 = vld [vmem:[%s2680 + $0x87] sm:$0xff]
        %v2754 = vld [vmem:[%s2680 + $0x8f] sm:$0xff]
        %v2755 = vld [vmem:[%s2680 + $0xa7] sm:$0xff]
        %v2756 = vld [vmem:[%s2680 + $0xaf] sm:$0xff]
        %v2757 = vld [vmem:[%s2680 + $0xc7] sm:$0xff]
        %v2758 = vld [vmem:[%s2680 + $0xcf] sm:$0xff]
        %v2759 = vld [vmem:[%s2680 + $0xe7] sm:$0xff]
        %v2760 = vld [vmem:[%s2680 + $0xef] sm:$0xff]
        %v2761 = vld [vmem:[%s2680 + $0x107] sm:$0xff]
        %v2762 = vld [vmem:[%s2680 + $0x10f] sm:$0xff]
        %v2763 = vld [vmem:[%s2680 + $0x127] sm:$0xff]
        %v2764 = vld [vmem:[%s2680 + $0x12f] sm:$0xff]
        %v2765 = vld [vmem:[%s2680 + $0x147] sm:$0xff]
        %v2766 = vld [vmem:[%s2680 + $0x14f] sm:$0xff]
        %v2767 = vld [vmem:[%s2680 + $0x167] sm:$0xff]
        %v2768 = vld [vmem:[%s2680 + $0x16f] sm:$0xff]
        %v2769 = vld [vmem:[%s2680 + $0x187] sm:$0xff]
        %v2770 = vld [vmem:[%s2680 + $0x18f] sm:$0xff]
        %v2771 = vld [vmem:[%s2680 + $0x1a7] sm:$0xff]
        %v2772 = vld [vmem:[%s2680 + $0x1af] sm:$0xff]
        %v2773 = vld [vmem:[%s2680 + $0x1c7] sm:$0xff]
        %v2774 = vld [vmem:[%s2680 + $0x1cf] sm:$0xff]
        %v2775 = vld [vmem:[%s2680 + $0x1e7] sm:$0xff]
        %v2776 = vld [vmem:[%s2680 + $0x1ef] sm:$0xff]
        %v2777 = vld [vmem:[%s2680 + $0x9] sm:$0xff]
        %v2778 = vld [vmem:[%s2680 + $0x11] sm:$0xff]
        %v2779 = vld [vmem:[%s2680 + $0x29] sm:$0xff]
        %v2780 = vld [vmem:[%s2680 + $0x31] sm:$0xff]
        %v2781 = vld [vmem:[%s2680 + $0x49] sm:$0xff]
        %v2782 = vld [vmem:[%s2680 + $0x51] sm:$0xff]
        %v2783 = vld [vmem:[%s2680 + $0x69] sm:$0xff]
        %v2784 = vld [vmem:[%s2680 + $0x71] sm:$0xff]
        %v2785 = vld [vmem:[%s2680 + $0x89] sm:$0xff]
        %v2786 = vld [vmem:[%s2680 + $0x91] sm:$0xff]
        %v2787 = vld [vmem:[%s2680 + $0xa9] sm:$0xff]
        %v2788 = vld [vmem:[%s2680 + $0xb1] sm:$0xff]
        %v2789 = vld [vmem:[%s2680 + $0xc9] sm:$0xff]
        %v2790 = vld [vmem:[%s2680 + $0xd1] sm:$0xff]
        %v2791 = vld [vmem:[%s2680 + $0xe9] sm:$0xff]
        %v2792 = vld [vmem:[%s2680 + $0xf1] sm:$0xff]
        %v2793 = vld [vmem:[%s2680 + $0x109] sm:$0xff]
        %v2794 = vld [vmem:[%s2680 + $0x111] sm:$0xff]
        %v2795 = vld [vmem:[%s2680 + $0x129] sm:$0xff]
        %v2796 = vld [vmem:[%s2680 + $0x131] sm:$0xff]
        %v2797 = vld [vmem:[%s2680 + $0x149] sm:$0xff]
        %v2798 = vld [vmem:[%s2680 + $0x151] sm:$0xff]
        %v2799 = vld [vmem:[%s2680 + $0x169] sm:$0xff]
        %v2800 = vld [vmem:[%s2680 + $0x171] sm:$0xff]
        %v2801 = vld [vmem:[%s2680 + $0x189] sm:$0xff]
        %v2802 = vld [vmem:[%s2680 + $0x191] sm:$0xff]
        %v2803 = vld [vmem:[%s2680 + $0x1a9] sm:$0xff]
        %v2804 = vld [vmem:[%s2680 + $0x1b1] sm:$0xff]
        %v2805 = vld [vmem:[%s2680 + $0x1c9] sm:$0xff]
        %v2806 = vld [vmem:[%s2680 + $0x1d1] sm:$0xff]
        %v2807 = vld [vmem:[%s2680 + $0x1e9] sm:$0xff]
        %v2808 = vld [vmem:[%s2680 + $0x1f1] sm:$0xff]
        %v2809 = vld [vmem:[#allocation3 + $0x8] sm:$0xff]
        %v2810 = vld [vmem:[#allocation3 + $0x10] sm:$0xff]
        %v2811 = vld [vmem:[#allocation3 + $0x28] sm:$0xff]
        %v2812 = vld [vmem:[#allocation3 + $0x30] sm:$0xff]
        %v2813 = vld [vmem:[#allocation3 + $0x48] sm:$0xff]
        %v2814 = vld [vmem:[#allocation3 + $0x50] sm:$0xff]
        %v2815 = vld [vmem:[#allocation3 + $0x68] sm:$0xff]
        %v2816 = vld [vmem:[#allocation3 + $0x70] sm:$0xff]
        %v2817 = vld [vmem:[#allocation3 + $0x88] sm:$0xff]
        %v2818 = vld [vmem:[#allocation3 + $0x90] sm:$0xff]
        %v2819 = vld [vmem:[#allocation3 + $0xa8] sm:$0xff]
        %v2820 = vld [vmem:[#allocation3 + $0xb0] sm:$0xff]
        %v2821 = vld [vmem:[#allocation3 + $0xc8] sm:$0xff]
        %v2822 = vld [vmem:[#allocation3 + $0xd0] sm:$0xff]
        %v2823 = vld [vmem:[#allocation3 + $0xe8] sm:$0xff]
        %v2824 = vld [vmem:[#allocation3 + $0xf0] sm:$0xff]
        %v2825 = vld [vmem:[#allocation3 + $0x108] sm:$0xff]
        %v2826 = vld [vmem:[#allocation3 + $0x110] sm:$0xff]
        %v2827 = vld [vmem:[#allocation3 + $0x128] sm:$0xff]
        %v2828 = vld [vmem:[#allocation3 + $0x130] sm:$0xff]
        %v2829 = vld [vmem:[#allocation3 + $0x148] sm:$0xff]
        %v2830 = vld [vmem:[#allocation3 + $0x150] sm:$0xff]
        %v2831 = vld [vmem:[#allocation3 + $0x168] sm:$0xff]
        %v2832 = vld [vmem:[#allocation3 + $0x170] sm:$0xff]
        %v2833 = vld [vmem:[#allocation3 + $0x188] sm:$0xff]
        %v2834 = vld [vmem:[#allocation3 + $0x190] sm:$0xff]
        %v2835 = vld [vmem:[#allocation3 + $0x1a8] sm:$0xff]
        %v2836 = vld [vmem:[#allocation3 + $0x1b0] sm:$0xff]
        %v2837 = vld [vmem:[#allocation3 + $0x1c8] sm:$0xff]
        %v2838 = vld [vmem:[#allocation3 + $0x1d0] sm:$0xff]
        %v2839 = vld [vmem:[#allocation3 + $0x1e8] sm:$0xff]
        %v2840 = vld [vmem:[#allocation3 + $0x1f0] sm:$0xff]
        %s2841 = scalar_lea.vmem [#allocation3], 64
        %v2842 = vld [vmem:[%s2841 + $0x8] sm:$0xff]
        %v2843 = vld [vmem:[%s2841 + $0x10] sm:$0xff]
        %v2844 = vld [vmem:[%s2841 + $0x28] sm:$0xff]
        %v2845 = vld [vmem:[%s2841 + $0x30] sm:$0xff]
        %v2846 = vld [vmem:[%s2841 + $0x48] sm:$0xff]
        %v2847 = vld [vmem:[%s2841 + $0x50] sm:$0xff]
        %v2848 = vld [vmem:[%s2841 + $0x68] sm:$0xff]
        %v2849 = vld [vmem:[%s2841 + $0x70] sm:$0xff]
        %v2850 = vld [vmem:[%s2841 + $0x88] sm:$0xff]
        %v2851 = vld [vmem:[%s2841 + $0x90] sm:$0xff]
        %v2852 = vld [vmem:[%s2841 + $0xa8] sm:$0xff]
        %v2853 = vld [vmem:[%s2841 + $0xb0] sm:$0xff]
        %v2854 = vld [vmem:[%s2841 + $0xc8] sm:$0xff]
        %v2855 = vld [vmem:[%s2841 + $0xd0] sm:$0xff]
        %v2856 = vld [vmem:[%s2841 + $0xe8] sm:$0xff]
        %v2857 = vld [vmem:[%s2841 + $0xf0] sm:$0xff]
        %v2858 = vld [vmem:[%s2841 + $0x108] sm:$0xff]
        %v2859 = vld [vmem:[%s2841 + $0x110] sm:$0xff]
        %v2860 = vld [vmem:[%s2841 + $0x128] sm:$0xff]
        %v2861 = vld [vmem:[%s2841 + $0x130] sm:$0xff]
        %v2862 = vld [vmem:[%s2841 + $0x148] sm:$0xff]
        %v2863 = vld [vmem:[%s2841 + $0x150] sm:$0xff]
        %v2864 = vld [vmem:[%s2841 + $0x168] sm:$0xff]
        %v2865 = vld [vmem:[%s2841 + $0x170] sm:$0xff]
        %v2866 = vld [vmem:[%s2841 + $0x188] sm:$0xff]
        %v2867 = vld [vmem:[%s2841 + $0x190] sm:$0xff]
        %v2868 = vld [vmem:[%s2841 + $0x1a8] sm:$0xff]
        %v2869 = vld [vmem:[%s2841 + $0x1b0] sm:$0xff]
        %v2870 = vld [vmem:[%s2841 + $0x1c8] sm:$0xff]
        %v2871 = vld [vmem:[%s2841 + $0x1d0] sm:$0xff]
        %v2872 = vld [vmem:[%s2841 + $0x1e8] sm:$0xff]
        %v2873 = vld [vmem:[%s2841 + $0x1f0] sm:$0xff]
        %v2875 = vrot.slane %v1317, 3
        %v2877 = vadd.f32 %v1317, %v2875
        %v2878 = vrot.slane %v1317, 5
        %v2880 = vadd.f32 %v2877, %v2878
        %v2881 = vperm.slane %v2880, 2
        %v2882 = vmul.f32 %v2638, %v2881
        %v2883 = vmul.f32 %v2639, %v2881
        %v2884 = vmul.f32 %v2640, %v2881
        %v2885 = vmul.f32 %v2641, %v2881
        %v2886 = vmul.f32 %v2642, %v2881
        %v2887 = vmul.f32 %v2643, %v2881
        %v2888 = vmul.f32 %v2644, %v2881
        %v2889 = vmul.f32 %v2645, %v2881
        %v2890 = vmul.f32 %v2646, %v2881
        %v2891 = vmul.f32 %v2647, %v2881
        %v2892 = vmul.f32 %v2648, %v2881
        %v2893 = vmul.f32 %v2649, %v2881
        %v2894 = vmul.f32 %v2650, %v2881
        %v2895 = vmul.f32 %v2651, %v2881
        %v2896 = vmul.f32 %v2652, %v2881
        %v2897 = vmul.f32 %v2653, %v2881
        %v2898 = vmul.f32 %v2654, %v2881
        %v2899 = vmul.f32 %v2655, %v2881
        %v2900 = vmul.f32 %v2656, %v2881
        %v2901 = vmul.f32 %v2657, %v2881
        %v2902 = vmul.f32 %v2658, %v2881
        %v2903 = vmul.f32 %v2659, %v2881
        %v2904 = vmul.f32 %v2660, %v2881
        %v2905 = vmul.f32 %v2661, %v2881
        %v2906 = vmul.f32 %v2662, %v2881
        %v2907 = vmul.f32 %v2663, %v2881
        %v2908 = vmul.f32 %v2664, %v2881
        %v2909 = vmul.f32 %v2665, %v2881
        %v2910 = vmul.f32 %v2666, %v2881
        %v2911 = vmul.f32 %v2667, %v2881
        %v2912 = vmul.f32 %v2668, %v2881
        %v2913 = vmul.f32 %v2669, %v2881
        %v2914 = vperm.slane %v1318, 0
        %v2915 = vadd.f32 %v2882, %v2914
        %v2916 = vadd.f32 %v2883, %v2914
        %v2917 = vadd.f32 %v2884, %v2914
        %v2918 = vadd.f32 %v2885, %v2914
        %v2919 = vadd.f32 %v2886, %v2914
        %v2920 = vadd.f32 %v2887, %v2914
        %v2921 = vadd.f32 %v2888, %v2914
        %v2922 = vadd.f32 %v2889, %v2914
        %v2923 = vadd.f32 %v2890, %v2914
        %v2924 = vadd.f32 %v2891, %v2914
        %v2925 = vadd.f32 %v2892, %v2914
        %v2926 = vadd.f32 %v2893, %v2914
        %v2927 = vadd.f32 %v2894, %v2914
        %v2928 = vadd.f32 %v2895, %v2914
        %v2929 = vadd.f32 %v2896, %v2914
        %v2930 = vadd.f32 %v2897, %v2914
        %v2931 = vadd.f32 %v2898, %v2914
        %v2932 = vadd.f32 %v2899, %v2914
        %v2933 = vadd.f32 %v2900, %v2914
        %v2934 = vadd.f32 %v2901, %v2914
        %v2935 = vadd.f32 %v2902, %v2914
        %v2936 = vadd.f32 %v2903, %v2914
        %v2937 = vadd.f32 %v2904, %v2914
        %v2938 = vadd.f32 %v2905, %v2914
        %v2939 = vadd.f32 %v2906, %v2914
        %v2940 = vadd.f32 %v2907, %v2914
        %v2941 = vadd.f32 %v2908, %v2914
        %v2942 = vadd.f32 %v2909, %v2914
        %v2943 = vadd.f32 %v2910, %v2914
        %v2944 = vadd.f32 %v2911, %v2914
        %v2945 = vadd.f32 %v2912, %v2914
        %v2946 = vadd.f32 %v2913, %v2914
        %v2947 = vperm.slane %v1317, 1
        %v2948 = vmul.f32 %v2745, %v2947
        %v2949 = vmul.f32 %v2746, %v2947
        %v2950 = vmul.f32 %v2747, %v2947
        %v2951 = vmul.f32 %v2748, %v2947
        %v2952 = vmul.f32 %v2749, %v2947
        %v2953 = vmul.f32 %v2750, %v2947
        %v2954 = vmul.f32 %v2751, %v2947
        %v2955 = vmul.f32 %v2752, %v2947
        %v2956 = vmul.f32 %v2753, %v2947
        %v2957 = vmul.f32 %v2754, %v2947
        %v2958 = vmul.f32 %v2755, %v2947
        %v2959 = vmul.f32 %v2756, %v2947
        %v2960 = vmul.f32 %v2757, %v2947
        %v2961 = vmul.f32 %v2758, %v2947
        %v2962 = vmul.f32 %v2759, %v2947
        %v2963 = vmul.f32 %v2760, %v2947
        %v2964 = vmul.f32 %v2761, %v2947
        %v2965 = vmul.f32 %v2762, %v2947
        %v2966 = vmul.f32 %v2763, %v2947
        %v2967 = vmul.f32 %v2764, %v2947
        %v2968 = vmul.f32 %v2765, %v2947
        %v2969 = vmul.f32 %v2766, %v2947
        %v2970 = vmul.f32 %v2767, %v2947
        %v2971 = vmul.f32 %v2768, %v2947
        %v2972 = vmul.f32 %v2769, %v2947
        %v2973 = vmul.f32 %v2770, %v2947
        %v2974 = vmul.f32 %v2771, %v2947
        %v2975 = vmul.f32 %v2772, %v2947
        %v2976 = vmul.f32 %v2773, %v2947
        %v2977 = vmul.f32 %v2774, %v2947
        %v2978 = vmul.f32 %v2775, %v2947
        %v2979 = vmul.f32 %v2776, %v2947
        %v2980 = vadd.f32 %v2915, %v2948
        %v2981 = vadd.f32 %v2916, %v2949
        %v2982 = vadd.f32 %v2917, %v2950
        %v2983 = vadd.f32 %v2918, %v2951
        %v2984 = vadd.f32 %v2919, %v2952
        %v2985 = vadd.f32 %v2920, %v2953
        %v2986 = vadd.f32 %v2921, %v2954
        %v2987 = vadd.f32 %v2922, %v2955
        %v2988 = vadd.f32 %v2923, %v2956
        %v2989 = vadd.f32 %v2924, %v2957
        %v2990 = vadd.f32 %v2925, %v2958
        %v2991 = vadd.f32 %v2926, %v2959
        %v2992 = vadd.f32 %v2927, %v2960
        %v2993 = vadd.f32 %v2928, %v2961
        %v2994 = vadd.f32 %v2929, %v2962
        %v2995 = vadd.f32 %v2930, %v2963
        %v2996 = vadd.f32 %v2931, %v2964
        %v2997 = vadd.f32 %v2932, %v2965
        %v2998 = vadd.f32 %v2933, %v2966
        %v2999 = vadd.f32 %v2934, %v2967
        %v3000 = vadd.f32 %v2935, %v2968
        %v3001 = vadd.f32 %v2936, %v2969
        %v3002 = vadd.f32 %v2937, %v2970
        %v3003 = vadd.f32 %v2938, %v2971
        %v3004 = vadd.f32 %v2939, %v2972
        %v3005 = vadd.f32 %v2940, %v2973
        %v3006 = vadd.f32 %v2941, %v2974
        %v3007 = vadd.f32 %v2942, %v2975
        %v3008 = vadd.f32 %v2943, %v2976
        %v3009 = vadd.f32 %v2944, %v2977
        %v3010 = vadd.f32 %v2945, %v2978
        %v3011 = vadd.f32 %v2946, %v2979
        %v3012 = vperm.slane %v1317, 3
        %v3013 = vmul.f32 %v2777, %v3012
        %v3014 = vmul.f32 %v2778, %v3012
        %v3015 = vmul.f32 %v2779, %v3012
        %v3016 = vmul.f32 %v2780, %v3012
        %v3017 = vmul.f32 %v2781, %v3012
        %v3018 = vmul.f32 %v2782, %v3012
        %v3019 = vmul.f32 %v2783, %v3012
        %v3020 = vmul.f32 %v2784, %v3012
        %v3021 = vmul.f32 %v2785, %v3012
        %v3022 = vmul.f32 %v2786, %v3012
        %v3023 = vmul.f32 %v2787, %v3012
        %v3024 = vmul.f32 %v2788, %v3012
        %v3025 = vmul.f32 %v2789, %v3012
        %v3026 = vmul.f32 %v2790, %v3012
        %v3027 = vmul.f32 %v2791, %v3012
        %v3028 = vmul.f32 %v2792, %v3012
        %v3029 = vmul.f32 %v2793, %v3012
        %v3030 = vmul.f32 %v2794, %v3012
        %v3031 = vmul.f32 %v2795, %v3012
        %v3032 = vmul.f32 %v2796, %v3012
        %v3033 = vmul.f32 %v2797, %v3012
        %v3034 = vmul.f32 %v2798, %v3012
        %v3035 = vmul.f32 %v2799, %v3012
        %v3036 = vmul.f32 %v2800, %v3012
        %v3037 = vmul.f32 %v2801, %v3012
        %v3038 = vmul.f32 %v2802, %v3012
        %v3039 = vmul.f32 %v2803, %v3012
        %v3040 = vmul.f32 %v2804, %v3012
        %v3041 = vmul.f32 %v2805, %v3012
        %v3042 = vmul.f32 %v2806, %v3012
        %v3043 = vmul.f32 %v2807, %v3012
        %v3044 = vmul.f32 %v2808, %v3012
        %v3045 = vadd.f32 %v2980, %v3013
        %v3046 = vadd.f32 %v2981, %v3014
        %v3047 = vadd.f32 %v2982, %v3015
        %v3048 = vadd.f32 %v2983, %v3016
        %v3049 = vadd.f32 %v2984, %v3017
        %v3050 = vadd.f32 %v2985, %v3018
        %v3051 = vadd.f32 %v2986, %v3019
        %v3052 = vadd.f32 %v2987, %v3020
        %v3053 = vadd.f32 %v2988, %v3021
        %v3054 = vadd.f32 %v2989, %v3022
        %v3055 = vadd.f32 %v2990, %v3023
        %v3056 = vadd.f32 %v2991, %v3024
        %v3057 = vadd.f32 %v2992, %v3025
        %v3058 = vadd.f32 %v2993, %v3026
        %v3059 = vadd.f32 %v2994, %v3027
        %v3060 = vadd.f32 %v2995, %v3028
        %v3061 = vadd.f32 %v2996, %v3029
        %v3062 = vadd.f32 %v2997, %v3030
        %v3063 = vadd.f32 %v2998, %v3031
        %v3064 = vadd.f32 %v2999, %v3032
        %v3065 = vadd.f32 %v3000, %v3033
        %v3066 = vadd.f32 %v3001, %v3034
        %v3067 = vadd.f32 %v3002, %v3035
        %v3068 = vadd.f32 %v3003, %v3036
        %v3069 = vadd.f32 %v3004, %v3037
        %v3070 = vadd.f32 %v3005, %v3038
        %v3071 = vadd.f32 %v3006, %v3039
        %v3072 = vadd.f32 %v3007, %v3040
        %v3073 = vadd.f32 %v3008, %v3041
        %v3074 = vadd.f32 %v3009, %v3042
        %v3075 = vadd.f32 %v3010, %v3043
        %v3076 = vadd.f32 %v3011, %v3044
        %v3077 = vperm.slane %v1317, 4
        %v3078 = vmul.f32 %v2809, %v3077
        %v3079 = vmul.f32 %v2810, %v3077
        %v3080 = vmul.f32 %v2811, %v3077
        %v3081 = vmul.f32 %v2812, %v3077
        %v3082 = vmul.f32 %v2813, %v3077
        %v3083 = vmul.f32 %v2814, %v3077
        %v3084 = vmul.f32 %v2815, %v3077
        %v3085 = vmul.f32 %v2816, %v3077
        %v3086 = vmul.f32 %v2817, %v3077
        %v3087 = vmul.f32 %v2818, %v3077
        %v3088 = vmul.f32 %v2819, %v3077
        %v3089 = vmul.f32 %v2820, %v3077
        %v3090 = vmul.f32 %v2821, %v3077
        %v3091 = vmul.f32 %v2822, %v3077
        %v3092 = vmul.f32 %v2823, %v3077
        %v3093 = vmul.f32 %v2824, %v3077
        %v3094 = vmul.f32 %v2825, %v3077
        %v3095 = vmul.f32 %v2826, %v3077
        %v3096 = vmul.f32 %v2827, %v3077
        %v3097 = vmul.f32 %v2828, %v3077
        %v3098 = vmul.f32 %v2829, %v3077
        %v3099 = vmul.f32 %v2830, %v3077
        %v3100 = vmul.f32 %v2831, %v3077
        %v3101 = vmul.f32 %v2832, %v3077
        %v3102 = vmul.f32 %v2833, %v3077
        %v3103 = vmul.f32 %v2834, %v3077
        %v3104 = vmul.f32 %v2835, %v3077
        %v3105 = vmul.f32 %v2836, %v3077
        %v3106 = vmul.f32 %v2837, %v3077
        %v3107 = vmul.f32 %v2838, %v3077
        %v3108 = vmul.f32 %v2839, %v3077
        %v3109 = vmul.f32 %v2840, %v3077
        %v3110 = vadd.f32 %v3045, %v3078
        %v3111 = vadd.f32 %v3046, %v3079
        %v3112 = vadd.f32 %v3047, %v3080
        %v3113 = vadd.f32 %v3048, %v3081
        %v3114 = vadd.f32 %v3049, %v3082
        %v3115 = vadd.f32 %v3050, %v3083
        %v3116 = vadd.f32 %v3051, %v3084
        %v3117 = vadd.f32 %v3052, %v3085
        %v3118 = vadd.f32 %v3053, %v3086
        %v3119 = vadd.f32 %v3054, %v3087
        %v3120 = vadd.f32 %v3055, %v3088
        %v3121 = vadd.f32 %v3056, %v3089
        %v3122 = vadd.f32 %v3057, %v3090
        %v3123 = vadd.f32 %v3058, %v3091
        %v3124 = vadd.f32 %v3059, %v3092
        %v3125 = vadd.f32 %v3060, %v3093
        %v3126 = vadd.f32 %v3061, %v3094
        %v3127 = vadd.f32 %v3062, %v3095
        %v3128 = vadd.f32 %v3063, %v3096
        %v3129 = vadd.f32 %v3064, %v3097
        %v3130 = vadd.f32 %v3065, %v3098
        %v3131 = vadd.f32 %v3066, %v3099
        %v3132 = vadd.f32 %v3067, %v3100
        %v3133 = vadd.f32 %v3068, %v3101
        %v3134 = vadd.f32 %v3069, %v3102
        %v3135 = vadd.f32 %v3070, %v3103
        %v3136 = vadd.f32 %v3071, %v3104
        %v3137 = vadd.f32 %v3072, %v3105
        %v3138 = vadd.f32 %v3073, %v3106
        %v3139 = vadd.f32 %v3074, %v3107
        %v3140 = vadd.f32 %v3075, %v3108
        %v3141 = vadd.f32 %v3076, %v3109
        %v3142 = vperm.slane %v1317, 6
        %v3143 = vmul.f32 %v2842, %v3142
        %v3144 = vmul.f32 %v2843, %v3142
        %v3145 = vmul.f32 %v2844, %v3142
        %v3146 = vmul.f32 %v2845, %v3142
        %v3147 = vmul.f32 %v2846, %v3142
        %v3148 = vmul.f32 %v2847, %v3142
        %v3149 = vmul.f32 %v2848, %v3142
        %v3150 = vmul.f32 %v2849, %v3142
        %v3151 = vmul.f32 %v2850, %v3142
        %v3152 = vmul.f32 %v2851, %v3142
        %v3153 = vmul.f32 %v2852, %v3142
        %v3154 = vmul.f32 %v2853, %v3142
        %v3155 = vmul.f32 %v2854, %v3142
        %v3156 = vmul.f32 %v2855, %v3142
        %v3157 = vmul.f32 %v2856, %v3142
        %v3158 = vmul.f32 %v2857, %v3142
        %v3159 = vmul.f32 %v2858, %v3142
        %v3160 = vmul.f32 %v2859, %v3142
        %v3161 = vmul.f32 %v2860, %v3142
        %v3162 = vmul.f32 %v2861, %v3142
        %v3163 = vmul.f32 %v2862, %v3142
        %v3164 = vmul.f32 %v2863, %v3142
        %v3165 = vmul.f32 %v2864, %v3142
        %v3166 = vmul.f32 %v2865, %v3142
        %v3167 = vmul.f32 %v2866, %v3142
        %v3168 = vmul.f32 %v2867, %v3142
        %v3169 = vmul.f32 %v2868, %v3142
        %v3170 = vmul.f32 %v2869, %v3142
        %v3171 = vmul.f32 %v2870, %v3142
        %v3172 = vmul.f32 %v2871, %v3142
        %v3173 = vmul.f32 %v2872, %v3142
        %v3174 = vmul.f32 %v2873, %v3142
        %v3175 = vadd.f32 %v3110, %v3143
        %v3176 = vadd.f32 %v3111, %v3144
        %v3177 = vadd.f32 %v3112, %v3145
        %v3178 = vadd.f32 %v3113, %v3146
        %v3179 = vadd.f32 %v3114, %v3147
        %v3180 = vadd.f32 %v3115, %v3148
        %v3181 = vadd.f32 %v3116, %v3149
        %v3182 = vadd.f32 %v3117, %v3150
        %v3183 = vadd.f32 %v3118, %v3151
        %v3184 = vadd.f32 %v3119, %v3152
        %v3185 = vadd.f32 %v3120, %v3153
        %v3186 = vadd.f32 %v3121, %v3154
        %v3187 = vadd.f32 %v3122, %v3155
        %v3188 = vadd.f32 %v3123, %v3156
        %v3189 = vadd.f32 %v3124, %v3157
        %v3190 = vadd.f32 %v3125, %v3158
        %v3191 = vadd.f32 %v3126, %v3159
        %v3192 = vadd.f32 %v3127, %v3160
        %v3193 = vadd.f32 %v3128, %v3161
        %v3194 = vadd.f32 %v3129, %v3162
        %v3195 = vadd.f32 %v3130, %v3163
        %v3196 = vadd.f32 %v3131, %v3164
        %v3197 = vadd.f32 %v3132, %v3165
        %v3198 = vadd.f32 %v3133, %v3166
        %v3199 = vadd.f32 %v3134, %v3167
        %v3200 = vadd.f32 %v3135, %v3168
        %v3201 = vadd.f32 %v3136, %v3169
        %v3202 = vadd.f32 %v3137, %v3170
        %v3203 = vadd.f32 %v3138, %v3171
        %v3204 = vadd.f32 %v3139, %v3172
        %v3205 = vadd.f32 %v3140, %v3173
        %v3206 = vadd.f32 %v3141, %v3174
        %v3207 = vmax.f32 %v3175, 0.0
        %v3208 = vmax.f32 %v3176, 0.0
        %v3209 = vmax.f32 %v3177, 0.0
        %v3210 = vmax.f32 %v3178, 0.0
        %v3211 = vmax.f32 %v3179, 0.0
        %v3212 = vmax.f32 %v3180, 0.0
        %v3213 = vmax.f32 %v3181, 0.0
        %v3214 = vmax.f32 %v3182, 0.0
        %v3215 = vmax.f32 %v3183, 0.0
        %v3216 = vmax.f32 %v3184, 0.0
        %v3217 = vmax.f32 %v3185, 0.0
        %v3218 = vmax.f32 %v3186, 0.0
        %v3219 = vmax.f32 %v3187, 0.0
        %v3220 = vmax.f32 %v3188, 0.0
        %v3221 = vmax.f32 %v3189, 0.0
        %v3222 = vmax.f32 %v3190, 0.0
        %v3223 = vmax.f32 %v3191, 0.0
        %v3224 = vmax.f32 %v3192, 0.0
        %v3225 = vmax.f32 %v3193, 0.0
        %v3226 = vmax.f32 %v3194, 0.0
        %v3227 = vmax.f32 %v3195, 0.0
        %v3228 = vmax.f32 %v3196, 0.0
        %v3229 = vmax.f32 %v3197, 0.0
        %v3230 = vmax.f32 %v3198, 0.0
        %v3231 = vmax.f32 %v3199, 0.0
        %v3232 = vmax.f32 %v3200, 0.0
        %v3233 = vmax.f32 %v3201, 0.0
        %v3234 = vmax.f32 %v3202, 0.0
        %v3235 = vmax.f32 %v3203, 0.0
        %v3236 = vmax.f32 %v3204, 0.0
        %v3237 = vmax.f32 %v3205, 0.0
        %v3238 = vmax.f32 %v3206, 0.0
        %v3239 = vld [vmem:[%s4] sm:$0xff]
        %v3240 = vld [vmem:[%s4 + $0x8] sm:$0xff]
        %v3241 = vld [vmem:[%s4 + $0x10] sm:$0xff]
        %v3242 = vld [vmem:[%s4 + $0x18] sm:$0xff]
        %v3243 = vld [vmem:[%s4 + $0x20] sm:$0xff]
        %v3244 = vld [vmem:[%s4 + $0x28] sm:$0xff]
        %v3245 = vld [vmem:[%s4 + $0x30] sm:$0xff]
        %v3246 = vld [vmem:[%s4 + $0x38] sm:$0xff]
        %v3247 = vperm.slane %v548, 2
        %v3249 = vsel %vm2670, %v3207, 0
        %v3252 = vsel %vm2670, %v3208, 0
        %v3255 = vsel %vm2670, %v3209, 0
        %v3258 = vsel %vm2670, %v3210, 0
        %v3261 = vsel %vm2670, %v3211, 0
        %v3264 = vsel %vm2670, %v3212, 0
        %v3267 = vsel %vm2670, %v3213, 0
        %v3270 = vsel %vm2670, %v3214, 0
        %v3273 = vsel %vm2670, %v3215, 0
        %v3276 = vsel %vm2670, %v3216, 0
        %v3279 = vsel %vm2670, %v3217, 0
        %v3282 = vsel %vm2670, %v3218, 0
        %v3285 = vsel %vm2670, %v3219, 0
        %v3288 = vsel %vm2670, %v3220, 0
        %v3291 = vsel %vm2670, %v3221, 0
        %v3294 = vsel %vm2670, %v3222, 0
        %v3297 = vsel %vm2670, %v3223, 0
        %v3300 = vsel %vm2670, %v3224, 0
        %v3303 = vsel %vm2670, %v3225, 0
        %v3306 = vsel %vm2670, %v3226, 0
        %v3309 = vsel %vm2670, %v3227, 0
        %v3312 = vsel %vm2670, %v3228, 0
        %v3315 = vsel %vm2670, %v3229, 0
        %v3318 = vsel %vm2670, %v3230, 0
        %v3321 = vsel %vm2670, %v3231, 0
        %v3324 = vsel %vm2670, %v3232, 0
        %v3327 = vsel %vm2670, %v3233, 0
        %v3330 = vsel %vm2670, %v3234, 0
        %v3333 = vsel %vm2670, %v3235, 0
        %v3336 = vsel %vm2670, %v3236, 0
        %v3339 = vsel %vm2670, %v3237, 0
        %v3342 = vsel %vm2670, %v3238, 0
        %3344 = vmatpush.msra.mxu0 0.0
        %3345 = vmatpush.msra.mxu0 0.0
        %3346 = vmatpush.msra.mxu0 0.0
        %3347 = vmatpush.msra.mxu0 0.0
        %3348 = vmatpush.msra.mxu0 0.0
        %3349 = vmatpush.msra.mxu0 0.0
        %3350 = vmatpush.msra.mxu0 0.0
        %3351 = vmatpush.msra.mxu0 0.0
        %v3352 = vand.u32 %v3246, 4294901760
        %3353 = vmatpush.msra.mxu0 %v3352
        %v3354 = vand.u32 %v3245, 4294901760
        %3355 = vmatpush.msra.mxu0 %v3354
        %v3356 = vand.u32 %v3244, 4294901760
        %3357 = vmatpush.msra.mxu0 %v3356
        %v3358 = vand.u32 %v3243, 4294901760
        %3359 = vmatpush.msra.mxu0 %v3358
        %v3360 = vand.u32 %v3242, 4294901760
        %3361 = vmatpush.msra.mxu0 %v3360
        %v3362 = vand.u32 %v3241, 4294901760
        %3363 = vmatpush.msra.mxu0 %v3362
        %v3364 = vand.u32 %v3240, 4294901760
        %3365 = vmatpush.msra.mxu0 %v3364
        %v3366 = vand.u32 %v3239, 4294901760
        %3367 = vmatpush.msra.mxu0 %v3366
        %v3368 = vand.u32 %v3249, 4294901760
        %v3369 = vsub.f32 %v3249, %v3368
        %v3370 = vand.u32 %v3369, 4294901760
        %v3371 = vsub.f32 %v3369, %v3370
        %v3372 = vand.u32 %v3371, 4294901760
        %3373 = vmatmul.f32.gmra.mxu0 %v3372
        %v3374 = vpop.f32.mrf.mxu0
        %v3375 = vadd.f32 %v3247, %v3374
        %v3376 = vand.u32 %v3252, 4294901760
        %v3377 = vsub.f32 %v3252, %v3376
        %v3378 = vand.u32 %v3377, 4294901760
        %v3379 = vsub.f32 %v3377, %v3378
        %v3380 = vand.u32 %v3379, 4294901760
        %3381 = vmatmul.f32.gmra.mxu0 %v3380
        %v3382 = vpop.f32.mrf.mxu0
        %v3383 = vadd.f32 %v3247, %v3382
        %v3384 = vand.u32 %v3255, 4294901760
        %v3385 = vsub.f32 %v3255, %v3384
        %v3386 = vand.u32 %v3385, 4294901760
        %v3387 = vsub.f32 %v3385, %v3386
        %v3388 = vand.u32 %v3387, 4294901760
        %3389 = vmatmul.f32.gmra.mxu0 %v3388
        %v3390 = vpop.f32.mrf.mxu0
        %v3391 = vadd.f32 %v3247, %v3390
        %v3392 = vand.u32 %v3258, 4294901760
        %v3393 = vsub.f32 %v3258, %v3392
        %v3394 = vand.u32 %v3393, 4294901760
        %v3395 = vsub.f32 %v3393, %v3394
        %v3396 = vand.u32 %v3395, 4294901760
        %3397 = vmatmul.f32.gmra.mxu0 %v3396
        %v3398 = vpop.f32.mrf.mxu0
        %v3399 = vadd.f32 %v3247, %v3398
        %v3400 = vand.u32 %v3261, 4294901760
        %v3401 = vsub.f32 %v3261, %v3400
        %v3402 = vand.u32 %v3401, 4294901760
        %v3403 = vsub.f32 %v3401, %v3402
        %v3404 = vand.u32 %v3403, 4294901760
        %3405 = vmatmul.f32.gmra.mxu0 %v3404
        %v3406 = vpop.f32.mrf.mxu0
        %v3407 = vadd.f32 %v3247, %v3406
        %v3408 = vand.u32 %v3264, 4294901760
        %v3409 = vsub.f32 %v3264, %v3408
        %v3410 = vand.u32 %v3409, 4294901760
        %v3411 = vsub.f32 %v3409, %v3410
        %v3412 = vand.u32 %v3411, 4294901760
        %3413 = vmatmul.f32.gmra.mxu0 %v3412
        %v3414 = vpop.f32.mrf.mxu0
        %v3415 = vadd.f32 %v3247, %v3414
        %v3416 = vand.u32 %v3267, 4294901760
        %v3417 = vsub.f32 %v3267, %v3416
        %v3418 = vand.u32 %v3417, 4294901760
        %v3419 = vsub.f32 %v3417, %v3418
        %v3420 = vand.u32 %v3419, 4294901760
        %3421 = vmatmul.f32.gmra.mxu0 %v3420
        %v3422 = vpop.f32.mrf.mxu0
        %v3423 = vadd.f32 %v3247, %v3422
        %v3424 = vand.u32 %v3270, 4294901760
        %v3425 = vsub.f32 %v3270, %v3424
        %v3426 = vand.u32 %v3425, 4294901760
        %v3427 = vsub.f32 %v3425, %v3426
        %v3428 = vand.u32 %v3427, 4294901760
        %3429 = vmatmul.f32.gmra.mxu0 %v3428
        %v3430 = vpop.f32.mrf.mxu0
        %v3431 = vadd.f32 %v3247, %v3430
        %v3432 = vand.u32 %v3273, 4294901760
        %v3433 = vsub.f32 %v3273, %v3432
        %v3434 = vand.u32 %v3433, 4294901760
        %v3435 = vsub.f32 %v3433, %v3434
        %v3436 = vand.u32 %v3435, 4294901760
        %3437 = vmatmul.f32.gmra.mxu0 %v3436
        %v3438 = vpop.f32.mrf.mxu0
        %v3439 = vadd.f32 %v3247, %v3438
        %v3440 = vand.u32 %v3276, 4294901760
        %v3441 = vsub.f32 %v3276, %v3440
        %v3442 = vand.u32 %v3441, 4294901760
        %v3443 = vsub.f32 %v3441, %v3442
        %v3444 = vand.u32 %v3443, 4294901760
        %3445 = vmatmul.f32.gmra.mxu0 %v3444
        %v3446 = vpop.f32.mrf.mxu0
        %v3447 = vadd.f32 %v3247, %v3446
        %v3448 = vand.u32 %v3279, 4294901760
        %v3449 = vsub.f32 %v3279, %v3448
        %v3450 = vand.u32 %v3449, 4294901760
        %v3451 = vsub.f32 %v3449, %v3450
        %v3452 = vand.u32 %v3451, 4294901760
        %3453 = vmatmul.f32.gmra.mxu0 %v3452
        %v3454 = vpop.f32.mrf.mxu0
        %v3455 = vadd.f32 %v3247, %v3454
        %v3456 = vand.u32 %v3282, 4294901760
        %v3457 = vsub.f32 %v3282, %v3456
        %v3458 = vand.u32 %v3457, 4294901760
        %v3459 = vsub.f32 %v3457, %v3458
        %v3460 = vand.u32 %v3459, 4294901760
        %3461 = vmatmul.f32.gmra.mxu0 %v3460
        %v3462 = vpop.f32.mrf.mxu0
        %v3463 = vadd.f32 %v3247, %v3462
        %v3464 = vand.u32 %v3285, 4294901760
        %v3465 = vsub.f32 %v3285, %v3464
        %v3466 = vand.u32 %v3465, 4294901760
        %v3467 = vsub.f32 %v3465, %v3466
        %v3468 = vand.u32 %v3467, 4294901760
        %3469 = vmatmul.f32.gmra.mxu0 %v3468
        %v3470 = vpop.f32.mrf.mxu0
        %v3471 = vadd.f32 %v3247, %v3470
        %v3472 = vand.u32 %v3288, 4294901760
        %v3473 = vsub.f32 %v3288, %v3472
        %v3474 = vand.u32 %v3473, 4294901760
        %v3475 = vsub.f32 %v3473, %v3474
        %v3476 = vand.u32 %v3475, 4294901760
        %3477 = vmatmul.f32.gmra.mxu0 %v3476
        %v3478 = vpop.f32.mrf.mxu0
        %v3479 = vadd.f32 %v3247, %v3478
        %v3480 = vand.u32 %v3291, 4294901760
        %v3481 = vsub.f32 %v3291, %v3480
        %v3482 = vand.u32 %v3481, 4294901760
        %v3483 = vsub.f32 %v3481, %v3482
        %v3484 = vand.u32 %v3483, 4294901760
        %3485 = vmatmul.f32.gmra.mxu0 %v3484
        %v3486 = vpop.f32.mrf.mxu0
        %v3487 = vadd.f32 %v3247, %v3486
        %v3488 = vand.u32 %v3294, 4294901760
        %v3489 = vsub.f32 %v3294, %v3488
        %v3490 = vand.u32 %v3489, 4294901760
        %v3491 = vsub.f32 %v3489, %v3490
        %v3492 = vand.u32 %v3491, 4294901760
        %3493 = vmatmul.f32.gmra.mxu0 %v3492
        %v3494 = vpop.f32.mrf.mxu0
        %v3495 = vadd.f32 %v3247, %v3494
        %v3496 = vand.u32 %v3297, 4294901760
        %v3497 = vsub.f32 %v3297, %v3496
        %v3498 = vand.u32 %v3497, 4294901760
        %v3499 = vsub.f32 %v3497, %v3498
        %v3500 = vand.u32 %v3499, 4294901760
        %3501 = vmatmul.f32.gmra.mxu0 %v3500
        %v3502 = vpop.f32.mrf.mxu0
        %v3503 = vadd.f32 %v3247, %v3502
        %v3504 = vand.u32 %v3300, 4294901760
        %v3505 = vsub.f32 %v3300, %v3504
        %v3506 = vand.u32 %v3505, 4294901760
        %v3507 = vsub.f32 %v3505, %v3506
        %v3508 = vand.u32 %v3507, 4294901760
        %3509 = vmatmul.f32.gmra.mxu0 %v3508
        %v3510 = vpop.f32.mrf.mxu0
        %v3511 = vadd.f32 %v3247, %v3510
        %v3512 = vand.u32 %v3303, 4294901760
        %v3513 = vsub.f32 %v3303, %v3512
        %v3514 = vand.u32 %v3513, 4294901760
        %v3515 = vsub.f32 %v3513, %v3514
        %v3516 = vand.u32 %v3515, 4294901760
        %3517 = vmatmul.f32.gmra.mxu0 %v3516
        %v3518 = vpop.f32.mrf.mxu0
        %v3519 = vadd.f32 %v3247, %v3518
        %v3520 = vand.u32 %v3306, 4294901760
        %v3521 = vsub.f32 %v3306, %v3520
        %v3522 = vand.u32 %v3521, 4294901760
        %v3523 = vsub.f32 %v3521, %v3522
        %v3524 = vand.u32 %v3523, 4294901760
        %3525 = vmatmul.f32.gmra.mxu0 %v3524
        %v3526 = vpop.f32.mrf.mxu0
        %v3527 = vadd.f32 %v3247, %v3526
        %v3528 = vand.u32 %v3309, 4294901760
        %v3529 = vsub.f32 %v3309, %v3528
        %v3530 = vand.u32 %v3529, 4294901760
        %v3531 = vsub.f32 %v3529, %v3530
        %v3532 = vand.u32 %v3531, 4294901760
        %3533 = vmatmul.f32.gmra.mxu0 %v3532
        %v3534 = vpop.f32.mrf.mxu0
        %v3535 = vadd.f32 %v3247, %v3534
        %v3536 = vand.u32 %v3312, 4294901760
        %v3537 = vsub.f32 %v3312, %v3536
        %v3538 = vand.u32 %v3537, 4294901760
        %v3539 = vsub.f32 %v3537, %v3538
        %v3540 = vand.u32 %v3539, 4294901760
        %3541 = vmatmul.f32.gmra.mxu0 %v3540
        %v3542 = vpop.f32.mrf.mxu0
        %v3543 = vadd.f32 %v3247, %v3542
        %v3544 = vand.u32 %v3315, 4294901760
        %v3545 = vsub.f32 %v3315, %v3544
        %v3546 = vand.u32 %v3545, 4294901760
        %v3547 = vsub.f32 %v3545, %v3546
        %v3548 = vand.u32 %v3547, 4294901760
        %3549 = vmatmul.f32.gmra.mxu0 %v3548
        %v3550 = vpop.f32.mrf.mxu0
        %v3551 = vadd.f32 %v3247, %v3550
        %v3552 = vand.u32 %v3318, 4294901760
        %v3553 = vsub.f32 %v3318, %v3552
        %v3554 = vand.u32 %v3553, 4294901760
        %v3555 = vsub.f32 %v3553, %v3554
        %v3556 = vand.u32 %v3555, 4294901760
        %3557 = vmatmul.f32.gmra.mxu0 %v3556
        %v3558 = vpop.f32.mrf.mxu0
        %v3559 = vadd.f32 %v3247, %v3558
        %v3560 = vand.u32 %v3321, 4294901760
        %v3561 = vsub.f32 %v3321, %v3560
        %v3562 = vand.u32 %v3561, 4294901760
        %v3563 = vsub.f32 %v3561, %v3562
        %v3564 = vand.u32 %v3563, 4294901760
        %3565 = vmatmul.f32.gmra.mxu0 %v3564
        %v3566 = vpop.f32.mrf.mxu0
        %v3567 = vadd.f32 %v3247, %v3566
        %v3568 = vand.u32 %v3324, 4294901760
        %v3569 = vsub.f32 %v3324, %v3568
        %v3570 = vand.u32 %v3569, 4294901760
        %v3571 = vsub.f32 %v3569, %v3570
        %v3572 = vand.u32 %v3571, 4294901760
        %3573 = vmatmul.f32.gmra.mxu0 %v3572
        %v3574 = vpop.f32.mrf.mxu0
        %v3575 = vadd.f32 %v3247, %v3574
        %v3576 = vand.u32 %v3327, 4294901760
        %v3577 = vsub.f32 %v3327, %v3576
        %v3578 = vand.u32 %v3577, 4294901760
        %v3579 = vsub.f32 %v3577, %v3578
        %v3580 = vand.u32 %v3579, 4294901760
        %3581 = vmatmul.f32.gmra.mxu0 %v3580
        %v3582 = vpop.f32.mrf.mxu0
        %v3583 = vadd.f32 %v3247, %v3582
        %v3584 = vand.u32 %v3330, 4294901760
        %v3585 = vsub.f32 %v3330, %v3584
        %v3586 = vand.u32 %v3585, 4294901760
        %v3587 = vsub.f32 %v3585, %v3586
        %v3588 = vand.u32 %v3587, 4294901760
        %3589 = vmatmul.f32.gmra.mxu0 %v3588
        %v3590 = vpop.f32.mrf.mxu0
        %v3591 = vadd.f32 %v3247, %v3590
        %v3592 = vand.u32 %v3333, 4294901760
        %v3593 = vsub.f32 %v3333, %v3592
        %v3594 = vand.u32 %v3593, 4294901760
        %v3595 = vsub.f32 %v3593, %v3594
        %v3596 = vand.u32 %v3595, 4294901760
        %3597 = vmatmul.f32.gmra.mxu0 %v3596
        %v3598 = vpop.f32.mrf.mxu0
        %v3599 = vadd.f32 %v3247, %v3598
        %v3600 = vand.u32 %v3336, 4294901760
        %v3601 = vsub.f32 %v3336, %v3600
        %v3602 = vand.u32 %v3601, 4294901760
        %v3603 = vsub.f32 %v3601, %v3602
        %v3604 = vand.u32 %v3603, 4294901760
        %3605 = vmatmul.f32.gmra.mxu0 %v3604
        %v3606 = vpop.f32.mrf.mxu0
        %v3607 = vadd.f32 %v3247, %v3606
        %v3608 = vand.u32 %v3339, 4294901760
        %v3609 = vsub.f32 %v3339, %v3608
        %v3610 = vand.u32 %v3609, 4294901760
        %v3611 = vsub.f32 %v3609, %v3610
        %v3612 = vand.u32 %v3611, 4294901760
        %3613 = vmatmul.f32.gmra.mxu0 %v3612
        %v3614 = vpop.f32.mrf.mxu0
        %v3615 = vadd.f32 %v3247, %v3614
        %v3616 = vand.u32 %v3342, 4294901760
        %v3617 = vsub.f32 %v3342, %v3616
        %v3618 = vand.u32 %v3617, 4294901760
        %v3619 = vsub.f32 %v3617, %v3618
        %v3620 = vand.u32 %v3619, 4294901760
        %3621 = vmatmul.f32.gmra.mxu0 %v3620
        %v3622 = vpop.f32.mrf.mxu0
        %v3623 = vadd.f32 %v3247, %v3622
        %3624 = vdwg.mxu0
        %3625 = vmatpush.msra.mxu0 0.0
        %3626 = vmatpush.msra.mxu0 0.0
        %3627 = vmatpush.msra.mxu0 0.0
        %3628 = vmatpush.msra.mxu0 0.0
        %3629 = vmatpush.msra.mxu0 0.0
        %3630 = vmatpush.msra.mxu0 0.0
        %3631 = vmatpush.msra.mxu0 0.0
        %3632 = vmatpush.msra.mxu0 0.0
        %v3633 = vand.u32 %v3246, 4294901760
        %v3634 = vsub.f32 %v3246, %v3633
        %v3635 = vand.u32 %v3634, 4294901760
        %v3636 = vsub.f32 %v3634, %v3635
        %v3637 = vand.u32 %v3636, 4294901760
        %3638 = vmatpush.msra.mxu0 %v3637
        %v3639 = vand.u32 %v3245, 4294901760
        %v3640 = vsub.f32 %v3245, %v3639
        %v3641 = vand.u32 %v3640, 4294901760
        %v3642 = vsub.f32 %v3640, %v3641
        %v3643 = vand.u32 %v3642, 4294901760
        %3644 = vmatpush.msra.mxu0 %v3643
        %v3645 = vand.u32 %v3244, 4294901760
        %v3646 = vsub.f32 %v3244, %v3645
        %v3647 = vand.u32 %v3646, 4294901760
        %v3648 = vsub.f32 %v3646, %v3647
        %v3649 = vand.u32 %v3648, 4294901760
        %3650 = vmatpush.msra.mxu0 %v3649
        %v3651 = vand.u32 %v3243, 4294901760
        %v3652 = vsub.f32 %v3243, %v3651
        %v3653 = vand.u32 %v3652, 4294901760
        %v3654 = vsub.f32 %v3652, %v3653
        %v3655 = vand.u32 %v3654, 4294901760
        %3656 = vmatpush.msra.mxu0 %v3655
        %v3657 = vand.u32 %v3242, 4294901760
        %v3658 = vsub.f32 %v3242, %v3657
        %v3659 = vand.u32 %v3658, 4294901760
        %v3660 = vsub.f32 %v3658, %v3659
        %v3661 = vand.u32 %v3660, 4294901760
        %3662 = vmatpush.msra.mxu0 %v3661
        %v3663 = vand.u32 %v3241, 4294901760
        %v3664 = vsub.f32 %v3241, %v3663
        %v3665 = vand.u32 %v3664, 4294901760
        %v3666 = vsub.f32 %v3664, %v3665
        %v3667 = vand.u32 %v3666, 4294901760
        %3668 = vmatpush.msra.mxu0 %v3667
        %v3669 = vand.u32 %v3240, 4294901760
        %v3670 = vsub.f32 %v3240, %v3669
        %v3671 = vand.u32 %v3670, 4294901760
        %v3672 = vsub.f32 %v3670, %v3671
        %v3673 = vand.u32 %v3672, 4294901760
        %3674 = vmatpush.msra.mxu0 %v3673
        %v3675 = vand.u32 %v3239, 4294901760
        %v3676 = vsub.f32 %v3239, %v3675
        %v3677 = vand.u32 %v3676, 4294901760
        %v3678 = vsub.f32 %v3676, %v3677
        %v3679 = vand.u32 %v3678, 4294901760
        %3680 = vmatpush.msra.mxu0 %v3679
        %v3681 = vand.u32 %v3249, 4294901760
        %3682 = vmatmul.f32.gmra.mxu0 %v3681
        %v3683 = vpop.f32.mrf.mxu0
        %v3684 = vadd.f32 %v3375, %v3683
        %v3685 = vand.u32 %v3252, 4294901760
        %3686 = vmatmul.f32.gmra.mxu0 %v3685
        %v3687 = vpop.f32.mrf.mxu0
        %v3688 = vadd.f32 %v3383, %v3687
        %v3689 = vand.u32 %v3255, 4294901760
        %3690 = vmatmul.f32.gmra.mxu0 %v3689
        %v3691 = vpop.f32.mrf.mxu0
        %v3692 = vadd.f32 %v3391, %v3691
        %v3693 = vand.u32 %v3258, 4294901760
        %3694 = vmatmul.f32.gmra.mxu0 %v3693
        %v3695 = vpop.f32.mrf.mxu0
        %v3696 = vadd.f32 %v3399, %v3695
        %v3697 = vand.u32 %v3261, 4294901760
        %3698 = vmatmul.f32.gmra.mxu0 %v3697
        %v3699 = vpop.f32.mrf.mxu0
        %v3700 = vadd.f32 %v3407, %v3699
        %v3701 = vand.u32 %v3264, 4294901760
        %3702 = vmatmul.f32.gmra.mxu0 %v3701
        %v3703 = vpop.f32.mrf.mxu0
        %v3704 = vadd.f32 %v3415, %v3703
        %v3705 = vand.u32 %v3267, 4294901760
        %3706 = vmatmul.f32.gmra.mxu0 %v3705
        %v3707 = vpop.f32.mrf.mxu0
        %v3708 = vadd.f32 %v3423, %v3707
        %v3709 = vand.u32 %v3270, 4294901760
        %3710 = vmatmul.f32.gmra.mxu0 %v3709
        %v3711 = vpop.f32.mrf.mxu0
        %v3712 = vadd.f32 %v3431, %v3711
        %v3713 = vand.u32 %v3273, 4294901760
        %3714 = vmatmul.f32.gmra.mxu0 %v3713
        %v3715 = vpop.f32.mrf.mxu0
        %v3716 = vadd.f32 %v3439, %v3715
        %v3717 = vand.u32 %v3276, 4294901760
        %3718 = vmatmul.f32.gmra.mxu0 %v3717
        %v3719 = vpop.f32.mrf.mxu0
        %v3720 = vadd.f32 %v3447, %v3719
        %v3721 = vand.u32 %v3279, 4294901760
        %3722 = vmatmul.f32.gmra.mxu0 %v3721
        %v3723 = vpop.f32.mrf.mxu0
        %v3724 = vadd.f32 %v3455, %v3723
        %v3725 = vand.u32 %v3282, 4294901760
        %3726 = vmatmul.f32.gmra.mxu0 %v3725
        %v3727 = vpop.f32.mrf.mxu0
        %v3728 = vadd.f32 %v3463, %v3727
        %v3729 = vand.u32 %v3285, 4294901760
        %3730 = vmatmul.f32.gmra.mxu0 %v3729
        %v3731 = vpop.f32.mrf.mxu0
        %v3732 = vadd.f32 %v3471, %v3731
        %v3733 = vand.u32 %v3288, 4294901760
        %3734 = vmatmul.f32.gmra.mxu0 %v3733
        %v3735 = vpop.f32.mrf.mxu0
        %v3736 = vadd.f32 %v3479, %v3735
        %v3737 = vand.u32 %v3291, 4294901760
        %3738 = vmatmul.f32.gmra.mxu0 %v3737
        %v3739 = vpop.f32.mrf.mxu0
        %v3740 = vadd.f32 %v3487, %v3739
        %v3741 = vand.u32 %v3294, 4294901760
        %3742 = vmatmul.f32.gmra.mxu0 %v3741
        %v3743 = vpop.f32.mrf.mxu0
        %v3744 = vadd.f32 %v3495, %v3743
        %v3745 = vand.u32 %v3297, 4294901760
        %3746 = vmatmul.f32.gmra.mxu0 %v3745
        %v3747 = vpop.f32.mrf.mxu0
        %v3748 = vadd.f32 %v3503, %v3747
        %v3749 = vand.u32 %v3300, 4294901760
        %3750 = vmatmul.f32.gmra.mxu0 %v3749
        %v3751 = vpop.f32.mrf.mxu0
        %v3752 = vadd.f32 %v3511, %v3751
        %v3753 = vand.u32 %v3303, 4294901760
        %3754 = vmatmul.f32.gmra.mxu0 %v3753
        %v3755 = vpop.f32.mrf.mxu0
        %v3756 = vadd.f32 %v3519, %v3755
        %v3757 = vand.u32 %v3306, 4294901760
        %3758 = vmatmul.f32.gmra.mxu0 %v3757
        %v3759 = vpop.f32.mrf.mxu0
        %v3760 = vadd.f32 %v3527, %v3759
        %v3761 = vand.u32 %v3309, 4294901760
        %3762 = vmatmul.f32.gmra.mxu0 %v3761
        %v3763 = vpop.f32.mrf.mxu0
        %v3764 = vadd.f32 %v3535, %v3763
        %v3765 = vand.u32 %v3312, 4294901760
        %3766 = vmatmul.f32.gmra.mxu0 %v3765
        %v3767 = vpop.f32.mrf.mxu0
        %v3768 = vadd.f32 %v3543, %v3767
        %v3769 = vand.u32 %v3315, 4294901760
        %3770 = vmatmul.f32.gmra.mxu0 %v3769
        %v3771 = vpop.f32.mrf.mxu0
        %v3772 = vadd.f32 %v3551, %v3771
        %v3773 = vand.u32 %v3318, 4294901760
        %3774 = vmatmul.f32.gmra.mxu0 %v3773
        %v3775 = vpop.f32.mrf.mxu0
        %v3776 = vadd.f32 %v3559, %v3775
        %v3777 = vand.u32 %v3321, 4294901760
        %3778 = vmatmul.f32.gmra.mxu0 %v3777
        %v3779 = vpop.f32.mrf.mxu0
        %v3780 = vadd.f32 %v3567, %v3779
        %v3781 = vand.u32 %v3324, 4294901760
        %3782 = vmatmul.f32.gmra.mxu0 %v3781
        %v3783 = vpop.f32.mrf.mxu0
        %v3784 = vadd.f32 %v3575, %v3783
        %v3785 = vand.u32 %v3327, 4294901760
        %3786 = vmatmul.f32.gmra.mxu0 %v3785
        %v3787 = vpop.f32.mrf.mxu0
        %v3788 = vadd.f32 %v3583, %v3787
        %v3789 = vand.u32 %v3330, 4294901760
        %3790 = vmatmul.f32.gmra.mxu0 %v3789
        %v3791 = vpop.f32.mrf.mxu0
        %v3792 = vadd.f32 %v3591, %v3791
        %v3793 = vand.u32 %v3333, 4294901760
        %3794 = vmatmul.f32.gmra.mxu0 %v3793
        %v3795 = vpop.f32.mrf.mxu0
        %v3796 = vadd.f32 %v3599, %v3795
        %v3797 = vand.u32 %v3336, 4294901760
        %3798 = vmatmul.f32.gmra.mxu0 %v3797
        %v3799 = vpop.f32.mrf.mxu0
        %v3800 = vadd.f32 %v3607, %v3799
        %v3801 = vand.u32 %v3339, 4294901760
        %3802 = vmatmul.f32.gmra.mxu0 %v3801
        %v3803 = vpop.f32.mrf.mxu0
        %v3804 = vadd.f32 %v3615, %v3803
        %v3805 = vand.u32 %v3342, 4294901760
        %3806 = vmatmul.f32.gmra.mxu0 %v3805
        %v3807 = vpop.f32.mrf.mxu0
        %v3808 = vadd.f32 %v3623, %v3807
        %3809 = vdwg.mxu0
        %3810 = vmatpush.msra.mxu0 0.0
        %3811 = vmatpush.msra.mxu0 0.0
        %3812 = vmatpush.msra.mxu0 0.0
        %3813 = vmatpush.msra.mxu0 0.0
        %3814 = vmatpush.msra.mxu0 0.0
        %3815 = vmatpush.msra.mxu0 0.0
        %3816 = vmatpush.msra.mxu0 0.0
        %3817 = vmatpush.msra.mxu0 0.0
        %v3818 = vand.u32 %v3246, 4294901760
        %v3819 = vsub.f32 %v3246, %v3818
        %3820 = vmatpush.msra.mxu0 %v3819
        %v3821 = vand.u32 %v3245, 4294901760
        %v3822 = vsub.f32 %v3245, %v3821
        %3823 = vmatpush.msra.mxu0 %v3822
        %v3824 = vand.u32 %v3244, 4294901760
        %v3825 = vsub.f32 %v3244, %v3824
        %3826 = vmatpush.msra.mxu0 %v3825
        %v3827 = vand.u32 %v3243, 4294901760
        %v3828 = vsub.f32 %v3243, %v3827
        %3829 = vmatpush.msra.mxu0 %v3828
        %v3830 = vand.u32 %v3242, 4294901760
        %v3831 = vsub.f32 %v3242, %v3830
        %3832 = vmatpush.msra.mxu0 %v3831
        %v3833 = vand.u32 %v3241, 4294901760
        %v3834 = vsub.f32 %v3241, %v3833
        %3835 = vmatpush.msra.mxu0 %v3834
        %v3836 = vand.u32 %v3240, 4294901760
        %v3837 = vsub.f32 %v3240, %v3836
        %3838 = vmatpush.msra.mxu0 %v3837
        %v3839 = vand.u32 %v3239, 4294901760
        %v3840 = vsub.f32 %v3239, %v3839
        %3841 = vmatpush.msra.mxu0 %v3840
        %v3842 = vand.u32 %v3249, 4294901760
        %v3843 = vsub.f32 %v3249, %v3842
        %3844 = vmatmul.f32.gmra.mxu0 %v3843
        %v3845 = vpop.f32.mrf.mxu0
        %v3846 = vadd.f32 %v3684, %v3845
        %v3847 = vand.u32 %v3252, 4294901760
        %v3848 = vsub.f32 %v3252, %v3847
        %3849 = vmatmul.f32.gmra.mxu0 %v3848
        %v3850 = vpop.f32.mrf.mxu0
        %v3851 = vadd.f32 %v3688, %v3850
        %v3852 = vand.u32 %v3255, 4294901760
        %v3853 = vsub.f32 %v3255, %v3852
        %3854 = vmatmul.f32.gmra.mxu0 %v3853
        %v3855 = vpop.f32.mrf.mxu0
        %v3856 = vadd.f32 %v3692, %v3855
        %v3857 = vand.u32 %v3258, 4294901760
        %v3858 = vsub.f32 %v3258, %v3857
        %3859 = vmatmul.f32.gmra.mxu0 %v3858
        %v3860 = vpop.f32.mrf.mxu0
        %v3861 = vadd.f32 %v3696, %v3860
        %v3862 = vand.u32 %v3261, 4294901760
        %v3863 = vsub.f32 %v3261, %v3862
        %3864 = vmatmul.f32.gmra.mxu0 %v3863
        %v3865 = vpop.f32.mrf.mxu0
        %v3866 = vadd.f32 %v3700, %v3865
        %v3867 = vand.u32 %v3264, 4294901760
        %v3868 = vsub.f32 %v3264, %v3867
        %3869 = vmatmul.f32.gmra.mxu0 %v3868
        %v3870 = vpop.f32.mrf.mxu0
        %v3871 = vadd.f32 %v3704, %v3870
        %v3872 = vand.u32 %v3267, 4294901760
        %v3873 = vsub.f32 %v3267, %v3872
        %3874 = vmatmul.f32.gmra.mxu0 %v3873
        %v3875 = vpop.f32.mrf.mxu0
        %v3876 = vadd.f32 %v3708, %v3875
        %v3877 = vand.u32 %v3270, 4294901760
        %v3878 = vsub.f32 %v3270, %v3877
        %3879 = vmatmul.f32.gmra.mxu0 %v3878
        %v3880 = vpop.f32.mrf.mxu0
        %v3881 = vadd.f32 %v3712, %v3880
        %v3882 = vand.u32 %v3273, 4294901760
        %v3883 = vsub.f32 %v3273, %v3882
        %3884 = vmatmul.f32.gmra.mxu0 %v3883
        %v3885 = vpop.f32.mrf.mxu0
        %v3886 = vadd.f32 %v3716, %v3885
        %v3887 = vand.u32 %v3276, 4294901760
        %v3888 = vsub.f32 %v3276, %v3887
        %3889 = vmatmul.f32.gmra.mxu0 %v3888
        %v3890 = vpop.f32.mrf.mxu0
        %v3891 = vadd.f32 %v3720, %v3890
        %v3892 = vand.u32 %v3279, 4294901760
        %v3893 = vsub.f32 %v3279, %v3892
        %3894 = vmatmul.f32.gmra.mxu0 %v3893
        %v3895 = vpop.f32.mrf.mxu0
        %v3896 = vadd.f32 %v3724, %v3895
        %v3897 = vand.u32 %v3282, 4294901760
        %v3898 = vsub.f32 %v3282, %v3897
        %3899 = vmatmul.f32.gmra.mxu0 %v3898
        %v3900 = vpop.f32.mrf.mxu0
        %v3901 = vadd.f32 %v3728, %v3900
        %v3902 = vand.u32 %v3285, 4294901760
        %v3903 = vsub.f32 %v3285, %v3902
        %3904 = vmatmul.f32.gmra.mxu0 %v3903
        %v3905 = vpop.f32.mrf.mxu0
        %v3906 = vadd.f32 %v3732, %v3905
        %v3907 = vand.u32 %v3288, 4294901760
        %v3908 = vsub.f32 %v3288, %v3907
        %3909 = vmatmul.f32.gmra.mxu0 %v3908
        %v3910 = vpop.f32.mrf.mxu0
        %v3911 = vadd.f32 %v3736, %v3910
        %v3912 = vand.u32 %v3291, 4294901760
        %v3913 = vsub.f32 %v3291, %v3912
        %3914 = vmatmul.f32.gmra.mxu0 %v3913
        %v3915 = vpop.f32.mrf.mxu0
        %v3916 = vadd.f32 %v3740, %v3915
        %v3917 = vand.u32 %v3294, 4294901760
        %v3918 = vsub.f32 %v3294, %v3917
        %3919 = vmatmul.f32.gmra.mxu0 %v3918
        %v3920 = vpop.f32.mrf.mxu0
        %v3921 = vadd.f32 %v3744, %v3920
        %v3922 = vand.u32 %v3297, 4294901760
        %v3923 = vsub.f32 %v3297, %v3922
        %3924 = vmatmul.f32.gmra.mxu0 %v3923
        %v3925 = vpop.f32.mrf.mxu0
        %v3926 = vadd.f32 %v3748, %v3925
        %v3927 = vand.u32 %v3300, 4294901760
        %v3928 = vsub.f32 %v3300, %v3927
        %3929 = vmatmul.f32.gmra.mxu0 %v3928
        %v3930 = vpop.f32.mrf.mxu0
        %v3931 = vadd.f32 %v3752, %v3930
        %v3932 = vand.u32 %v3303, 4294901760
        %v3933 = vsub.f32 %v3303, %v3932
        %3934 = vmatmul.f32.gmra.mxu0 %v3933
        %v3935 = vpop.f32.mrf.mxu0
        %v3936 = vadd.f32 %v3756, %v3935
        %v3937 = vand.u32 %v3306, 4294901760
        %v3938 = vsub.f32 %v3306, %v3937
        %3939 = vmatmul.f32.gmra.mxu0 %v3938
        %v3940 = vpop.f32.mrf.mxu0
        %v3941 = vadd.f32 %v3760, %v3940
        %v3942 = vand.u32 %v3309, 4294901760
        %v3943 = vsub.f32 %v3309, %v3942
        %3944 = vmatmul.f32.gmra.mxu0 %v3943
        %v3945 = vpop.f32.mrf.mxu0
        %v3946 = vadd.f32 %v3764, %v3945
        %v3947 = vand.u32 %v3312, 4294901760
        %v3948 = vsub.f32 %v3312, %v3947
        %3949 = vmatmul.f32.gmra.mxu0 %v3948
        %v3950 = vpop.f32.mrf.mxu0
        %v3951 = vadd.f32 %v3768, %v3950
        %v3952 = vand.u32 %v3315, 4294901760
        %v3953 = vsub.f32 %v3315, %v3952
        %3954 = vmatmul.f32.gmra.mxu0 %v3953
        %v3955 = vpop.f32.mrf.mxu0
        %v3956 = vadd.f32 %v3772, %v3955
        %v3957 = vand.u32 %v3318, 4294901760
        %v3958 = vsub.f32 %v3318, %v3957
        %3959 = vmatmul.f32.gmra.mxu0 %v3958
        %v3960 = vpop.f32.mrf.mxu0
        %v3961 = vadd.f32 %v3776, %v3960
        %v3962 = vand.u32 %v3321, 4294901760
        %v3963 = vsub.f32 %v3321, %v3962
        %3964 = vmatmul.f32.gmra.mxu0 %v3963
        %v3965 = vpop.f32.mrf.mxu0
        %v3966 = vadd.f32 %v3780, %v3965
        %v3967 = vand.u32 %v3324, 4294901760
        %v3968 = vsub.f32 %v3324, %v3967
        %3969 = vmatmul.f32.gmra.mxu0 %v3968
        %v3970 = vpop.f32.mrf.mxu0
        %v3971 = vadd.f32 %v3784, %v3970
        %v3972 = vand.u32 %v3327, 4294901760
        %v3973 = vsub.f32 %v3327, %v3972
        %3974 = vmatmul.f32.gmra.mxu0 %v3973
        %v3975 = vpop.f32.mrf.mxu0
        %v3976 = vadd.f32 %v3788, %v3975
        %v3977 = vand.u32 %v3330, 4294901760
        %v3978 = vsub.f32 %v3330, %v3977
        %3979 = vmatmul.f32.gmra.mxu0 %v3978
        %v3980 = vpop.f32.mrf.mxu0
        %v3981 = vadd.f32 %v3792, %v3980
        %v3982 = vand.u32 %v3333, 4294901760
        %v3983 = vsub.f32 %v3333, %v3982
        %3984 = vmatmul.f32.gmra.mxu0 %v3983
        %v3985 = vpop.f32.mrf.mxu0
        %v3986 = vadd.f32 %v3796, %v3985
        %v3987 = vand.u32 %v3336, 4294901760
        %v3988 = vsub.f32 %v3336, %v3987
        %3989 = vmatmul.f32.gmra.mxu0 %v3988
        %v3990 = vpop.f32.mrf.mxu0
        %v3991 = vadd.f32 %v3800, %v3990
        %v3992 = vand.u32 %v3339, 4294901760
        %v3993 = vsub.f32 %v3339, %v3992
        %3994 = vmatmul.f32.gmra.mxu0 %v3993
        %v3995 = vpop.f32.mrf.mxu0
        %v3996 = vadd.f32 %v3804, %v3995
        %v3997 = vand.u32 %v3342, 4294901760
        %v3998 = vsub.f32 %v3342, %v3997
        %3999 = vmatmul.f32.gmra.mxu0 %v3998
        %v4000 = vpop.f32.mrf.mxu0
        %v4001 = vadd.f32 %v3808, %v4000
        %4002 = vdwg.mxu0
        %4003 = vmatpush.msra.mxu0 0.0
        %4004 = vmatpush.msra.mxu0 0.0
        %4005 = vmatpush.msra.mxu0 0.0
        %4006 = vmatpush.msra.mxu0 0.0
        %4007 = vmatpush.msra.mxu0 0.0
        %4008 = vmatpush.msra.mxu0 0.0
        %4009 = vmatpush.msra.mxu0 0.0
        %4010 = vmatpush.msra.mxu0 0.0
        %v4011 = vand.u32 %v3246, 4294901760
        %4012 = vmatpush.msra.mxu0 %v4011
        %v4013 = vand.u32 %v3245, 4294901760
        %4014 = vmatpush.msra.mxu0 %v4013
        %v4015 = vand.u32 %v3244, 4294901760
        %4016 = vmatpush.msra.mxu0 %v4015
        %v4017 = vand.u32 %v3243, 4294901760
        %4018 = vmatpush.msra.mxu0 %v4017
        %v4019 = vand.u32 %v3242, 4294901760
        %4020 = vmatpush.msra.mxu0 %v4019
        %v4021 = vand.u32 %v3241, 4294901760
        %4022 = vmatpush.msra.mxu0 %v4021
        %v4023 = vand.u32 %v3240, 4294901760
        %4024 = vmatpush.msra.mxu0 %v4023
        %v4025 = vand.u32 %v3239, 4294901760
        %4026 = vmatpush.msra.mxu0 %v4025
        %v4027 = vand.u32 %v3249, 4294901760
        %v4028 = vsub.f32 %v3249, %v4027
        %v4029 = vand.u32 %v4028, 4294901760
        %4030 = vmatmul.f32.gmra.mxu0 %v4029
        %v4031 = vpop.f32.mrf.mxu0
        %v4032 = vadd.f32 %v3846, %v4031
        %v4033 = vand.u32 %v3252, 4294901760
        %v4034 = vsub.f32 %v3252, %v4033
        %v4035 = vand.u32 %v4034, 4294901760
        %4036 = vmatmul.f32.gmra.mxu0 %v4035
        %v4037 = vpop.f32.mrf.mxu0
        %v4038 = vadd.f32 %v3851, %v4037
        %v4039 = vand.u32 %v3255, 4294901760
        %v4040 = vsub.f32 %v3255, %v4039
        %v4041 = vand.u32 %v4040, 4294901760
        %4042 = vmatmul.f32.gmra.mxu0 %v4041
        %v4043 = vpop.f32.mrf.mxu0
        %v4044 = vadd.f32 %v3856, %v4043
        %v4045 = vand.u32 %v3258, 4294901760
        %v4046 = vsub.f32 %v3258, %v4045
        %v4047 = vand.u32 %v4046, 4294901760
        %4048 = vmatmul.f32.gmra.mxu0 %v4047
        %v4049 = vpop.f32.mrf.mxu0
        %v4050 = vadd.f32 %v3861, %v4049
        %v4051 = vand.u32 %v3261, 4294901760
        %v4052 = vsub.f32 %v3261, %v4051
        %v4053 = vand.u32 %v4052, 4294901760
        %4054 = vmatmul.f32.gmra.mxu0 %v4053
        %v4055 = vpop.f32.mrf.mxu0
        %v4056 = vadd.f32 %v3866, %v4055
        %v4057 = vand.u32 %v3264, 4294901760
        %v4058 = vsub.f32 %v3264, %v4057
        %v4059 = vand.u32 %v4058, 4294901760
        %4060 = vmatmul.f32.gmra.mxu0 %v4059
        %v4061 = vpop.f32.mrf.mxu0
        %v4062 = vadd.f32 %v3871, %v4061
        %v4063 = vand.u32 %v3267, 4294901760
        %v4064 = vsub.f32 %v3267, %v4063
        %v4065 = vand.u32 %v4064, 4294901760
        %4066 = vmatmul.f32.gmra.mxu0 %v4065
        %v4067 = vpop.f32.mrf.mxu0
        %v4068 = vadd.f32 %v3876, %v4067
        %v4069 = vand.u32 %v3270, 4294901760
        %v4070 = vsub.f32 %v3270, %v4069
        %v4071 = vand.u32 %v4070, 4294901760
        %4072 = vmatmul.f32.gmra.mxu0 %v4071
        %v4073 = vpop.f32.mrf.mxu0
        %v4074 = vadd.f32 %v3881, %v4073
        %v4075 = vand.u32 %v3273, 4294901760
        %v4076 = vsub.f32 %v3273, %v4075
        %v4077 = vand.u32 %v4076, 4294901760
        %4078 = vmatmul.f32.gmra.mxu0 %v4077
        %v4079 = vpop.f32.mrf.mxu0
        %v4080 = vadd.f32 %v3886, %v4079
        %v4081 = vand.u32 %v3276, 4294901760
        %v4082 = vsub.f32 %v3276, %v4081
        %v4083 = vand.u32 %v4082, 4294901760
        %4084 = vmatmul.f32.gmra.mxu0 %v4083
        %v4085 = vpop.f32.mrf.mxu0
        %v4086 = vadd.f32 %v3891, %v4085
        %v4087 = vand.u32 %v3279, 4294901760
        %v4088 = vsub.f32 %v3279, %v4087
        %v4089 = vand.u32 %v4088, 4294901760
        %4090 = vmatmul.f32.gmra.mxu0 %v4089
        %v4091 = vpop.f32.mrf.mxu0
        %v4092 = vadd.f32 %v3896, %v4091
        %v4093 = vand.u32 %v3282, 4294901760
        %v4094 = vsub.f32 %v3282, %v4093
        %v4095 = vand.u32 %v4094, 4294901760
        %4096 = vmatmul.f32.gmra.mxu0 %v4095
        %v4097 = vpop.f32.mrf.mxu0
        %v4098 = vadd.f32 %v3901, %v4097
        %v4099 = vand.u32 %v3285, 4294901760
        %v4100 = vsub.f32 %v3285, %v4099
        %v4101 = vand.u32 %v4100, 4294901760
        %4102 = vmatmul.f32.gmra.mxu0 %v4101
        %v4103 = vpop.f32.mrf.mxu0
        %v4104 = vadd.f32 %v3906, %v4103
        %v4105 = vand.u32 %v3288, 4294901760
        %v4106 = vsub.f32 %v3288, %v4105
        %v4107 = vand.u32 %v4106, 4294901760
        %4108 = vmatmul.f32.gmra.mxu0 %v4107
        %v4109 = vpop.f32.mrf.mxu0
        %v4110 = vadd.f32 %v3911, %v4109
        %v4111 = vand.u32 %v3291, 4294901760
        %v4112 = vsub.f32 %v3291, %v4111
        %v4113 = vand.u32 %v4112, 4294901760
        %4114 = vmatmul.f32.gmra.mxu0 %v4113
        %v4115 = vpop.f32.mrf.mxu0
        %v4116 = vadd.f32 %v3916, %v4115
        %v4117 = vand.u32 %v3294, 4294901760
        %v4118 = vsub.f32 %v3294, %v4117
        %v4119 = vand.u32 %v4118, 4294901760
        %4120 = vmatmul.f32.gmra.mxu0 %v4119
        %v4121 = vpop.f32.mrf.mxu0
        %v4122 = vadd.f32 %v3921, %v4121
        %v4123 = vand.u32 %v3297, 4294901760
        %v4124 = vsub.f32 %v3297, %v4123
        %v4125 = vand.u32 %v4124, 4294901760
        %4126 = vmatmul.f32.gmra.mxu0 %v4125
        %v4127 = vpop.f32.mrf.mxu0
        %v4128 = vadd.f32 %v3926, %v4127
        %v4129 = vand.u32 %v3300, 4294901760
        %v4130 = vsub.f32 %v3300, %v4129
        %v4131 = vand.u32 %v4130, 4294901760
        %4132 = vmatmul.f32.gmra.mxu0 %v4131
        %v4133 = vpop.f32.mrf.mxu0
        %v4134 = vadd.f32 %v3931, %v4133
        %v4135 = vand.u32 %v3303, 4294901760
        %v4136 = vsub.f32 %v3303, %v4135
        %v4137 = vand.u32 %v4136, 4294901760
        %4138 = vmatmul.f32.gmra.mxu0 %v4137
        %v4139 = vpop.f32.mrf.mxu0
        %v4140 = vadd.f32 %v3936, %v4139
        %v4141 = vand.u32 %v3306, 4294901760
        %v4142 = vsub.f32 %v3306, %v4141
        %v4143 = vand.u32 %v4142, 4294901760
        %4144 = vmatmul.f32.gmra.mxu0 %v4143
        %v4145 = vpop.f32.mrf.mxu0
        %v4146 = vadd.f32 %v3941, %v4145
        %v4147 = vand.u32 %v3309, 4294901760
        %v4148 = vsub.f32 %v3309, %v4147
        %v4149 = vand.u32 %v4148, 4294901760
        %4150 = vmatmul.f32.gmra.mxu0 %v4149
        %v4151 = vpop.f32.mrf.mxu0
        %v4152 = vadd.f32 %v3946, %v4151
        %v4153 = vand.u32 %v3312, 4294901760
        %v4154 = vsub.f32 %v3312, %v4153
        %v4155 = vand.u32 %v4154, 4294901760
        %4156 = vmatmul.f32.gmra.mxu0 %v4155
        %v4157 = vpop.f32.mrf.mxu0
        %v4158 = vadd.f32 %v3951, %v4157
        %v4159 = vand.u32 %v3315, 4294901760
        %v4160 = vsub.f32 %v3315, %v4159
        %v4161 = vand.u32 %v4160, 4294901760
        %4162 = vmatmul.f32.gmra.mxu0 %v4161
        %v4163 = vpop.f32.mrf.mxu0
        %v4164 = vadd.f32 %v3956, %v4163
        %v4165 = vand.u32 %v3318, 4294901760
        %v4166 = vsub.f32 %v3318, %v4165
        %v4167 = vand.u32 %v4166, 4294901760
        %4168 = vmatmul.f32.gmra.mxu0 %v4167
        %v4169 = vpop.f32.mrf.mxu0
        %v4170 = vadd.f32 %v3961, %v4169
        %v4171 = vand.u32 %v3321, 4294901760
        %v4172 = vsub.f32 %v3321, %v4171
        %v4173 = vand.u32 %v4172, 4294901760
        %4174 = vmatmul.f32.gmra.mxu0 %v4173
        %v4175 = vpop.f32.mrf.mxu0
        %v4176 = vadd.f32 %v3966, %v4175
        %v4177 = vand.u32 %v3324, 4294901760
        %v4178 = vsub.f32 %v3324, %v4177
        %v4179 = vand.u32 %v4178, 4294901760
        %4180 = vmatmul.f32.gmra.mxu0 %v4179
        %v4181 = vpop.f32.mrf.mxu0
        %v4182 = vadd.f32 %v3971, %v4181
        %v4183 = vand.u32 %v3327, 4294901760
        %v4184 = vsub.f32 %v3327, %v4183
        %v4185 = vand.u32 %v4184, 4294901760
        %4186 = vmatmul.f32.gmra.mxu0 %v4185
        %v4187 = vpop.f32.mrf.mxu0
        %v4188 = vadd.f32 %v3976, %v4187
        %v4189 = vand.u32 %v3330, 4294901760
        %v4190 = vsub.f32 %v3330, %v4189
        %v4191 = vand.u32 %v4190, 4294901760
        %4192 = vmatmul.f32.gmra.mxu0 %v4191
        %v4193 = vpop.f32.mrf.mxu0
        %v4194 = vadd.f32 %v3981, %v4193
        %v4195 = vand.u32 %v3333, 4294901760
        %v4196 = vsub.f32 %v3333, %v4195
        %v4197 = vand.u32 %v4196, 4294901760
        %4198 = vmatmul.f32.gmra.mxu0 %v4197
        %v4199 = vpop.f32.mrf.mxu0
        %v4200 = vadd.f32 %v3986, %v4199
        %v4201 = vand.u32 %v3336, 4294901760
        %v4202 = vsub.f32 %v3336, %v4201
        %v4203 = vand.u32 %v4202, 4294901760
        %4204 = vmatmul.f32.gmra.mxu0 %v4203
        %v4205 = vpop.f32.mrf.mxu0
        %v4206 = vadd.f32 %v3991, %v4205
        %v4207 = vand.u32 %v3339, 4294901760
        %v4208 = vsub.f32 %v3339, %v4207
        %v4209 = vand.u32 %v4208, 4294901760
        %4210 = vmatmul.f32.gmra.mxu0 %v4209
        %v4211 = vpop.f32.mrf.mxu0
        %v4212 = vadd.f32 %v3996, %v4211
        %v4213 = vand.u32 %v3342, 4294901760
        %v4214 = vsub.f32 %v3342, %v4213
        %v4215 = vand.u32 %v4214, 4294901760
        %4216 = vmatmul.f32.gmra.mxu0 %v4215
        %v4217 = vpop.f32.mrf.mxu0
        %v4218 = vadd.f32 %v4001, %v4217
        %4219 = vdwg.mxu0
        %4220 = vmatpush.msra.mxu0 0.0
        %4221 = vmatpush.msra.mxu0 0.0
        %4222 = vmatpush.msra.mxu0 0.0
        %4223 = vmatpush.msra.mxu0 0.0
        %4224 = vmatpush.msra.mxu0 0.0
        %4225 = vmatpush.msra.mxu0 0.0
        %4226 = vmatpush.msra.mxu0 0.0
        %4227 = vmatpush.msra.mxu0 0.0
        %v4228 = vand.u32 %v3246, 4294901760
        %v4229 = vsub.f32 %v3246, %v4228
        %v4230 = vand.u32 %v4229, 4294901760
        %4231 = vmatpush.msra.mxu0 %v4230
        %v4232 = vand.u32 %v3245, 4294901760
        %v4233 = vsub.f32 %v3245, %v4232
        %v4234 = vand.u32 %v4233, 4294901760
        %4235 = vmatpush.msra.mxu0 %v4234
        %v4236 = vand.u32 %v3244, 4294901760
        %v4237 = vsub.f32 %v3244, %v4236
        %v4238 = vand.u32 %v4237, 4294901760
        %4239 = vmatpush.msra.mxu0 %v4238
        %v4240 = vand.u32 %v3243, 4294901760
        %v4241 = vsub.f32 %v3243, %v4240
        %v4242 = vand.u32 %v4241, 4294901760
        %4243 = vmatpush.msra.mxu0 %v4242
        %v4244 = vand.u32 %v3242, 4294901760
        %v4245 = vsub.f32 %v3242, %v4244
        %v4246 = vand.u32 %v4245, 4294901760
        %4247 = vmatpush.msra.mxu0 %v4246
        %v4248 = vand.u32 %v3241, 4294901760
        %v4249 = vsub.f32 %v3241, %v4248
        %v4250 = vand.u32 %v4249, 4294901760
        %4251 = vmatpush.msra.mxu0 %v4250
        %v4252 = vand.u32 %v3240, 4294901760
        %v4253 = vsub.f32 %v3240, %v4252
        %v4254 = vand.u32 %v4253, 4294901760
        %4255 = vmatpush.msra.mxu0 %v4254
        %v4256 = vand.u32 %v3239, 4294901760
        %v4257 = vsub.f32 %v3239, %v4256
        %v4258 = vand.u32 %v4257, 4294901760
        %4259 = vmatpush.msra.mxu0 %v4258
        %v4260 = vand.u32 %v3249, 4294901760
        %4261 = vmatmul.f32.gmra.mxu0 %v4260
        %v4262 = vpop.f32.mrf.mxu0
        %v4263 = vadd.f32 %v4032, %v4262
        %v4264 = vand.u32 %v3252, 4294901760
        %4265 = vmatmul.f32.gmra.mxu0 %v4264
        %v4266 = vpop.f32.mrf.mxu0
        %v4267 = vadd.f32 %v4038, %v4266
        %v4268 = vand.u32 %v3255, 4294901760
        %4269 = vmatmul.f32.gmra.mxu0 %v4268
        %v4270 = vpop.f32.mrf.mxu0
        %v4271 = vadd.f32 %v4044, %v4270
        %v4272 = vand.u32 %v3258, 4294901760
        %4273 = vmatmul.f32.gmra.mxu0 %v4272
        %v4274 = vpop.f32.mrf.mxu0
        %v4275 = vadd.f32 %v4050, %v4274
        %v4276 = vand.u32 %v3261, 4294901760
        %4277 = vmatmul.f32.gmra.mxu0 %v4276
        %v4278 = vpop.f32.mrf.mxu0
        %v4279 = vadd.f32 %v4056, %v4278
        %v4280 = vand.u32 %v3264, 4294901760
        %4281 = vmatmul.f32.gmra.mxu0 %v4280
        %v4282 = vpop.f32.mrf.mxu0
        %v4283 = vadd.f32 %v4062, %v4282
        %v4284 = vand.u32 %v3267, 4294901760
        %4285 = vmatmul.f32.gmra.mxu0 %v4284
        %v4286 = vpop.f32.mrf.mxu0
        %v4287 = vadd.f32 %v4068, %v4286
        %v4288 = vand.u32 %v3270, 4294901760
        %4289 = vmatmul.f32.gmra.mxu0 %v4288
        %v4290 = vpop.f32.mrf.mxu0
        %v4291 = vadd.f32 %v4074, %v4290
        %v4292 = vand.u32 %v3273, 4294901760
        %4293 = vmatmul.f32.gmra.mxu0 %v4292
        %v4294 = vpop.f32.mrf.mxu0
        %v4295 = vadd.f32 %v4080, %v4294
        %v4296 = vand.u32 %v3276, 4294901760
        %4297 = vmatmul.f32.gmra.mxu0 %v4296
        %v4298 = vpop.f32.mrf.mxu0
        %v4299 = vadd.f32 %v4086, %v4298
        %v4300 = vand.u32 %v3279, 4294901760
        %4301 = vmatmul.f32.gmra.mxu0 %v4300
        %v4302 = vpop.f32.mrf.mxu0
        %v4303 = vadd.f32 %v4092, %v4302
        %v4304 = vand.u32 %v3282, 4294901760
        %4305 = vmatmul.f32.gmra.mxu0 %v4304
        %v4306 = vpop.f32.mrf.mxu0
        %v4307 = vadd.f32 %v4098, %v4306
        %v4308 = vand.u32 %v3285, 4294901760
        %4309 = vmatmul.f32.gmra.mxu0 %v4308
        %v4310 = vpop.f32.mrf.mxu0
        %v4311 = vadd.f32 %v4104, %v4310
        %v4312 = vand.u32 %v3288, 4294901760
        %4313 = vmatmul.f32.gmra.mxu0 %v4312
        %v4314 = vpop.f32.mrf.mxu0
        %v4315 = vadd.f32 %v4110, %v4314
        %v4316 = vand.u32 %v3291, 4294901760
        %4317 = vmatmul.f32.gmra.mxu0 %v4316
        %v4318 = vpop.f32.mrf.mxu0
        %v4319 = vadd.f32 %v4116, %v4318
        %v4320 = vand.u32 %v3294, 4294901760
        %4321 = vmatmul.f32.gmra.mxu0 %v4320
        %v4322 = vpop.f32.mrf.mxu0
        %v4323 = vadd.f32 %v4122, %v4322
        %v4324 = vand.u32 %v3297, 4294901760
        %4325 = vmatmul.f32.gmra.mxu0 %v4324
        %v4326 = vpop.f32.mrf.mxu0
        %v4327 = vadd.f32 %v4128, %v4326
        %v4328 = vand.u32 %v3300, 4294901760
        %4329 = vmatmul.f32.gmra.mxu0 %v4328
        %v4330 = vpop.f32.mrf.mxu0
        %v4331 = vadd.f32 %v4134, %v4330
        %v4332 = vand.u32 %v3303, 4294901760
        %4333 = vmatmul.f32.gmra.mxu0 %v4332
        %v4334 = vpop.f32.mrf.mxu0
        %v4335 = vadd.f32 %v4140, %v4334
        %v4336 = vand.u32 %v3306, 4294901760
        %4337 = vmatmul.f32.gmra.mxu0 %v4336
        %v4338 = vpop.f32.mrf.mxu0
        %v4339 = vadd.f32 %v4146, %v4338
        %v4340 = vand.u32 %v3309, 4294901760
        %4341 = vmatmul.f32.gmra.mxu0 %v4340
        %v4342 = vpop.f32.mrf.mxu0
        %v4343 = vadd.f32 %v4152, %v4342
        %v4344 = vand.u32 %v3312, 4294901760
        %4345 = vmatmul.f32.gmra.mxu0 %v4344
        %v4346 = vpop.f32.mrf.mxu0
        %v4347 = vadd.f32 %v4158, %v4346
        %v4348 = vand.u32 %v3315, 4294901760
        %4349 = vmatmul.f32.gmra.mxu0 %v4348
        %v4350 = vpop.f32.mrf.mxu0
        %v4351 = vadd.f32 %v4164, %v4350
        %v4352 = vand.u32 %v3318, 4294901760
        %4353 = vmatmul.f32.gmra.mxu0 %v4352
        %v4354 = vpop.f32.mrf.mxu0
        %v4355 = vadd.f32 %v4170, %v4354
        %v4356 = vand.u32 %v3321, 4294901760
        %4357 = vmatmul.f32.gmra.mxu0 %v4356
        %v4358 = vpop.f32.mrf.mxu0
        %v4359 = vadd.f32 %v4176, %v4358
        %v4360 = vand.u32 %v3324, 4294901760
        %4361 = vmatmul.f32.gmra.mxu0 %v4360
        %v4362 = vpop.f32.mrf.mxu0
        %v4363 = vadd.f32 %v4182, %v4362
        %v4364 = vand.u32 %v3327, 4294901760
        %4365 = vmatmul.f32.gmra.mxu0 %v4364
        %v4366 = vpop.f32.mrf.mxu0
        %v4367 = vadd.f32 %v4188, %v4366
        %v4368 = vand.u32 %v3330, 4294901760
        %4369 = vmatmul.f32.gmra.mxu0 %v4368
        %v4370 = vpop.f32.mrf.mxu0
        %v4371 = vadd.f32 %v4194, %v4370
        %v4372 = vand.u32 %v3333, 4294901760
        %4373 = vmatmul.f32.gmra.mxu0 %v4372
        %v4374 = vpop.f32.mrf.mxu0
        %v4375 = vadd.f32 %v4200, %v4374
        %v4376 = vand.u32 %v3336, 4294901760
        %4377 = vmatmul.f32.gmra.mxu0 %v4376
        %v4378 = vpop.f32.mrf.mxu0
        %v4379 = vadd.f32 %v4206, %v4378
        %v4380 = vand.u32 %v3339, 4294901760
        %4381 = vmatmul.f32.gmra.mxu0 %v4380
        %v4382 = vpop.f32.mrf.mxu0
        %v4383 = vadd.f32 %v4212, %v4382
        %v4384 = vand.u32 %v3342, 4294901760
        %4385 = vmatmul.f32.gmra.mxu0 %v4384
        %v4386 = vpop.f32.mrf.mxu0
        %v4387 = vadd.f32 %v4218, %v4386
        %4388 = vdwg.mxu0
        %4389 = vmatpush.msra.mxu0 0.0
        %4390 = vmatpush.msra.mxu0 0.0
        %4391 = vmatpush.msra.mxu0 0.0
        %4392 = vmatpush.msra.mxu0 0.0
        %4393 = vmatpush.msra.mxu0 0.0
        %4394 = vmatpush.msra.mxu0 0.0
        %4395 = vmatpush.msra.mxu0 0.0
        %4396 = vmatpush.msra.mxu0 0.0
        %v4397 = vand.u32 %v3246, 4294901760
        %4398 = vmatpush.msra.mxu0 %v4397
        %v4399 = vand.u32 %v3245, 4294901760
        %4400 = vmatpush.msra.mxu0 %v4399
        %v4401 = vand.u32 %v3244, 4294901760
        %4402 = vmatpush.msra.mxu0 %v4401
        %v4403 = vand.u32 %v3243, 4294901760
        %4404 = vmatpush.msra.mxu0 %v4403
        %v4405 = vand.u32 %v3242, 4294901760
        %4406 = vmatpush.msra.mxu0 %v4405
        %v4407 = vand.u32 %v3241, 4294901760
        %4408 = vmatpush.msra.mxu0 %v4407
        %v4409 = vand.u32 %v3240, 4294901760
        %4410 = vmatpush.msra.mxu0 %v4409
        %v4411 = vand.u32 %v3239, 4294901760
        %4412 = vmatpush.msra.mxu0 %v4411
        %v4413 = vand.u32 %v3249, 4294901760
        %4414 = vmatmul.f32.gmra.mxu0 %v4413
        %v4415 = vpop.f32.mrf.mxu0
        %v4416 = vadd.f32 %v4263, %v4415
        %v4417 = vand.u32 %v3252, 4294901760
        %4418 = vmatmul.f32.gmra.mxu0 %v4417
        %v4419 = vpop.f32.mrf.mxu0
        %v4420 = vadd.f32 %v4267, %v4419
        %v4421 = vand.u32 %v3255, 4294901760
        %4422 = vmatmul.f32.gmra.mxu0 %v4421
        %v4423 = vpop.f32.mrf.mxu0
        %v4424 = vadd.f32 %v4271, %v4423
        %v4425 = vand.u32 %v3258, 4294901760
        %4426 = vmatmul.f32.gmra.mxu0 %v4425
        %v4427 = vpop.f32.mrf.mxu0
        %v4428 = vadd.f32 %v4275, %v4427
        %v4429 = vand.u32 %v3261, 4294901760
        %4430 = vmatmul.f32.gmra.mxu0 %v4429
        %v4431 = vpop.f32.mrf.mxu0
        %v4432 = vadd.f32 %v4279, %v4431
        %v4433 = vand.u32 %v3264, 4294901760
        %4434 = vmatmul.f32.gmra.mxu0 %v4433
        %v4435 = vpop.f32.mrf.mxu0
        %v4436 = vadd.f32 %v4283, %v4435
        %v4437 = vand.u32 %v3267, 4294901760
        %4438 = vmatmul.f32.gmra.mxu0 %v4437
        %v4439 = vpop.f32.mrf.mxu0
        %v4440 = vadd.f32 %v4287, %v4439
        %v4441 = vand.u32 %v3270, 4294901760
        %4442 = vmatmul.f32.gmra.mxu0 %v4441
        %v4443 = vpop.f32.mrf.mxu0
        %v4444 = vadd.f32 %v4291, %v4443
        %v4445 = vand.u32 %v3273, 4294901760
        %4446 = vmatmul.f32.gmra.mxu0 %v4445
        %v4447 = vpop.f32.mrf.mxu0
        %v4448 = vadd.f32 %v4295, %v4447
        %v4449 = vand.u32 %v3276, 4294901760
        %4450 = vmatmul.f32.gmra.mxu0 %v4449
        %v4451 = vpop.f32.mrf.mxu0
        %v4452 = vadd.f32 %v4299, %v4451
        %v4453 = vand.u32 %v3279, 4294901760
        %4454 = vmatmul.f32.gmra.mxu0 %v4453
        %v4455 = vpop.f32.mrf.mxu0
        %v4456 = vadd.f32 %v4303, %v4455
        %v4457 = vand.u32 %v3282, 4294901760
        %4458 = vmatmul.f32.gmra.mxu0 %v4457
        %v4459 = vpop.f32.mrf.mxu0
        %v4460 = vadd.f32 %v4307, %v4459
        %v4461 = vand.u32 %v3285, 4294901760
        %4462 = vmatmul.f32.gmra.mxu0 %v4461
        %v4463 = vpop.f32.mrf.mxu0
        %v4464 = vadd.f32 %v4311, %v4463
        %v4465 = vand.u32 %v3288, 4294901760
        %4466 = vmatmul.f32.gmra.mxu0 %v4465
        %v4467 = vpop.f32.mrf.mxu0
        %v4468 = vadd.f32 %v4315, %v4467
        %v4469 = vand.u32 %v3291, 4294901760
        %4470 = vmatmul.f32.gmra.mxu0 %v4469
        %v4471 = vpop.f32.mrf.mxu0
        %v4472 = vadd.f32 %v4319, %v4471
        %v4473 = vand.u32 %v3294, 4294901760
        %4474 = vmatmul.f32.gmra.mxu0 %v4473
        %v4475 = vpop.f32.mrf.mxu0
        %v4476 = vadd.f32 %v4323, %v4475
        %v4477 = vand.u32 %v3297, 4294901760
        %4478 = vmatmul.f32.gmra.mxu0 %v4477
        %v4479 = vpop.f32.mrf.mxu0
        %v4480 = vadd.f32 %v4327, %v4479
        %v4481 = vand.u32 %v3300, 4294901760
        %4482 = vmatmul.f32.gmra.mxu0 %v4481
        %v4483 = vpop.f32.mrf.mxu0
        %v4484 = vadd.f32 %v4331, %v4483
        %v4485 = vand.u32 %v3303, 4294901760
        %4486 = vmatmul.f32.gmra.mxu0 %v4485
        %v4487 = vpop.f32.mrf.mxu0
        %v4488 = vadd.f32 %v4335, %v4487
        %v4489 = vand.u32 %v3306, 4294901760
        %4490 = vmatmul.f32.gmra.mxu0 %v4489
        %v4491 = vpop.f32.mrf.mxu0
        %v4492 = vadd.f32 %v4339, %v4491
        %v4493 = vand.u32 %v3309, 4294901760
        %4494 = vmatmul.f32.gmra.mxu0 %v4493
        %v4495 = vpop.f32.mrf.mxu0
        %v4496 = vadd.f32 %v4343, %v4495
        %v4497 = vand.u32 %v3312, 4294901760
        %4498 = vmatmul.f32.gmra.mxu0 %v4497
        %v4499 = vpop.f32.mrf.mxu0
        %v4500 = vadd.f32 %v4347, %v4499
        %v4501 = vand.u32 %v3315, 4294901760
        %4502 = vmatmul.f32.gmra.mxu0 %v4501
        %v4503 = vpop.f32.mrf.mxu0
        %v4504 = vadd.f32 %v4351, %v4503
        %v4505 = vand.u32 %v3318, 4294901760
        %4506 = vmatmul.f32.gmra.mxu0 %v4505
        %v4507 = vpop.f32.mrf.mxu0
        %v4508 = vadd.f32 %v4355, %v4507
        %v4509 = vand.u32 %v3321, 4294901760
        %4510 = vmatmul.f32.gmra.mxu0 %v4509
        %v4511 = vpop.f32.mrf.mxu0
        %v4512 = vadd.f32 %v4359, %v4511
        %v4513 = vand.u32 %v3324, 4294901760
        %4514 = vmatmul.f32.gmra.mxu0 %v4513
        %v4515 = vpop.f32.mrf.mxu0
        %v4516 = vadd.f32 %v4363, %v4515
        %v4517 = vand.u32 %v3327, 4294901760
        %4518 = vmatmul.f32.gmra.mxu0 %v4517
        %v4519 = vpop.f32.mrf.mxu0
        %v4520 = vadd.f32 %v4367, %v4519
        %v4521 = vand.u32 %v3330, 4294901760
        %4522 = vmatmul.f32.gmra.mxu0 %v4521
        %v4523 = vpop.f32.mrf.mxu0
        %v4524 = vadd.f32 %v4371, %v4523
        %v4525 = vand.u32 %v3333, 4294901760
        %4526 = vmatmul.f32.gmra.mxu0 %v4525
        %v4527 = vpop.f32.mrf.mxu0
        %v4528 = vadd.f32 %v4375, %v4527
        %v4529 = vand.u32 %v3336, 4294901760
        %4530 = vmatmul.f32.gmra.mxu0 %v4529
        %v4531 = vpop.f32.mrf.mxu0
        %v4532 = vadd.f32 %v4379, %v4531
        %v4533 = vand.u32 %v3339, 4294901760
        %4534 = vmatmul.f32.gmra.mxu0 %v4533
        %v4535 = vpop.f32.mrf.mxu0
        %v4536 = vadd.f32 %v4383, %v4535
        %v4537 = vand.u32 %v3342, 4294901760
        %4538 = vmatmul.f32.gmra.mxu0 %v4537
        %v4539 = vpop.f32.mrf.mxu0
        %v4540 = vadd.f32 %v4387, %v4539
        %4541 = vdwg.mxu0
        %v4542 = vld [vmem:[%s317] sm:$0xff]
        %v4543 = vld [vmem:[%s317 + $0x8] sm:$0xff]
        %v4544 = vld [vmem:[%s317 + $0x10] sm:$0xff]
        %v4545 = vld [vmem:[%s317 + $0x18] sm:$0xff]
        %v4546 = vld [vmem:[%s317 + $0x20] sm:$0xff]
        %v4547 = vld [vmem:[%s317 + $0x28] sm:$0xff]
        %v4548 = vld [vmem:[%s317 + $0x30] sm:$0xff]
        %v4549 = vld [vmem:[%s317 + $0x38] sm:$0xff]
        %v4550 = vld [vmem:[%s317 + $0x40] sm:$0xff]
        %v4551 = vld [vmem:[%s317 + $0x48] sm:$0xff]
        %v4552 = vld [vmem:[%s317 + $0x50] sm:$0xff]
        %v4553 = vld [vmem:[%s317 + $0x58] sm:$0xff]
        %v4554 = vld [vmem:[%s317 + $0x60] sm:$0xff]
        %v4555 = vld [vmem:[%s317 + $0x68] sm:$0xff]
        %v4556 = vld [vmem:[%s317 + $0x70] sm:$0xff]
        %v4557 = vld [vmem:[%s317 + $0x78] sm:$0xff]
        %v4558 = vld [vmem:[%s317 + $0x80] sm:$0xff]
        %v4559 = vld [vmem:[%s317 + $0x88] sm:$0xff]
        %v4560 = vld [vmem:[%s317 + $0x90] sm:$0xff]
        %v4561 = vld [vmem:[%s317 + $0x98] sm:$0xff]
        %v4562 = vld [vmem:[%s317 + $0xa0] sm:$0xff]
        %v4563 = vld [vmem:[%s317 + $0xa8] sm:$0xff]
        %v4564 = vld [vmem:[%s317 + $0xb0] sm:$0xff]
        %v4565 = vld [vmem:[%s317 + $0xb8] sm:$0xff]
        %v4566 = vld [vmem:[%s317 + $0xc0] sm:$0xff]
        %v4567 = vld [vmem:[%s317 + $0xc8] sm:$0xff]
        %v4568 = vld [vmem:[%s317 + $0xd0] sm:$0xff]
        %v4569 = vld [vmem:[%s317 + $0xd8] sm:$0xff]
        %v4570 = vld [vmem:[%s317 + $0xe0] sm:$0xff]
        %v4571 = vld [vmem:[%s317 + $0xe8] sm:$0xff]
        %v4572 = vld [vmem:[%s317 + $0xf0] sm:$0xff]
        %v4573 = vld [vmem:[%s317 + $0xf8] sm:$0xff]
        %v4574 = vadd.f32 %v4416, %v4542
        %v4575 = vadd.f32 %v4420, %v4543
        %v4576 = vadd.f32 %v4424, %v4544
        %v4577 = vadd.f32 %v4428, %v4545
        %v4578 = vadd.f32 %v4432, %v4546
        %v4579 = vadd.f32 %v4436, %v4547
        %v4580 = vadd.f32 %v4440, %v4548
        %v4581 = vadd.f32 %v4444, %v4549
        %v4582 = vadd.f32 %v4448, %v4550
        %v4583 = vadd.f32 %v4452, %v4551
        %v4584 = vadd.f32 %v4456, %v4552
        %v4585 = vadd.f32 %v4460, %v4553
        %v4586 = vadd.f32 %v4464, %v4554
        %v4587 = vadd.f32 %v4468, %v4555
        %v4588 = vadd.f32 %v4472, %v4556
        %v4589 = vadd.f32 %v4476, %v4557
        %v4590 = vadd.f32 %v4480, %v4558
        %v4591 = vadd.f32 %v4484, %v4559
        %v4592 = vadd.f32 %v4488, %v4560
        %v4593 = vadd.f32 %v4492, %v4561
        %v4594 = vadd.f32 %v4496, %v4562
        %v4595 = vadd.f32 %v4500, %v4563
        %v4596 = vadd.f32 %v4504, %v4564
        %v4597 = vadd.f32 %v4508, %v4565
        %v4598 = vadd.f32 %v4512, %v4566
        %v4599 = vadd.f32 %v4516, %v4567
        %v4600 = vadd.f32 %v4520, %v4568
        %v4601 = vadd.f32 %v4524, %v4569
        %v4602 = vadd.f32 %v4528, %v4570
        %v4603 = vadd.f32 %v4532, %v4571
        %v4604 = vadd.f32 %v4536, %v4572
        %v4605 = vadd.f32 %v4540, %v4573
        %4606 = vst [vmem:[%s352] sm:$0xff] %v4574
        %4607 = vst [vmem:[%s352 + $0x8] sm:$0xff] %v4575
        %4608 = vst [vmem:[%s352 + $0x10] sm:$0xff] %v4576
        %4609 = vst [vmem:[%s352 + $0x18] sm:$0xff] %v4577
        %4610 = vst [vmem:[%s352 + $0x20] sm:$0xff] %v4578
        %4611 = vst [vmem:[%s352 + $0x28] sm:$0xff] %v4579
        %4612 = vst [vmem:[%s352 + $0x30] sm:$0xff] %v4580
        %4613 = vst [vmem:[%s352 + $0x38] sm:$0xff] %v4581
        %4614 = vst [vmem:[%s352 + $0x40] sm:$0xff] %v4582
        %4615 = vst [vmem:[%s352 + $0x48] sm:$0xff] %v4583
        %4616 = vst [vmem:[%s352 + $0x50] sm:$0xff] %v4584
        %4617 = vst [vmem:[%s352 + $0x58] sm:$0xff] %v4585
        %4618 = vst [vmem:[%s352 + $0x60] sm:$0xff] %v4586
        %4619 = vst [vmem:[%s352 + $0x68] sm:$0xff] %v4587
        %4620 = vst [vmem:[%s352 + $0x70] sm:$0xff] %v4588
        %4621 = vst [vmem:[%s352 + $0x78] sm:$0xff] %v4589
        %4622 = vst [vmem:[%s352 + $0x80] sm:$0xff] %v4590
        %4623 = vst [vmem:[%s352 + $0x88] sm:$0xff] %v4591
        %4624 = vst [vmem:[%s352 + $0x90] sm:$0xff] %v4592
        %4625 = vst [vmem:[%s352 + $0x98] sm:$0xff] %v4593
        %4626 = vst [vmem:[%s352 + $0xa0] sm:$0xff] %v4594
        %4627 = vst [vmem:[%s352 + $0xa8] sm:$0xff] %v4595
        %4628 = vst [vmem:[%s352 + $0xb0] sm:$0xff] %v4596
        %4629 = vst [vmem:[%s352 + $0xb8] sm:$0xff] %v4597
        %4630 = vst [vmem:[%s352 + $0xc0] sm:$0xff] %v4598
        %4631 = vst [vmem:[%s352 + $0xc8] sm:$0xff] %v4599
        %4632 = vst [vmem:[%s352 + $0xd0] sm:$0xff] %v4600
        %4633 = vst [vmem:[%s352 + $0xd8] sm:$0xff] %v4601
        %4634 = vst [vmem:[%s352 + $0xe0] sm:$0xff] %v4602
        %4635 = vst [vmem:[%s352 + $0xe8] sm:$0xff] %v4603
        %4636 = vst [vmem:[%s352 + $0xf0] sm:$0xff] %v4604
        %4637 = vst [vmem:[%s352 + $0xf8] sm:$0xff] %v4605
        %s4638 = sand.u32 %s228, 1
        %s4639 = scalar_lea.sflag [#allocation6], %s4638
        %s4640 = sand.u32 %s228, 1
        %s4641 = smul.addr %s4640, 256
        %s4642 = scalar_lea.vmem [#allocation7], %s4641
        // Predicated region
        $region61: #{tpu_custom_call.1} parent=55 // pred_check
          %p4643 = pneg %p238
        $region62: #{tpu_custom_call.1} parent=55 // pred_check_branch
          %4645 = sbr.rel (%p4643) target = $region64
        $region63: #{tpu_custom_call.1} parent=55 // pred_region
          %4647 = vsyncadd %s4639, 0
          %s4648 = smul.addr %s26, 32
          %s4649 = smul.addr %s4648, 8
          %s4650 = scalar_lea.hbm %s9, %s4649
          %s4651 = sshll.u32 %s4642, 4
          %s4652 = int_to_ptr.vmem [resolvable:$true] %s4651
          %s4653 = sshll.u32 %s4650, 4
          %s4654 = int_to_ptr.hbm [resolvable:$true] %s4653
          %4659 = dma.vmem_to_hbm [thread:$0]  %s4652, 4096, %s4654, %s4639, 128, 128, 8
        $region64: #{tpu_custom_call.1} parent=55 // pred_fallthru
          _
      $region56: #{tpu_custom_call.1} parent=5 // pred_fallthru
        _
      %p4660 = scmp.le.s32.totalorder 2, %s21
      // Predicated region
      $region65: #{tpu_custom_call.1} parent=5 // pred_check
        %p4661 = pneg %p4660
      $region66: #{tpu_custom_call.1} parent=5 // pred_check_branch
        %4663 = sbr.rel (%p4661) target = $region68
      $region67: #{tpu_custom_call.1} parent=5 // pred_region
        %s4664 = ssub.s32 %s21, 2
        // Predicated region
        $region69: #{tpu_custom_call.1} parent=67 // pred_check
          %p4665 = pneg %p244
        $region70: #{tpu_custom_call.1} parent=67 // pred_check_branch
          %4667 = sbr.rel (%p4665) target = $region72
        $region71: #{tpu_custom_call.1} parent=67 // pred_region
          %s4668 = sand.u32 %s229, 1
          %s4669 = scalar_lea.sflag [#allocation6], %s4668
          %s4670 = sand.u32 %s229, 1
          %s4671 = smul.addr %s4670, 256
          %s4672 = scalar_lea.vmem [#allocation7], %s4671
          %4674 = dma.done %s4669, 4096
        $region72: #{tpu_custom_call.1} parent=67 // pred_fallthru
          _
      $region68: #{tpu_custom_call.1} parent=5 // pred_fallthru
        _
    $region6: #{tpu_custom_call.1} parent=1 // loop_footer
      %s25 = sadd.s32 1, %s21
    $region7: #{tpu_custom_call.1} parent=1 // loop_footer_branch
      %20 = sbr.rel target = $region3
    $region8: #{tpu_custom_call.1} parent=1 // loop_exit
      _
    %4675 = vsyncpa [#allocation5], 1
    %s4676 = scalar_lea.sflag [#allocation5], 1
    %4677 = vsyncpa %s4676, 1
    %4678 = vsyncpa [#allocation6], 1
    %s4679 = scalar_lea.sflag [#allocation6], 1
    %4680 = vsyncpa %s4679, 1

</llo_original>
